<compile_context>
chip_gen: v7x
topology: tpu7x:2x2x1
jax: 0.10.0
libtpu: 0.0.40
codegen_flags: <defaults>
</compile_context>

<pallas_src>
import jax
import jax.numpy as jnp
from jax import lax
from jax.experimental import pallas as pl
from jax.experimental.pallas import tpu as pltpu

EPS = 1e-5                                # BatchNorm2d default eps
VMEM_LIMIT_BYTES = 32 * 1024 * 1024       # fits scoped VMEM on v5e/v6e/v7x


# ----------------------------------------------------------------------------
# Tile sizing
# ----------------------------------------------------------------------------
def _tile_vmem_bytes(th, w, c, cout):
    """Rough double-buffered VMEM footprint of one kernel-A grid step."""
    wp = w + 2
    taps = 3 * th * wp * c * 2                 # bf16 dy-shifted input tiles
    outs = th * w * cout * 4 + 2 * cout * 4    # f32 y tile + stats tile
    resident = 9 * c * cout * 2 + cout * 4     # weights + bias (grid-invariant)
    return 2 * (taps + outs) + resident        # x2 for double buffering


def _pick_tile_h(h, w, c, cout, *, target_rows=1024,
                 vmem_budget=16 * 1024 * 1024):
    """Largest divisor of H keeping ~<=1024 matmul rows per tile and in budget."""
    best = 1
    for th in range(1, h + 1):
        if h % th:
            continue
        ok_rows = th * w <= max(target_rows, w)   # always allow one-row tiles
        if ok_rows and _tile_vmem_bytes(th, w, c, cout) <= vmem_budget:
            best = th
    return best


# ----------------------------------------------------------------------------
# Kernels
# ----------------------------------------------------------------------------
def conv3x3_stats_kernel(x0_ref, x1_ref, x2_ref, w_ref, b_ref, y_ref, st_ref):
    """3x3 conv (+bias) on one (1, TH, W, C) output tile + BN partial sums.

    x{0,1,2}_ref: (1, TH, W+2, C)  bf16  dy-shifted, spatially padded rows
    w_ref:        (9, C, Cout)     bf16  tap-major weights (k = dy*3 + dx)
    b_ref:        (1, Cout)        f32   conv bias
    y_ref:        (1, TH, W, Cout) f32   pre-BatchNorm conv output tile
    st_ref:       (1, 1, 2, Cout)  f32   per-tile [sum, sum-of-squares]
    """
    th, wo, cout = y_ref.shape[1], y_ref.shape[2], y_ref.shape[3]
    c = x0_ref.shape[3]
    taps = (x0_ref, x1_ref, x2_ref)

    acc = jnp.zeros((th * wo, cout), jnp.float32)
    for dy in range(3):
        for dx in range(3):
            # dx shift taken inside VMEM from the (W+2)-wide tile; dy shift is
            # baked into which input view this ref points at.
            slab = taps[dy][0, :, dx:dx + wo, :].reshape(th * wo, c)
            acc = acc + jnp.dot(slab, w_ref[dy * 3 + dx],
                                preferred_element_type=jnp.float32)
    acc = acc + b_ref[...]                      # (1, Cout) broadcast, f32

    y_ref[0] = acc.reshape(th, wo, cout)
    st_ref[0, 0, 0:1, :] = jnp.sum(acc, axis=0, keepdims=True)
    st_ref[0, 0, 1:2, :] = jnp.sum(acc * acc, axis=0, keepdims=True)


def bn_relu_kernel(y_ref, scale_ref, shift_ref, o_ref):
    """Apply the (already reduced) per-channel BN scale/shift + ReLU."""
    o_ref[...] = jnp.maximum(y_ref[...] * scale_ref[...] + shift_ref[...], 0.0)


# ----------------------------------------------------------------------------
# One conv -> BatchNorm(train stats) -> ReLU application
# ----------------------------------------------------------------------------
def _conv_bn_relu(x_nhwc, w9_bf16, bias_2d, gamma, beta):
    n, h, w, c = x_nhwc.shape
    cout = w9_bf16.shape[2]
    th = _pick_tile_h(h, w, c, cout)
    nh = h // th
    wp = w + 2

    # Spatial zero-pad once (cheap) and cast the MXU operand to bf16.  The
    # three dy-shifted views let every grid step fetch its rows with a plain
    # BlockSpec (no overlapping/halo blocks needed).
    # TODO(synk): replace the three dy views with an in-kernel halo DMA
    # (manual make_async_copy) to cut input HBM traffic by a further ~3x.
    xp = jnp.pad(x_nhwc, ((0, 0), (1, 1), (1, 1), (0, 0))).astype(jnp.bfloat16)
    taps = [xp[:, dy:dy + h, :, :] for dy in range(3)]

    x_spec = pl.BlockSpec((1, th, wp, c), lambda i, j: (i, j, 0, 0))
    y_spec = pl.BlockSpec((1, th, w, cout), lambda i, j: (i, j, 0, 0))

    # ---- pass 1: conv (+bias) and per-tile BN partial statistics -----------
    y, stats = pl.pallas_call(
        conv3x3_stats_kernel,
        grid=(n, nh),
        in_specs=[x_spec, x_spec, x_spec,
                  pl.BlockSpec((9, c, cout), lambda i, j: (0, 0, 0)),
                  pl.BlockSpec((1, cout), lambda i, j: (0, 0))],
        out_specs=[y_spec,
                   pl.BlockSpec((1, 1, 2, cout), lambda i, j: (i, j, 0, 0))],
        out_shape=(jax.ShapeDtypeStruct((n, h, w, cout), jnp.float32),
                   jax.ShapeDtypeStruct((n, nh, 2, cout), jnp.float32)),
        compiler_params=pltpu.CompilerParams(
            dimension_semantics=("parallel", "parallel"),
            vmem_limit_bytes=VMEM_LIMIT_BYTES),
    )(taps[0], taps[1], taps[2], w9_bf16, bias_2d)

    # ---- tiny glue: reduce partial sums -> per-channel scale / shift -------
    # (training-mode BatchNorm: biased variance over the N*H*W elements)
    m = float(n * h * w)
    tot = jnp.sum(stats, axis=(0, 1))                        # (2, Cout)
    mean = tot[0] / m
    var = jnp.maximum(tot[1] / m - mean * mean, 0.0)
    scale = gamma * lax.rsqrt(var + EPS)
    shift = beta - mean * scale

    # ---- pass 2: normalize + ReLU (fully parallel, megacore friendly) ------
    out = pl.pallas_call(
        bn_relu_kernel,
        grid=(n, nh),
        in_specs=[y_spec,
                  pl.BlockSpec((1, 1, 1, cout), lambda i, j: (0, 0, 0, 0)),
                  pl.BlockSpec((1, 1, 1, cout), lambda i, j: (0, 0, 0, 0))],
        out_specs=y_spec,
        out_shape=jax.ShapeDtypeStruct((n, h, w, cout), jnp.float32),
        compiler_params=pltpu.CompilerParams(
            dimension_semantics=("parallel", "parallel"),
            vmem_limit_bytes=VMEM_LIMIT_BYTES),
    )(y, scale.reshape(1, 1, 1, cout), shift.reshape(1, 1, 1, cout))
    return out


# ----------------------------------------------------------------------------
# Module wrapper (JAX/Pallas equivalent of Recurrent_block(out_ch, t))
# ----------------------------------------------------------------------------
class RecurrentBlockPallas:
    def __init__(self, out_ch, t=2, *, key):
        if t < 1:
            raise ValueError("t must be >= 1")
        self.t = t
        self.out_ch = out_ch

        kw, kb, kg, kbe = jax.random.split(key, 4)
        # PyTorch conv weight layout: (Cout, Cin, kh, kw)
        weight = 0.1 * jax.random.normal(kw, (out_ch, out_ch, 3, 3), jnp.float32)
        bias = 0.1 * jax.random.normal(kb, (out_ch,), jnp.float32)
        gamma = 0.5 + jax.random.uniform(kg, (out_ch,), jnp.float32)
        beta = 0.1 * jax.random.normal(kbe, (out_ch,), jnp.float32)

        # Tap-major weight matrix: w9[k = dy*3 + dx, cin, cout]  (HWIO order).
        w9 = jnp.transpose(weight, (2, 3, 1, 0)).reshape(9, out_ch, out_ch)
        self.w9_1 = w9.astype(jnp.bfloat16)
        self.w9_2 = (2.0 * w9).astype(jnp.bfloat16)   # folds the 'x + x'
        self.bias_2d = bias.reshape(1, out_ch)
        self.gamma = gamma
        self.beta = beta

        # f32 copies kept only for the pure-JAX reference check.
        self.weight_f32 = weight
        self.bias_f32 = bias

    def __call__(self, x_nchw):
        # NCHW (PyTorch) -> NHWC (kernel layout)
        x = jnp.transpose(x_nchw, (0, 2, 3, 1))
        x1 = _conv_bn_relu(x, self.w9_1, self.bias_2d, self.gamma, self.beta)
        # Loop-invariant hoist: x1 never changes after i == 0, so every i > 0
        # iteration of the reference produces an identical conv(x1 + x1).
        # The factor 2 is folded into the weights (w9_2 = 2 * w9).
        out = _conv_bn_relu(x1, self.w9_2, self.bias_2d, self.gamma, self.beta)
        return jnp.transpose(out, (0, 3, 1, 2))


# ----------------------------------------------------------------------------
# Pure-JAX reference (same bf16 matmul operands, f32 accumulation / BN)
# ----------------------------------------------------------------------------
def _reference_forward(x_nchw, weight, bias, gamma, beta, t):
    x = jnp.transpose(x_nchw, (0, 2, 3, 1))
    hwio = jnp.transpose(weight, (2, 3, 1, 0)).astype(jnp.bfloat16)

    def cbr(a):
        y = lax.conv_general_dilated(
            a.astype(jnp.bfloat16), hwio, window_strides=(1, 1), padding="SAME",
            dimension_numbers=("NHWC", "HWIO", "NHWC"),
            preferred_element_type=jnp.float32) + bias
        mean = jnp.mean(y, axis=(0, 1, 2))
        var = jnp.mean(jnp.square(y - mean), axis=(0, 1, 2))
        yhat = (y - mean) * lax.rsqrt(var + EPS) * gamma + beta
        return jnp.maximum(yhat, 0.0)

    out = None
    for i in range(t):
        if i == 0:
            x = cbr(x)
        out = cbr(x + x)
    return jnp.transpose(out, (0, 3, 1, 2))


# ----------------------------------------------------------------------------
if __name__ == "__main__":
    key = jax.random.PRNGKey(0)
    k_x, k_params = jax.random.split(key)

    out_ch = 4
    block = RecurrentBlockPallas(out_ch, t=2, key=k_params)
    fwd = jax.jit(lambda a: block(a))

    # Primary small input (NCHW, like PyTorch).
    x = jax.random.normal(k_x, (2, out_ch, 16, 16), jnp.float32)
    y = jax.block_until_ready(fwd(x))
    assert y.shape == (2, out_ch, 16, 16), y.shape
    assert bool(jnp.all(y >= 0.0)) and bool(jnp.all(jnp.isfinite(y)))

    y_ref = jax.block_until_ready(_reference_forward(
        x, block.weight_f32, block.bias_f32, block.gamma, block.beta, t=2))
    err = float(jnp.max(jnp.abs(y - y_ref)))
    assert err < 2e-2, f"mismatch vs pure-JAX reference: max abs err = {err}"

    # Second shape exercises multi-tile H (nh > 1) and the partial-stat reduce.
    x2 = jax.random.normal(jax.random.PRNGKey(1), (2, out_ch, 64, 64), jnp.float32)
    y2 = jax.block_until_ready(fwd(x2))
    assert y2.shape == (2, out_ch, 64, 64), y2.shape
    assert bool(jnp.all(y2 >= 0.0)) and bool(jnp.all(jnp.isfinite(y2)))
    y2_ref = jax.block_until_ready(_reference_forward(
        x2, block.weight_f32, block.bias_f32, block.gamma, block.beta, t=2))
    err2 = float(jnp.max(jnp.abs(y2 - y2_ref)))
    assert err2 < 2e-2, f"mismatch vs pure-JAX reference (large): {err2}"

    print("KERNEL_OK")
</pallas_src>

<mosaic_0001>
module attributes {stable_mosaic.version = 11 : i64} {
  func.func @conv3x3_stats_kernel(%arg0: i32, %arg1: i32, %arg2: memref<1x16x18x4xbf16, #tpu.memory_space<vmem>>, %arg3: memref<1x16x18x4xbf16, #tpu.memory_space<vmem>>, %arg4: memref<1x16x18x4xbf16, #tpu.memory_space<vmem>>, %arg5: memref<9x4x4xbf16, #tpu.memory_space<vmem>>, %arg6: memref<1x4xf32, #tpu.memory_space<vmem>>, %arg7: memref<1x16x16x4xf32, #tpu.memory_space<vmem>>, %arg8: memref<1x1x2x4xf32, #tpu.memory_space<vmem>>) attributes {dimension_semantics = [#tpu.dimension_semantics<parallel>, #tpu.dimension_semantics<parallel>], iteration_bounds = array<i64: 2, 1>, scalar_prefetch = 0 : i64, scratch_operands = 0 : i64, tpu.core_type = #tpu.core_type<tc>, window_params = [{transform_indices = @transform_0, window_bounds = array<i64: 1, 16, 18, 4>}, {transform_indices = @transform_1, window_bounds = array<i64: 1, 16, 18, 4>}, {transform_indices = @transform_2, window_bounds = array<i64: 1, 16, 18, 4>}, {pipeline_mode = #tpu.pipeline_mode<synchronous>, transform_indices = @transform_3, window_bounds = array<i64: 9, 4, 4>}, {pipeline_mode = #tpu.pipeline_mode<synchronous>, transform_indices = @transform_4, window_bounds = array<i64: 1, 4>}, {transform_indices = @transform_5, window_bounds = array<i64: 1, 16, 16, 4>}, {transform_indices = @transform_6, window_bounds = array<i64: 1, 1, 2, 4>}]} {
    %cst = arith.constant 0.000000e+00 : f32
    %0 = vector.broadcast %cst : f32 to vector<256x4xf32>
    %c0 = arith.constant 0 : index
    %c0_0 = arith.constant 0 : index
    %c0_1 = arith.constant 0 : index
    %c0_2 = arith.constant 0 : index
    %1 = vector.load %arg2[%c0, %c0_0, %c0_1, %c0_2] : memref<1x16x18x4xbf16, #tpu.memory_space<vmem>>, vector<1x16x16x4xbf16>
    %2 = vector.shape_cast %1 : vector<1x16x16x4xbf16> to vector<16x16x4xbf16>
    %3 = vector.shape_cast %2 : vector<16x16x4xbf16> to vector<256x4xbf16>
    %c0_3 = arith.constant 0 : index
    %c0_4 = arith.constant 0 : index
    %c0_5 = arith.constant 0 : index
    %4 = vector.load %arg5[%c0_3, %c0_4, %c0_5] : memref<9x4x4xbf16, #tpu.memory_space<vmem>>, vector<1x4x4xbf16>
    %5 = vector.shape_cast %4 : vector<1x4x4xbf16> to vector<4x4xbf16>
    %cst_6 = arith.constant dense<0.000000e+00> : vector<256x4xf32>
    %6 = tpu.matmul %3, %5, %cst_6 {dimension_numbers = #tpu.dot_dimension_numbers<[1], [0], [0], [1], [0, 0, 1, 1], [], []>} : vector<256x4xbf16>, vector<4x4xbf16>, vector<256x4xf32> -> vector<256x4xf32>
    %7 = arith.addf %0, %6 : vector<256x4xf32>
    %c0_7 = arith.constant 0 : index
    %c0_8 = arith.constant 0 : index
    %c1 = arith.constant 1 : index
    %c0_9 = arith.constant 0 : index
    %8 = vector.load %arg2[%c0_7, %c0_8, %c1, %c0_9] : memref<1x16x18x4xbf16, #tpu.memory_space<vmem>>, vector<1x16x16x4xbf16>
    %9 = vector.shape_cast %8 : vector<1x16x16x4xbf16> to vector<16x16x4xbf16>
    %10 = vector.shape_cast %9 : vector<16x16x4xbf16> to vector<256x4xbf16>
    %c1_10 = arith.constant 1 : index
    %c0_11 = arith.constant 0 : index
    %c0_12 = arith.constant 0 : index
    %11 = vector.load %arg5[%c1_10, %c0_11, %c0_12] : memref<9x4x4xbf16, #tpu.memory_space<vmem>>, vector<1x4x4xbf16>
    %12 = vector.shape_cast %11 : vector<1x4x4xbf16> to vector<4x4xbf16>
    %cst_13 = arith.constant dense<0.000000e+00> : vector<256x4xf32>
    %13 = tpu.matmul %10, %12, %cst_13 {dimension_numbers = #tpu.dot_dimension_numbers<[1], [0], [0], [1], [0, 0, 1, 1], [], []>} : vector<256x4xbf16>, vector<4x4xbf16>, vector<256x4xf32> -> vector<256x4xf32>
    %14 = arith.addf %7, %13 : vector<256x4xf32>
    %c0_14 = arith.constant 0 : index
    %c0_15 = arith.constant 0 : index
    %c2 = arith.constant 2 : index
    %c0_16 = arith.constant 0 : index
    %15 = vector.load %arg2[%c0_14, %c0_15, %c2, %c0_16] : memref<1x16x18x4xbf16, #tpu.memory_space<vmem>>, vector<1x16x16x4xbf16>
    %16 = vector.shape_cast %15 : vector<1x16x16x4xbf16> to vector<16x16x4xbf16>
    %17 = vector.shape_cast %16 : vector<16x16x4xbf16> to vector<256x4xbf16>
    %c2_17 = arith.constant 2 : index
    %c0_18 = arith.constant 0 : index
    %c0_19 = arith.constant 0 : index
    %18 = vector.load %arg5[%c2_17, %c0_18, %c0_19] : memref<9x4x4xbf16, #tpu.memory_space<vmem>>, vector<1x4x4xbf16>
    %19 = vector.shape_cast %18 : vector<1x4x4xbf16> to vector<4x4xbf16>
    %cst_20 = arith.constant dense<0.000000e+00> : vector<256x4xf32>
    %20 = tpu.matmul %17, %19, %cst_20 {dimension_numbers = #tpu.dot_dimension_numbers<[1], [0], [0], [1], [0, 0, 1, 1], [], []>} : vector<256x4xbf16>, vector<4x4xbf16>, vector<256x4xf32> -> vector<256x4xf32>
    %21 = arith.addf %14, %20 : vector<256x4xf32>
    %c0_21 = arith.constant 0 : index
    %c0_22 = arith.constant 0 : index
    %c0_23 = arith.constant 0 : index
    %c0_24 = arith.constant 0 : index
    %22 = vector.load %arg3[%c0_21, %c0_22, %c0_23, %c0_24] : memref<1x16x18x4xbf16, #tpu.memory_space<vmem>>, vector<1x16x16x4xbf16>
    %23 = vector.shape_cast %22 : vector<1x16x16x4xbf16> to vector<16x16x4xbf16>
    %24 = vector.shape_cast %23 : vector<16x16x4xbf16> to vector<256x4xbf16>
    %c3 = arith.constant 3 : index
    %c0_25 = arith.constant 0 : index
    %c0_26 = arith.constant 0 : index
    %25 = vector.load %arg5[%c3, %c0_25, %c0_26] : memref<9x4x4xbf16, #tpu.memory_space<vmem>>, vector<1x4x4xbf16>
    %26 = vector.shape_cast %25 : vector<1x4x4xbf16> to vector<4x4xbf16>
    %cst_27 = arith.constant dense<0.000000e+00> : vector<256x4xf32>
    %27 = tpu.matmul %24, %26, %cst_27 {dimension_numbers = #tpu.dot_dimension_numbers<[1], [0], [0], [1], [0, 0, 1, 1], [], []>} : vector<256x4xbf16>, vector<4x4xbf16>, vector<256x4xf32> -> vector<256x4xf32>
    %28 = arith.addf %21, %27 : vector<256x4xf32>
    %c0_28 = arith.constant 0 : index
    %c0_29 = arith.constant 0 : index
    %c1_30 = arith.constant 1 : index
    %c0_31 = arith.constant 0 : index
    %29 = vector.load %arg3[%c0_28, %c0_29, %c1_30, %c0_31] : memref<1x16x18x4xbf16, #tpu.memory_space<vmem>>, vector<1x16x16x4xbf16>
    %30 = vector.shape_cast %29 : vector<1x16x16x4xbf16> to vector<16x16x4xbf16>
    %31 = vector.shape_cast %30 : vector<16x16x4xbf16> to vector<256x4xbf16>
    %c4 = arith.constant 4 : index
    %c0_32 = arith.constant 0 : index
    %c0_33 = arith.constant 0 : index
    %32 = vector.load %arg5[%c4, %c0_32, %c0_33] : memref<9x4x4xbf16, #tpu.memory_space<vmem>>, vector<1x4x4xbf16>
    %33 = vector.shape_cast %32 : vector<1x4x4xbf16> to vector<4x4xbf16>
    %cst_34 = arith.constant dense<0.000000e+00> : vector<256x4xf32>
    %34 = tpu.matmul %31, %33, %cst_34 {dimension_numbers = #tpu.dot_dimension_numbers<[1], [0], [0], [1], [0, 0, 1, 1], [], []>} : vector<256x4xbf16>, vector<4x4xbf16>, vector<256x4xf32> -> vector<256x4xf32>
    %35 = arith.addf %28, %34 : vector<256x4xf32>
    %c0_35 = arith.constant 0 : index
    %c0_36 = arith.constant 0 : index
    %c2_37 = arith.constant 2 : index
    %c0_38 = arith.constant 0 : index
    %36 = vector.load %arg3[%c0_35, %c0_36, %c2_37, %c0_38] : memref<1x16x18x4xbf16, #tpu.memory_space<vmem>>, vector<1x16x16x4xbf16>
    %37 = vector.shape_cast %36 : vector<1x16x16x4xbf16> to vector<16x16x4xbf16>
    %38 = vector.shape_cast %37 : vector<16x16x4xbf16> to vector<256x4xbf16>
    %c5 = arith.constant 5 : index
    %c0_39 = arith.constant 0 : index
    %c0_40 = arith.constant 0 : index
    %39 = vector.load %arg5[%c5, %c0_39, %c0_40] : memref<9x4x4xbf16, #tpu.memory_space<vmem>>, vector<1x4x4xbf16>
    %40 = vector.shape_cast %39 : vector<1x4x4xbf16> to vector<4x4xbf16>
    %cst_41 = arith.constant dense<0.000000e+00> : vector<256x4xf32>
    %41 = tpu.matmul %38, %40, %cst_41 {dimension_numbers = #tpu.dot_dimension_numbers<[1], [0], [0], [1], [0, 0, 1, 1], [], []>} : vector<256x4xbf16>, vector<4x4xbf16>, vector<256x4xf32> -> vector<256x4xf32>
    %42 = arith.addf %35, %41 : vector<256x4xf32>
    %c0_42 = arith.constant 0 : index
    %c0_43 = arith.constant 0 : index
    %c0_44 = arith.constant 0 : index
    %c0_45 = arith.constant 0 : index
    %43 = vector.load %arg4[%c0_42, %c0_43, %c0_44, %c0_45] : memref<1x16x18x4xbf16, #tpu.memory_space<vmem>>, vector<1x16x16x4xbf16>
    %44 = vector.shape_cast %43 : vector<1x16x16x4xbf16> to vector<16x16x4xbf16>
    %45 = vector.shape_cast %44 : vector<16x16x4xbf16> to vector<256x4xbf16>
    %c6 = arith.constant 6 : index
    %c0_46 = arith.constant 0 : index
    %c0_47 = arith.constant 0 : index
    %46 = vector.load %arg5[%c6, %c0_46, %c0_47] : memref<9x4x4xbf16, #tpu.memory_space<vmem>>, vector<1x4x4xbf16>
    %47 = vector.shape_cast %46 : vector<1x4x4xbf16> to vector<4x4xbf16>
    %cst_48 = arith.constant dense<0.000000e+00> : vector<256x4xf32>
    %48 = tpu.matmul %45, %47, %cst_48 {dimension_numbers = #tpu.dot_dimension_numbers<[1], [0], [0], [1], [0, 0, 1, 1], [], []>} : vector<256x4xbf16>, vector<4x4xbf16>, vector<256x4xf32> -> vector<256x4xf32>
    %49 = arith.addf %42, %48 : vector<256x4xf32>
    %c0_49 = arith.constant 0 : index
    %c0_50 = arith.constant 0 : index
    %c1_51 = arith.constant 1 : index
    %c0_52 = arith.constant 0 : index
    %50 = vector.load %arg4[%c0_49, %c0_50, %c1_51, %c0_52] : memref<1x16x18x4xbf16, #tpu.memory_space<vmem>>, vector<1x16x16x4xbf16>
    %51 = vector.shape_cast %50 : vector<1x16x16x4xbf16> to vector<16x16x4xbf16>
    %52 = vector.shape_cast %51 : vector<16x16x4xbf16> to vector<256x4xbf16>
    %c7 = arith.constant 7 : index
    %c0_53 = arith.constant 0 : index
    %c0_54 = arith.constant 0 : index
    %53 = vector.load %arg5[%c7, %c0_53, %c0_54] : memref<9x4x4xbf16, #tpu.memory_space<vmem>>, vector<1x4x4xbf16>
    %54 = vector.shape_cast %53 : vector<1x4x4xbf16> to vector<4x4xbf16>
    %cst_55 = arith.constant dense<0.000000e+00> : vector<256x4xf32>
    %55 = tpu.matmul %52, %54, %cst_55 {dimension_numbers = #tpu.dot_dimension_numbers<[1], [0], [0], [1], [0, 0, 1, 1], [], []>} : vector<256x4xbf16>, vector<4x4xbf16>, vector<256x4xf32> -> vector<256x4xf32>
    %56 = arith.addf %49, %55 : vector<256x4xf32>
    %c0_56 = arith.constant 0 : index
    %c0_57 = arith.constant 0 : index
    %c2_58 = arith.constant 2 : index
    %c0_59 = arith.constant 0 : index
    %57 = vector.load %arg4[%c0_56, %c0_57, %c2_58, %c0_59] : memref<1x16x18x4xbf16, #tpu.memory_space<vmem>>, vector<1x16x16x4xbf16>
    %58 = vector.shape_cast %57 : vector<1x16x16x4xbf16> to vector<16x16x4xbf16>
    %59 = vector.shape_cast %58 : vector<16x16x4xbf16> to vector<256x4xbf16>
    %c8 = arith.constant 8 : index
    %c0_60 = arith.constant 0 : index
    %c0_61 = arith.constant 0 : index
    %60 = vector.load %arg5[%c8, %c0_60, %c0_61] : memref<9x4x4xbf16, #tpu.memory_space<vmem>>, vector<1x4x4xbf16>
    %61 = vector.shape_cast %60 : vector<1x4x4xbf16> to vector<4x4xbf16>
    %cst_62 = arith.constant dense<0.000000e+00> : vector<256x4xf32>
    %62 = tpu.matmul %59, %61, %cst_62 {dimension_numbers = #tpu.dot_dimension_numbers<[1], [0], [0], [1], [0, 0, 1, 1], [], []>} : vector<256x4xbf16>, vector<4x4xbf16>, vector<256x4xf32> -> vector<256x4xf32>
    %63 = arith.addf %56, %62 : vector<256x4xf32>
    %c0_63 = arith.constant 0 : index
    %c0_64 = arith.constant 0 : index
    %64 = vector.load %arg6[%c0_63, %c0_64] : memref<1x4xf32, #tpu.memory_space<vmem>>, vector<1x4xf32>
    %65 = vector.broadcast %64 : vector<1x4xf32> to vector<256x4xf32>
    %66 = arith.addf %63, %65 : vector<256x4xf32>
    %67 = vector.shape_cast %66 : vector<256x4xf32> to vector<16x16x4xf32>
    %c0_65 = arith.constant 0 : index
    %c0_66 = arith.constant 0 : index
    %c0_67 = arith.constant 0 : index
    %c0_68 = arith.constant 0 : index
    %68 = vector.load %arg7[%c0_65, %c0_66, %c0_67, %c0_68] : memref<1x16x16x4xf32, #tpu.memory_space<vmem>>, vector<1x16x16x4xf32>
    %69 = vector.shape_cast %68 : vector<1x16x16x4xf32> to vector<16x16x4xf32>
    %70 = vector.shape_cast %67 : vector<16x16x4xf32> to vector<1x16x16x4xf32>
    tpu.vector_store %arg7[%c0_65, %c0_66, %c0_67, %c0_68], %70 {strides = array<i32>} : memref<1x16x16x4xf32, #tpu.memory_space<vmem>>, vector<1x16x16x4xf32>,
    %cst_69 = arith.constant dense<0.000000e+00> : vector<4xf32>
    %71 = vector.multi_reduction <add>, %66, %cst_69 [0] : vector<256x4xf32> to vector<4xf32>
    %72 = vector.shape_cast %71 : vector<4xf32> to vector<1x4xf32>
    %c0_70 = arith.constant 0 : index
    %c0_71 = arith.constant 0 : index
    %c0_72 = arith.constant 0 : index
    %c0_73 = arith.constant 0 : index
    %73 = vector.load %arg8[%c0_70, %c0_71, %c0_72, %c0_73] : memref<1x1x2x4xf32, #tpu.memory_space<vmem>>, vector<1x1x1x4xf32>
    %74 = vector.shape_cast %73 : vector<1x1x1x4xf32> to vector<1x4xf32>
    %75 = vector.shape_cast %72 : vector<1x4xf32> to vector<1x1x1x4xf32>
    tpu.vector_store %arg8[%c0_70, %c0_71, %c0_72, %c0_73], %75 {strides = array<i32>} : memref<1x1x2x4xf32, #tpu.memory_space<vmem>>, vector<1x1x1x4xf32>,
    %76 = arith.mulf %66, %66 : vector<256x4xf32>
    %cst_74 = arith.constant dense<0.000000e+00> : vector<4xf32>
    %77 = vector.multi_reduction <add>, %76, %cst_74 [0] : vector<256x4xf32> to vector<4xf32>
    %78 = vector.shape_cast %77 : vector<4xf32> to vector<1x4xf32>
    %c0_75 = arith.constant 0 : index
    %c0_76 = arith.constant 0 : index
    %c1_77 = arith.constant 1 : index
    %c0_78 = arith.constant 0 : index
    %79 = vector.load %arg8[%c0_75, %c0_76, %c1_77, %c0_78] : memref<1x1x2x4xf32, #tpu.memory_space<vmem>>, vector<1x1x1x4xf32>
    %80 = vector.shape_cast %79 : vector<1x1x1x4xf32> to vector<1x4xf32>
    %81 = vector.shape_cast %78 : vector<1x4xf32> to vector<1x1x1x4xf32>
    tpu.vector_store %arg8[%c0_75, %c0_76, %c1_77, %c0_78], %81 {strides = array<i32>} : memref<1x1x2x4xf32, #tpu.memory_space<vmem>>, vector<1x1x1x4xf32>,
    return
  }
  func.func @transform_0(%arg0: i32, %arg1: i32) -> (i32, i32, i32, i32) {
    %c0_i32 = arith.constant 0 : i32
    %c0_i32_0 = arith.constant 0 : i32
    %c0_i32_1 = arith.constant 0 : i32
    return %arg0, %arg1, %c0_i32, %c0_i32_0 : i32, i32, i32, i32
  }
  func.func @transform_1(%arg0: i32, %arg1: i32) -> (i32, i32, i32, i32) {
    %c0_i32 = arith.constant 0 : i32
    %c0_i32_0 = arith.constant 0 : i32
    %c0_i32_1 = arith.constant 0 : i32
    return %arg0, %arg1, %c0_i32, %c0_i32_0 : i32, i32, i32, i32
  }
  func.func @transform_2(%arg0: i32, %arg1: i32) -> (i32, i32, i32, i32) {
    %c0_i32 = arith.constant 0 : i32
    %c0_i32_0 = arith.constant 0 : i32
    %c0_i32_1 = arith.constant 0 : i32
    return %arg0, %arg1, %c0_i32, %c0_i32_0 : i32, i32, i32, i32
  }
  func.func @transform_3(%arg0: i32, %arg1: i32) -> (i32, i32, i32) {
    %c0_i32 = arith.constant 0 : i32
    %c0_i32_0 = arith.constant 0 : i32
    %c0_i32_1 = arith.constant 0 : i32
    %c0_i32_2 = arith.constant 0 : i32
    return %c0_i32, %c0_i32_0, %c0_i32_1 : i32, i32, i32
  }
  func.func @transform_4(%arg0: i32, %arg1: i32) -> (i32, i32) {
    %c0_i32 = arith.constant 0 : i32
    %c0_i32_0 = arith.constant 0 : i32
    %c0_i32_1 = arith.constant 0 : i32
    return %c0_i32, %c0_i32_0 : i32, i32
  }
  func.func @transform_5(%arg0: i32, %arg1: i32) -> (i32, i32, i32, i32) {
    %c0_i32 = arith.constant 0 : i32
    %c0_i32_0 = arith.constant 0 : i32
    %c0_i32_1 = arith.constant 0 : i32
    return %arg0, %arg1, %c0_i32, %c0_i32_0 : i32, i32, i32, i32
  }
  func.func @transform_6(%arg0: i32, %arg1: i32) -> (i32, i32, i32, i32) {
    %c0_i32 = arith.constant 0 : i32
    %c0_i32_0 = arith.constant 0 : i32
    %c0_i32_1 = arith.constant 0 : i32
    return %arg0, %arg1, %c0_i32, %c0_i32_0 : i32, i32, i32, i32
  }
}

module attributes {stable_mosaic.version = 11 : i64} {
  func.func @bn_relu_kernel(%arg0: i32, %arg1: i32, %arg2: memref<1x16x16x4xf32, #tpu.memory_space<vmem>>, %arg3: memref<1x1x1x4xf32, #tpu.memory_space<vmem>>, %arg4: memref<1x1x1x4xf32, #tpu.memory_space<vmem>>, %arg5: memref<1x16x16x4xf32, #tpu.memory_space<vmem>>) attributes {dimension_semantics = [#tpu.dimension_semantics<parallel>, #tpu.dimension_semantics<parallel>], iteration_bounds = array<i64: 2, 1>, scalar_prefetch = 0 : i64, scratch_operands = 0 : i64, tpu.core_type = #tpu.core_type<tc>, window_params = [{transform_indices = @transform_0, window_bounds = array<i64: 1, 16, 16, 4>}, {pipeline_mode = #tpu.pipeline_mode<synchronous>, transform_indices = @transform_1, window_bounds = array<i64: 1, 1, 1, 4>}, {pipeline_mode = #tpu.pipeline_mode<synchronous>, transform_indices = @transform_2, window_bounds = array<i64: 1, 1, 1, 4>}, {transform_indices = @transform_3, window_bounds = array<i64: 1, 16, 16, 4>}]} {
    %c0 = arith.constant 0 : index
    %c0_0 = arith.constant 0 : index
    %c0_1 = arith.constant 0 : index
    %c0_2 = arith.constant 0 : index
    %0 = vector.load %arg2[%c0, %c0_0, %c0_1, %c0_2] : memref<1x16x16x4xf32, #tpu.memory_space<vmem>>, vector<1x16x16x4xf32>
    %c0_3 = arith.constant 0 : index
    %c0_4 = arith.constant 0 : index
    %c0_5 = arith.constant 0 : index
    %c0_6 = arith.constant 0 : index
    %1 = vector.load %arg3[%c0_3, %c0_4, %c0_5, %c0_6] : memref<1x1x1x4xf32, #tpu.memory_space<vmem>>, vector<1x1x1x4xf32>
    %2 = vector.broadcast %1 : vector<1x1x1x4xf32> to vector<1x16x16x4xf32>
    %3 = arith.mulf %0, %2 : vector<1x16x16x4xf32>
    %c0_7 = arith.constant 0 : index
    %c0_8 = arith.constant 0 : index
    %c0_9 = arith.constant 0 : index
    %c0_10 = arith.constant 0 : index
    %4 = vector.load %arg4[%c0_7, %c0_8, %c0_9, %c0_10] : memref<1x1x1x4xf32, #tpu.memory_space<vmem>>, vector<1x1x1x4xf32>
    %5 = vector.broadcast %4 : vector<1x1x1x4xf32> to vector<1x16x16x4xf32>
    %6 = arith.addf %3, %5 : vector<1x16x16x4xf32>
    %cst = arith.constant 0.000000e+00 : f32
    %7 = vector.broadcast %cst : f32 to vector<1x16x16x4xf32>
    %8 = arith.maximumf %6, %7 : vector<1x16x16x4xf32>
    %c0_11 = arith.constant 0 : index
    %c0_12 = arith.constant 0 : index
    %c0_13 = arith.constant 0 : index
    %c0_14 = arith.constant 0 : index
    %9 = vector.load %arg5[%c0_11, %c0_12, %c0_13, %c0_14] : memref<1x16x16x4xf32, #tpu.memory_space<vmem>>, vector<1x16x16x4xf32>
    tpu.vector_store %arg5[%c0_11, %c0_12, %c0_13, %c0_14], %8 {strides = array<i32>} : memref<1x16x16x4xf32, #tpu.memory_space<vmem>>, vector<1x16x16x4xf32>,
    return
  }
  func.func @transform_0(%arg0: i32, %arg1: i32) -> (i32, i32, i32, i32) {
    %c0_i32 = arith.constant 0 : i32
    %c0_i32_0 = arith.constant 0 : i32
    %c0_i32_1 = arith.constant 0 : i32
    return %arg0, %arg1, %c0_i32, %c0_i32_0 : i32, i32, i32, i32
  }
  func.func @transform_1(%arg0: i32, %arg1: i32) -> (i32, i32, i32, i32) {
    %c0_i32 = arith.constant 0 : i32
    %c0_i32_0 = arith.constant 0 : i32
    %c0_i32_1 = arith.constant 0 : i32
    %c0_i32_2 = arith.constant 0 : i32
    %c0_i32_3 = arith.constant 0 : i32
    return %c0_i32, %c0_i32_0, %c0_i32_1, %c0_i32_2 : i32, i32, i32, i32
  }
  func.func @transform_2(%arg0: i32, %arg1: i32) -> (i32, i32, i32, i32) {
    %c0_i32 = arith.constant 0 : i32
    %c0_i32_0 = arith.constant 0 : i32
    %c0_i32_1 = arith.constant 0 : i32
    %c0_i32_2 = arith.constant 0 : i32
    %c0_i32_3 = arith.constant 0 : i32
    return %c0_i32, %c0_i32_0, %c0_i32_1, %c0_i32_2 : i32, i32, i32, i32
  }
  func.func @transform_3(%arg0: i32, %arg1: i32) -> (i32, i32, i32, i32) {
    %c0_i32 = arith.constant 0 : i32
    %c0_i32_0 = arith.constant 0 : i32
    %c0_i32_1 = arith.constant 0 : i32
    return %arg0, %arg1, %c0_i32, %c0_i32_0 : i32, i32, i32, i32
  }
}

</mosaic_0001>

<llo_original>
// kernel: _lambda_.5
$region0: #{_lambda_.5}
  #allocation0 [shape = 'u32[]', space=smem, size = 0x4, offset = 0x4, fixed_abs, tag = 'smem constant byte address 0x4 - core index']
  #allocation1 [shape = 'u32[144,128]{1,0:T(1,128)}', space=vmem, size = 0x12000, scoped, tag = 'internal scratch']
  %s0 = inlined_call_operand.vmem [shape: f32[2,16,16,4], index: 0, kind: input, shape index: {}]
  %s1 = inlined_call_operand.vmem [shape: f32[1,1,1,4], index: 1, kind: input, shape index: {}]
  %s2 = inlined_call_operand.vmem [shape: f32[1,1,1,4], index: 2, kind: input, shape index: {}]
  %s3 = inlined_call_operand.vmem [shape: f32[2,16,16,4], index: 3, kind: output, shape index: {}]
  %s4 = sld [smem:[#allocation0]]
  $region45: #{_lambda_.5} parent=0
    _
  %s6 = ssub.s32 1, %s4
  %s7 = scalar_select 0, %s6, %s4
  loop: start=0, step=1, limit=4
  $region2: #{_lambda_.5} parent=0 // loop_pre_header
    _
  $region3: #{_lambda_.5} parent=0 // loop_header
    %s9 = sphi 0, %s13
    %p10 = scmp.ge.s32.totalorder %s9, 4
    %s16 = sphi 0, %s28
    %s17 = sphi 0, %s24
    %s18 = sphi 0, %s16
    %s19 = sphi 0, %s17
    %s20 = sphi 0, %s18
    %s21 = sphi 0, %s19
    %s33 = sphi 0, %s35
    %s36 = sphi 0, %s33
    %s37 = sphi 0, %s36
    %s53 = sphi 0, %s37
    %s57 = sphi 0, %s57
    %s59 = sphi 0, %s57
    %s60 = sphi 0, %s59
    %s74 = sphi 0, %s60
    %s78 = sphi 0, %s78
    %s80 = sphi 0, %s78
    %s81 = sphi 0, %s80
    %s95 = sphi 0, %s81
    %s103 = sphi 0, %s105
    %s106 = sphi 0, %s103
    %s107 = sphi 0, %s106
    %s123 = sphi 0, %s107
  $region4: #{_lambda_.5} parent=0 // loop_header_branch
    %12 = sbr.rel (%p10) target = $region8
  $region5: #{_lambda_.5} parent=0 // loop_body
    %s14 = ssub.s32 %s9, 1
    %s15 = ssub.s32 %s9, 2
    %s22 = sadd.s32 1, %s17
    %p23 = scmp.ge.s32.totalorder %s22, 1
    %s24 = scalar_select %p23, 0, %s22
    %s25 = sadd.s32 1, %s16
    %s26 = scalar_select %p23, %s25, %s16
    %p27 = scmp.ge.s32.totalorder %s26, 2
    %s28 = scalar_select %p27, 0, %s26
    %s29 = ssub.s32 %s16, %s28
    %s30 = ssub.s32 %s17, %s24
    %s31 = sor.u32 %s29, %s30
    %p32 = scmp.eq.s32.totalorder %s31, 0
    %s34 = sadd.s32 %s33, 1
    %s35 = scalar_select %p32, %s33, %s34
    %p38 = pneg %p32
    %p39 = scmp.eq.s32.totalorder %s9, 1
    %p40 = por %p38, %p39
    %p41 = scmp.ne.s32.totalorder %s33, %s36
    %p42 = scmp.eq.s32.totalorder %s9, 0
    %p43 = por %p41, %p42
    %p44 = scmp.ne.s32.totalorder %s33, %s36
    %p45 = scmp.eq.s32.totalorder %s14, 1
    %p46 = por %p44, %p45
    %p47 = scmp.ne.s32.totalorder %s36, %s37
    %p48 = scmp.eq.s32.totalorder %s14, 0
    %p49 = por %p47, %p48
    %p50 = scmp.ne.s32.totalorder %s36, %s37
    %p51 = scmp.eq.s32.totalorder %s15, 1
    %p52 = por %p50, %p51
    %p54 = scmp.ne.s32.totalorder %s37, %s53
    %p55 = scmp.eq.s32.totalorder %s15, 0
    %p56 = por %p54, %p55
    %s58 = sadd.s32 %s57, 1
    %p61 = scmp.eq.s32.totalorder %s9, 1
    %p62 = scmp.ne.s32.totalorder %s57, %s59
    %p63 = scmp.eq.s32.totalorder %s9, 0
    %p64 = por %p62, %p63
    %p65 = scmp.ne.s32.totalorder %s57, %s59
    %p66 = scmp.eq.s32.totalorder %s14, 1
    %p67 = por %p65, %p66
    %p68 = scmp.ne.s32.totalorder %s59, %s60
    %p69 = scmp.eq.s32.totalorder %s14, 0
    %p70 = por %p68, %p69
    %p71 = scmp.ne.s32.totalorder %s59, %s60
    %p72 = scmp.eq.s32.totalorder %s15, 1
    %p73 = por %p71, %p72
    %p75 = scmp.ne.s32.totalorder %s60, %s74
    %p76 = scmp.eq.s32.totalorder %s15, 0
    %p77 = por %p75, %p76
    %s79 = sadd.s32 %s78, 1
    %p82 = scmp.eq.s32.totalorder %s9, 1
    %p83 = scmp.ne.s32.totalorder %s78, %s80
    %p84 = scmp.eq.s32.totalorder %s9, 0
    %p85 = por %p83, %p84
    %p86 = scmp.ne.s32.totalorder %s78, %s80
    %p87 = scmp.eq.s32.totalorder %s14, 1
    %p88 = por %p86, %p87
    %p89 = scmp.ne.s32.totalorder %s80, %s81
    %p90 = scmp.eq.s32.totalorder %s14, 0
    %p91 = por %p89, %p90
    %p92 = scmp.ne.s32.totalorder %s80, %s81
    %p93 = scmp.eq.s32.totalorder %s15, 1
    %p94 = por %p92, %p93
    %p96 = scmp.ne.s32.totalorder %s81, %s95
    %p97 = scmp.eq.s32.totalorder %s15, 0
    %p98 = por %p96, %p97
    %s99 = ssub.s32 %s16, %s28
    %s100 = ssub.s32 %s17, %s24
    %s101 = sor.u32 %s99, %s100
    %p102 = scmp.eq.s32.totalorder %s101, 0
    %s104 = sadd.s32 %s103, 1
    %s105 = scalar_select %p102, %s103, %s104
    %p108 = pneg %p102
    %p109 = scmp.eq.s32.totalorder %s9, 1
    %p110 = por %p108, %p109
    %p111 = scmp.ne.s32.totalorder %s103, %s106
    %p112 = scmp.eq.s32.totalorder %s9, 0
    %p113 = por %p111, %p112
    %p114 = scmp.ne.s32.totalorder %s103, %s106
    %p115 = scmp.eq.s32.totalorder %s14, 1
    %p116 = por %p114, %p115
    %p117 = scmp.ne.s32.totalorder %s106, %s107
    %p118 = scmp.eq.s32.totalorder %s14, 0
    %p119 = por %p117, %p118
    %p120 = scmp.ne.s32.totalorder %s106, %s107
    %p121 = scmp.eq.s32.totalorder %s15, 1
    %p122 = por %p120, %p121
    %p124 = scmp.ne.s32.totalorder %s107, %s123
    %p125 = scmp.eq.s32.totalorder %s15, 0
    %p126 = por %p124, %p125
    %p127 = scmp.le.s32.totalorder 1, %s9
    %p128 = scmp.lt.s32.totalorder %s9, 3
    %p129 = pnand %p127, %p128
    %p130 = pneg %p129
    // Predicated region
    $region9: #{_lambda_.5} parent=5 // pred_check
      _
    $region10: #{_lambda_.5} parent=5 // pred_check_branch
      %132 = sbr.rel (%p129) target = $region12
    $region11: #{_lambda_.5} parent=5 // pred_region
      %s133 = ssub.s32 %s9, 1
      // Predicated region
      $region13: #{_lambda_.5} parent=11 // pred_check
        %p134 = pneg %p70
      $region14: #{_lambda_.5} parent=11 // pred_check_branch
        %136 = sbr.rel (%p134) target = $region16
      $region15: #{_lambda_.5} parent=11 // pred_region
        _
      $region16: #{_lambda_.5} parent=11 // pred_fallthru
        _
      // Predicated region
      $region17: #{_lambda_.5} parent=11 // pred_check
        %p137 = pneg %p91
      $region18: #{_lambda_.5} parent=11 // pred_check_branch
        %139 = sbr.rel (%p137) target = $region20
      $region19: #{_lambda_.5} parent=11 // pred_region
        _
      $region20: #{_lambda_.5} parent=11 // pred_fallthru
        _
    $region12: #{_lambda_.5} parent=5 // pred_fallthru
      _
    %p140 = scmp.lt.s32.totalorder %s9, 2
    // Predicated region
    $region21: #{_lambda_.5} parent=5 // pred_check
      %p141 = pneg %p140
    $region22: #{_lambda_.5} parent=5 // pred_check_branch
      %143 = sbr.rel (%p141) target = $region24
    $region23: #{_lambda_.5} parent=5 // pred_region
      // Predicated region
      $region25: #{_lambda_.5} parent=23 // pred_check
        %p144 = pneg %p43
      $region26: #{_lambda_.5} parent=23 // pred_check_branch
        %146 = sbr.rel (%p144) target = $region28
      $region27: #{_lambda_.5} parent=23 // pred_region
        %s147 = smul.u32 16, %s17
        %p148 = scmp.lt.s32.totalorder %s16, 1
        %s149 = scalar_select %p148, %s16, 1
        %p150 = scmp.lt.s32.totalorder %s147, 15
        %s151 = scalar_select %p150, %s147, 15
        %s152 = smul.addr %s151, 2
        %s153 = smul.addr %s149, 32
        %s154 = sadd.s32 %s152, %s153
        %s155 = smul.addr %s154, 8
        %s156 = scalar_lea.vmem %s0, %s155
        %s157 = smul.u32 16, %s17
      $region28: #{_lambda_.5} parent=23 // pred_fallthru
        _
    $region24: #{_lambda_.5} parent=5 // pred_fallthru
      _
    %p158 = scmp.le.s32.totalorder 1, %s9
    %p159 = scmp.lt.s32.totalorder %s9, 3
    %p160 = pnand %p158, %p159
    %p161 = pneg %p160
    // Predicated region
    $region29: #{_lambda_.5} parent=5 // pred_check
      _
    $region30: #{_lambda_.5} parent=5 // pred_check_branch
      %163 = sbr.rel (%p160) target = $region32
    $region31: #{_lambda_.5} parent=5 // pred_region
      %s164 = ssub.s32 %s9, 1
      %s165 = smul.u32 16, %s19
      %p166 = scmp.lt.s32.totalorder %s18, 1
      %s167 = scalar_select %p166, %s18, 1
      %p168 = scmp.lt.s32.totalorder %s165, 15
      %s169 = scalar_select %p168, %s165, 15
      %s170 = smul.addr %s169, 2
      %s171 = smul.addr %s167, 32
      %s172 = sadd.s32 %s170, %s171
      %s173 = smul.addr %s172, 8
      %s174 = scalar_lea.vmem %s0, %s173
      %p175 = pneg %p49
      %p176 = pneg %p46
      %p177 = pneg %p70
      %p178 = pneg %p67
      %p179 = pneg %p91
      %p180 = pneg %p88
      %p181 = pneg %p119
      %p182 = pneg %p116
      %s183 = smul.u32 16, %s19
      %p184 = scmp.lt.s32.totalorder %s18, 1
      %s185 = scalar_select %p184, %s18, 1
      %p186 = scmp.lt.s32.totalorder %s183, 15
      %s187 = scalar_select %p186, %s183, 15
      %s188 = smul.addr %s187, 2
      %s189 = smul.addr %s185, 32
      %s190 = sadd.s32 %s188, %s189
      %s191 = smul.addr %s190, 8
      %s192 = scalar_lea.vmem %s3, %s191
      %s193 = smul.u32 16, %s19
      %p194 = scmp.lt.s32.totalorder %s18, 1
      %s195 = scalar_select %p194, %s18, 1
      %p196 = scmp.lt.s32.totalorder %s193, 15
      %s197 = scalar_select %p196, %s193, 15
      %s198 = smul.addr %s197, 2
      %s199 = smul.addr %s195, 32
      %s200 = sadd.s32 %s198, %s199
      %s201 = smul.addr %s200, 8
      %s202 = scalar_lea.vmem %s0, %s201
      %s203 = smul.u32 16, %s19
      %s204 = smul.u32 16, %s19
      %p205 = scmp.lt.s32.totalorder %s18, 1
      %s206 = scalar_select %p205, %s18, 1
      %p207 = scmp.lt.s32.totalorder %s204, 15
      %s208 = scalar_select %p207, %s204, 15
      %s209 = smul.addr %s208, 2
      %s210 = smul.addr %s206, 32
      %s211 = sadd.s32 %s209, %s210
      %s212 = smul.addr %s211, 8
      %s213 = scalar_lea.vmem %s3, %s212
      %s214 = smul.u32 16, %s19
      %v215 = vld [vmem:[%s202] sm:$0xff]
      %v216 = vld [vmem:[%s202 + $0x8] sm:$0xff]
      %v217 = vld [vmem:[%s202 + $0x10] sm:$0xff]
      %v218 = vld [vmem:[%s202 + $0x18] sm:$0xff]
      %v219 = vld [vmem:[%s202 + $0x20] sm:$0xff]
      %v220 = vld [vmem:[%s202 + $0x28] sm:$0xff]
      %v221 = vld [vmem:[%s202 + $0x30] sm:$0xff]
      %v222 = vld [vmem:[%s202 + $0x38] sm:$0xff]
      %v223 = vld [vmem:[%s202 + $0x40] sm:$0xff]
      %v224 = vld [vmem:[%s202 + $0x48] sm:$0xff]
      %v225 = vld [vmem:[%s202 + $0x50] sm:$0xff]
      %v226 = vld [vmem:[%s202 + $0x58] sm:$0xff]
      %v227 = vld [vmem:[%s202 + $0x60] sm:$0xff]
      %v228 = vld [vmem:[%s202 + $0x68] sm:$0xff]
      %v229 = vld [vmem:[%s202 + $0x70] sm:$0xff]
      %v230 = vld [vmem:[%s202 + $0x78] sm:$0xff]
      %v231 = vld [vmem:[%s202 + $0x80] sm:$0xff]
      %v232 = vld [vmem:[%s202 + $0x88] sm:$0xff]
      %v233 = vld [vmem:[%s202 + $0x90] sm:$0xff]
      %v234 = vld [vmem:[%s202 + $0x98] sm:$0xff]
      %v235 = vld [vmem:[%s202 + $0xa0] sm:$0xff]
      %v236 = vld [vmem:[%s202 + $0xa8] sm:$0xff]
      %v237 = vld [vmem:[%s202 + $0xb0] sm:$0xff]
      %v238 = vld [vmem:[%s202 + $0xb8] sm:$0xff]
      %v239 = vld [vmem:[%s202 + $0xc0] sm:$0xff]
      %v240 = vld [vmem:[%s202 + $0xc8] sm:$0xff]
      %v241 = vld [vmem:[%s202 + $0xd0] sm:$0xff]
      %v242 = vld [vmem:[%s202 + $0xd8] sm:$0xff]
      %v243 = vld [vmem:[%s202 + $0xe0] sm:$0xff]
      %v244 = vld [vmem:[%s202 + $0xe8] sm:$0xff]
      %v245 = vld [vmem:[%s202 + $0xf0] sm:$0xff]
      %v246 = vld [vmem:[%s202 + $0xf8] sm:$0xff]
      %v247 = vld [vmem:[%s1] sm:$0x1]
      %v249 = vlaneseq
      %v250 = vshrl.u32 %v249, 7
      %v251 = vsub.s32 0, %v250
      %v252 = vrot.slane %v247, %v251
      %v254 = vmul.f32 %v215, %v252
      %v255 = vmul.f32 %v216, %v252
      %v256 = vmul.f32 %v217, %v252
      %v257 = vmul.f32 %v218, %v252
      %v258 = vmul.f32 %v219, %v252
      %v259 = vmul.f32 %v220, %v252
      %v260 = vmul.f32 %v221, %v252
      %v261 = vmul.f32 %v222, %v252
      %v262 = vmul.f32 %v223, %v252
      %v263 = vmul.f32 %v224, %v252
      %v264 = vmul.f32 %v225, %v252
      %v265 = vmul.f32 %v226, %v252
      %v266 = vmul.f32 %v227, %v252
      %v267 = vmul.f32 %v228, %v252
      %v268 = vmul.f32 %v229, %v252
      %v269 = vmul.f32 %v230, %v252
      %v270 = vmul.f32 %v231, %v252
      %v271 = vmul.f32 %v232, %v252
      %v272 = vmul.f32 %v233, %v252
      %v273 = vmul.f32 %v234, %v252
      %v274 = vmul.f32 %v235, %v252
      %v275 = vmul.f32 %v236, %v252
      %v276 = vmul.f32 %v237, %v252
      %v277 = vmul.f32 %v238, %v252
      %v278 = vmul.f32 %v239, %v252
      %v279 = vmul.f32 %v240, %v252
      %v280 = vmul.f32 %v241, %v252
      %v281 = vmul.f32 %v242, %v252
      %v282 = vmul.f32 %v243, %v252
      %v283 = vmul.f32 %v244, %v252
      %v284 = vmul.f32 %v245, %v252
      %v285 = vmul.f32 %v246, %v252
      %v286 = vld [vmem:[%s2] sm:$0x1]
      %v288 = vlaneseq
      %v289 = vshrl.u32 %v288, 7
      %v290 = vsub.s32 0, %v289
      %v291 = vrot.slane %v286, %v290
      %v293 = vadd.f32 %v254, %v291
      %v294 = vadd.f32 %v255, %v291
      %v295 = vadd.f32 %v256, %v291
      %v296 = vadd.f32 %v257, %v291
      %v297 = vadd.f32 %v258, %v291
      %v298 = vadd.f32 %v259, %v291
      %v299 = vadd.f32 %v260, %v291
      %v300 = vadd.f32 %v261, %v291
      %v301 = vadd.f32 %v262, %v291
      %v302 = vadd.f32 %v263, %v291
      %v303 = vadd.f32 %v264, %v291
      %v304 = vadd.f32 %v265, %v291
      %v305 = vadd.f32 %v266, %v291
      %v306 = vadd.f32 %v267, %v291
      %v307 = vadd.f32 %v268, %v291
      %v308 = vadd.f32 %v269, %v291
      %v309 = vadd.f32 %v270, %v291
      %v310 = vadd.f32 %v271, %v291
      %v311 = vadd.f32 %v272, %v291
      %v312 = vadd.f32 %v273, %v291
      %v313 = vadd.f32 %v274, %v291
      %v314 = vadd.f32 %v275, %v291
      %v315 = vadd.f32 %v276, %v291
      %v316 = vadd.f32 %v277, %v291
      %v317 = vadd.f32 %v278, %v291
      %v318 = vadd.f32 %v279, %v291
      %v319 = vadd.f32 %v280, %v291
      %v320 = vadd.f32 %v281, %v291
      %v321 = vadd.f32 %v282, %v291
      %v322 = vadd.f32 %v283, %v291
      %v323 = vadd.f32 %v284, %v291
      %v324 = vadd.f32 %v285, %v291
      %v325 = vmax.f32 %v293, 0.0
      %v326 = vmax.f32 %v294, 0.0
      %v327 = vmax.f32 %v295, 0.0
      %v328 = vmax.f32 %v296, 0.0
      %v329 = vmax.f32 %v297, 0.0
      %v330 = vmax.f32 %v298, 0.0
      %v331 = vmax.f32 %v299, 0.0
      %v332 = vmax.f32 %v300, 0.0
      %v333 = vmax.f32 %v301, 0.0
      %v334 = vmax.f32 %v302, 0.0
      %v335 = vmax.f32 %v303, 0.0
      %v336 = vmax.f32 %v304, 0.0
      %v337 = vmax.f32 %v305, 0.0
      %v338 = vmax.f32 %v306, 0.0
      %v339 = vmax.f32 %v307, 0.0
      %v340 = vmax.f32 %v308, 0.0
      %v341 = vmax.f32 %v309, 0.0
      %v342 = vmax.f32 %v310, 0.0
      %v343 = vmax.f32 %v311, 0.0
      %v344 = vmax.f32 %v312, 0.0
      %v345 = vmax.f32 %v313, 0.0
      %v346 = vmax.f32 %v314, 0.0
      %v347 = vmax.f32 %v315, 0.0
      %v348 = vmax.f32 %v316, 0.0
      %v349 = vmax.f32 %v317, 0.0
      %v350 = vmax.f32 %v318, 0.0
      %v351 = vmax.f32 %v319, 0.0
      %v352 = vmax.f32 %v320, 0.0
      %v353 = vmax.f32 %v321, 0.0
      %v354 = vmax.f32 %v322, 0.0
      %v355 = vmax.f32 %v323, 0.0
      %v356 = vmax.f32 %v324, 0.0
      %vm357 = vcmask 31744
      %358 = vst.msk [vmem:[%s213] sm:$0xff] %vm357, %v325
      %359 = vst.msk [vmem:[%s213 + $0x8] sm:$0xff] %vm357, %v326
      %360 = vst.msk [vmem:[%s213 + $0x10] sm:$0xff] %vm357, %v327
      %361 = vst.msk [vmem:[%s213 + $0x18] sm:$0xff] %vm357, %v328
      %362 = vst.msk [vmem:[%s213 + $0x20] sm:$0xff] %vm357, %v329
      %363 = vst.msk [vmem:[%s213 + $0x28] sm:$0xff] %vm357, %v330
      %364 = vst.msk [vmem:[%s213 + $0x30] sm:$0xff] %vm357, %v331
      %365 = vst.msk [vmem:[%s213 + $0x38] sm:$0xff] %vm357, %v332
      %366 = vst.msk [vmem:[%s213 + $0x40] sm:$0xff] %vm357, %v333
      %367 = vst.msk [vmem:[%s213 + $0x48] sm:$0xff] %vm357, %v334
      %368 = vst.msk [vmem:[%s213 + $0x50] sm:$0xff] %vm357, %v335
      %369 = vst.msk [vmem:[%s213 + $0x58] sm:$0xff] %vm357, %v336
      %370 = vst.msk [vmem:[%s213 + $0x60] sm:$0xff] %vm357, %v337
      %371 = vst.msk [vmem:[%s213 + $0x68] sm:$0xff] %vm357, %v338
      %372 = vst.msk [vmem:[%s213 + $0x70] sm:$0xff] %vm357, %v339
      %373 = vst.msk [vmem:[%s213 + $0x78] sm:$0xff] %vm357, %v340
      %374 = vst.msk [vmem:[%s213 + $0x80] sm:$0xff] %vm357, %v341
      %375 = vst.msk [vmem:[%s213 + $0x88] sm:$0xff] %vm357, %v342
      %376 = vst.msk [vmem:[%s213 + $0x90] sm:$0xff] %vm357, %v343
      %377 = vst.msk [vmem:[%s213 + $0x98] sm:$0xff] %vm357, %v344
      %378 = vst.msk [vmem:[%s213 + $0xa0] sm:$0xff] %vm357, %v345
      %379 = vst.msk [vmem:[%s213 + $0xa8] sm:$0xff] %vm357, %v346
      %380 = vst.msk [vmem:[%s213 + $0xb0] sm:$0xff] %vm357, %v347
      %381 = vst.msk [vmem:[%s213 + $0xb8] sm:$0xff] %vm357, %v348
      %382 = vst.msk [vmem:[%s213 + $0xc0] sm:$0xff] %vm357, %v349
      %383 = vst.msk [vmem:[%s213 + $0xc8] sm:$0xff] %vm357, %v350
      %384 = vst.msk [vmem:[%s213 + $0xd0] sm:$0xff] %vm357, %v351
      %385 = vst.msk [vmem:[%s213 + $0xd8] sm:$0xff] %vm357, %v352
      %386 = vst.msk [vmem:[%s213 + $0xe0] sm:$0xff] %vm357, %v353
      %387 = vst.msk [vmem:[%s213 + $0xe8] sm:$0xff] %vm357, %v354
      %388 = vst.msk [vmem:[%s213 + $0xf0] sm:$0xff] %vm357, %v355
      %389 = vst.msk [vmem:[%s213 + $0xf8] sm:$0xff] %vm357, %v356
      %s390 = smul.u32 16, %s19
      %p391 = scmp.lt.s32.totalorder %s18, 1
      %s392 = scalar_select %p391, %s18, 1
      %p393 = scmp.lt.s32.totalorder %s390, 15
      %s394 = scalar_select %p393, %s390, 15
      %s395 = smul.addr %s394, 2
      %s396 = smul.addr %s392, 32
      %s397 = sadd.s32 %s395, %s396
      %s398 = smul.addr %s397, 8
      %s399 = scalar_lea.vmem %s3, %s398
      // Predicated region
      $region33: #{_lambda_.5} parent=31 // pred_check
        %p400 = pneg %p116
      $region34: #{_lambda_.5} parent=31 // pred_check_branch
        %402 = sbr.rel (%p400) target = $region36
      $region35: #{_lambda_.5} parent=31 // pred_region
        %s403 = smul.u32 16, %s19
      $region36: #{_lambda_.5} parent=31 // pred_fallthru
        _
    $region32: #{_lambda_.5} parent=5 // pred_fallthru
      _
    %p404 = scmp.le.s32.totalorder 2, %s9
    // Predicated region
    $region37: #{_lambda_.5} parent=5 // pred_check
      %p405 = pneg %p404
    $region38: #{_lambda_.5} parent=5 // pred_check_branch
      %407 = sbr.rel (%p405) target = $region40
    $region39: #{_lambda_.5} parent=5 // pred_region
      %s408 = ssub.s32 %s9, 2
      // Predicated region
      $region41: #{_lambda_.5} parent=39 // pred_check
        %p409 = pneg %p122
      $region42: #{_lambda_.5} parent=39 // pred_check_branch
        %411 = sbr.rel (%p409) target = $region44
      $region43: #{_lambda_.5} parent=39 // pred_region
        %s412 = smul.u32 16, %s21
        %p413 = scmp.lt.s32.totalorder %s20, 1
        %s414 = scalar_select %p413, %s20, 1
        %p415 = scmp.lt.s32.totalorder %s412, 15
        %s416 = scalar_select %p415, %s412, 15
        %s417 = smul.addr %s416, 2
        %s418 = smul.addr %s414, 32
        %s419 = sadd.s32 %s417, %s418
        %s420 = smul.addr %s419, 8
        %s421 = scalar_lea.vmem %s3, %s420
      $region44: #{_lambda_.5} parent=39 // pred_fallthru
        _
    $region40: #{_lambda_.5} parent=5 // pred_fallthru
      _
  $region6: #{_lambda_.5} parent=0 // loop_footer
    %s13 = sadd.s32 1, %s9
  $region7: #{_lambda_.5} parent=0 // loop_footer_branch
    %8 = sbr.rel target = $region3
  $region8: #{_lambda_.5} parent=0 // loop_exit
    _

// kernel: _lambda_.4
$region0: #{_lambda_.4}
  #allocation0 [shape = 'u32[]', space=smem, size = 0x4, offset = 0x4, fixed_abs, tag = 'smem constant byte address 0x4 - core index']
  #allocation1 [shape = 'u32[144,128]{1,0:T(1,128)}', space=vmem, size = 0x12000, scoped, tag = 'internal scratch']
  %s0 = inlined_call_operand.vmem [shape: bf16[2,16,18,4], index: 0, kind: input, shape index: {}]
  %s1 = inlined_call_operand.vmem [shape: bf16[2,16,18,4], index: 1, kind: input, shape index: {}]
  %s2 = inlined_call_operand.vmem [shape: bf16[2,16,18,4], index: 2, kind: input, shape index: {}]
  %s3 = inlined_call_operand.vmem [shape: bf16[9,4,4], index: 3, kind: input, shape index: {}]
  %s4 = inlined_call_operand.vmem [shape: f32[1,4], index: 4, kind: input, shape index: {}]
  %s5 = inlined_call_operand.vmem [shape: f32[2,16,16,4], index: 5, kind: output, shape index: {0}]
  %s6 = inlined_call_operand.vmem [shape: f32[2,1,2,4], index: 6, kind: output, shape index: {1}]
  %7 = xla_tuple %s5, %s6
  %s8 = sld [smem:[#allocation0]]
  $region61: #{_lambda_.4} parent=0
    _
  %s10 = ssub.s32 1, %s8
  %s11 = scalar_select 0, %s10, %s8
  loop: start=0, step=1, limit=4
  $region2: #{_lambda_.4} parent=0 // loop_pre_header
    _
  $region3: #{_lambda_.4} parent=0 // loop_header
    %s13 = sphi 0, %s17
    %p14 = scmp.ge.s32.totalorder %s13, 4
    %s20 = sphi 0, %s32
    %s21 = sphi 0, %s28
    %s22 = sphi 0, %s20
    %s23 = sphi 0, %s21
    %s24 = sphi 0, %s22
    %s25 = sphi 0, %s23
    %s37 = sphi 0, %s39
    %s40 = sphi 0, %s37
    %s41 = sphi 0, %s40
    %s57 = sphi 0, %s41
    %s65 = sphi 0, %s67
    %s68 = sphi 0, %s65
    %s69 = sphi 0, %s68
    %s85 = sphi 0, %s69
    %s93 = sphi 0, %s95
    %s96 = sphi 0, %s93
    %s97 = sphi 0, %s96
    %s113 = sphi 0, %s97
    %s117 = sphi 0, %s117
    %s119 = sphi 0, %s117
    %s120 = sphi 0, %s119
    %s134 = sphi 0, %s120
    %s138 = sphi 0, %s138
    %s140 = sphi 0, %s138
    %s141 = sphi 0, %s140
    %s155 = sphi 0, %s141
    %s163 = sphi 0, %s165
    %s166 = sphi 0, %s163
    %s167 = sphi 0, %s166
    %s183 = sphi 0, %s167
    %s191 = sphi 0, %s193
    %s194 = sphi 0, %s191
    %s195 = sphi 0, %s194
    %s211 = sphi 0, %s195
  $region4: #{_lambda_.4} parent=0 // loop_header_branch
    %16 = sbr.rel (%p14) target = $region8
  $region5: #{_lambda_.4} parent=0 // loop_body
    %s18 = ssub.s32 %s13, 1
    %s19 = ssub.s32 %s13, 2
    %s26 = sadd.s32 1, %s21
    %p27 = scmp.ge.s32.totalorder %s26, 1
    %s28 = scalar_select %p27, 0, %s26
    %s29 = sadd.s32 1, %s20
    %s30 = scalar_select %p27, %s29, %s20
    %p31 = scmp.ge.s32.totalorder %s30, 2
    %s32 = scalar_select %p31, 0, %s30
    %s33 = ssub.s32 %s20, %s32
    %s34 = ssub.s32 %s21, %s28
    %s35 = sor.u32 %s33, %s34
    %p36 = scmp.eq.s32.totalorder %s35, 0
    %s38 = sadd.s32 %s37, 1
    %s39 = scalar_select %p36, %s37, %s38
    %p42 = pneg %p36
    %p43 = scmp.eq.s32.totalorder %s13, 1
    %p44 = por %p42, %p43
    %p45 = scmp.ne.s32.totalorder %s37, %s40
    %p46 = scmp.eq.s32.totalorder %s13, 0
    %p47 = por %p45, %p46
    %p48 = scmp.ne.s32.totalorder %s37, %s40
    %p49 = scmp.eq.s32.totalorder %s18, 1
    %p50 = por %p48, %p49
    %p51 = scmp.ne.s32.totalorder %s40, %s41
    %p52 = scmp.eq.s32.totalorder %s18, 0
    %p53 = por %p51, %p52
    %p54 = scmp.ne.s32.totalorder %s40, %s41
    %p55 = scmp.eq.s32.totalorder %s19, 1
    %p56 = por %p54, %p55
    %p58 = scmp.ne.s32.totalorder %s41, %s57
    %p59 = scmp.eq.s32.totalorder %s19, 0
    %p60 = por %p58, %p59
    %s61 = ssub.s32 %s20, %s32
    %s62 = ssub.s32 %s21, %s28
    %s63 = sor.u32 %s61, %s62
    %p64 = scmp.eq.s32.totalorder %s63, 0
    %s66 = sadd.s32 %s65, 1
    %s67 = scalar_select %p64, %s65, %s66
    %p70 = pneg %p64
    %p71 = scmp.eq.s32.totalorder %s13, 1
    %p72 = por %p70, %p71
    %p73 = scmp.ne.s32.totalorder %s65, %s68
    %p74 = scmp.eq.s32.totalorder %s13, 0
    %p75 = por %p73, %p74
    %p76 = scmp.ne.s32.totalorder %s65, %s68
    %p77 = scmp.eq.s32.totalorder %s18, 1
    %p78 = por %p76, %p77
    %p79 = scmp.ne.s32.totalorder %s68, %s69
    %p80 = scmp.eq.s32.totalorder %s18, 0
    %p81 = por %p79, %p80
    %p82 = scmp.ne.s32.totalorder %s68, %s69
    %p83 = scmp.eq.s32.totalorder %s19, 1
    %p84 = por %p82, %p83
    %p86 = scmp.ne.s32.totalorder %s69, %s85
    %p87 = scmp.eq.s32.totalorder %s19, 0
    %p88 = por %p86, %p87
    %s89 = ssub.s32 %s20, %s32
    %s90 = ssub.s32 %s21, %s28
    %s91 = sor.u32 %s89, %s90
    %p92 = scmp.eq.s32.totalorder %s91, 0
    %s94 = sadd.s32 %s93, 1
    %s95 = scalar_select %p92, %s93, %s94
    %p98 = pneg %p92
    %p99 = scmp.eq.s32.totalorder %s13, 1
    %p100 = por %p98, %p99
    %p101 = scmp.ne.s32.totalorder %s93, %s96
    %p102 = scmp.eq.s32.totalorder %s13, 0
    %p103 = por %p101, %p102
    %p104 = scmp.ne.s32.totalorder %s93, %s96
    %p105 = scmp.eq.s32.totalorder %s18, 1
    %p106 = por %p104, %p105
    %p107 = scmp.ne.s32.totalorder %s96, %s97
    %p108 = scmp.eq.s32.totalorder %s18, 0
    %p109 = por %p107, %p108
    %p110 = scmp.ne.s32.totalorder %s96, %s97
    %p111 = scmp.eq.s32.totalorder %s19, 1
    %p112 = por %p110, %p111
    %p114 = scmp.ne.s32.totalorder %s97, %s113
    %p115 = scmp.eq.s32.totalorder %s19, 0
    %p116 = por %p114, %p115
    %s118 = sadd.s32 %s117, 1
    %p121 = scmp.eq.s32.totalorder %s13, 1
    %p122 = scmp.ne.s32.totalorder %s117, %s119
    %p123 = scmp.eq.s32.totalorder %s13, 0
    %p124 = por %p122, %p123
    %p125 = scmp.ne.s32.totalorder %s117, %s119
    %p126 = scmp.eq.s32.totalorder %s18, 1
    %p127 = por %p125, %p126
    %p128 = scmp.ne.s32.totalorder %s119, %s120
    %p129 = scmp.eq.s32.totalorder %s18, 0
    %p130 = por %p128, %p129
    %p131 = scmp.ne.s32.totalorder %s119, %s120
    %p132 = scmp.eq.s32.totalorder %s19, 1
    %p133 = por %p131, %p132
    %p135 = scmp.ne.s32.totalorder %s120, %s134
    %p136 = scmp.eq.s32.totalorder %s19, 0
    %p137 = por %p135, %p136
    %s139 = sadd.s32 %s138, 1
    %p142 = scmp.eq.s32.totalorder %s13, 1
    %p143 = scmp.ne.s32.totalorder %s138, %s140
    %p144 = scmp.eq.s32.totalorder %s13, 0
    %p145 = por %p143, %p144
    %p146 = scmp.ne.s32.totalorder %s138, %s140
    %p147 = scmp.eq.s32.totalorder %s18, 1
    %p148 = por %p146, %p147
    %p149 = scmp.ne.s32.totalorder %s140, %s141
    %p150 = scmp.eq.s32.totalorder %s18, 0
    %p151 = por %p149, %p150
    %p152 = scmp.ne.s32.totalorder %s140, %s141
    %p153 = scmp.eq.s32.totalorder %s19, 1
    %p154 = por %p152, %p153
    %p156 = scmp.ne.s32.totalorder %s141, %s155
    %p157 = scmp.eq.s32.totalorder %s19, 0
    %p158 = por %p156, %p157
    %s159 = ssub.s32 %s20, %s32
    %s160 = ssub.s32 %s21, %s28
    %s161 = sor.u32 %s159, %s160
    %p162 = scmp.eq.s32.totalorder %s161, 0
    %s164 = sadd.s32 %s163, 1
    %s165 = scalar_select %p162, %s163, %s164
    %p168 = pneg %p162
    %p169 = scmp.eq.s32.totalorder %s13, 1
    %p170 = por %p168, %p169
    %p171 = scmp.ne.s32.totalorder %s163, %s166
    %p172 = scmp.eq.s32.totalorder %s13, 0
    %p173 = por %p171, %p172
    %p174 = scmp.ne.s32.totalorder %s163, %s166
    %p175 = scmp.eq.s32.totalorder %s18, 1
    %p176 = por %p174, %p175
    %p177 = scmp.ne.s32.totalorder %s166, %s167
    %p178 = scmp.eq.s32.totalorder %s18, 0
    %p179 = por %p177, %p178
    %p180 = scmp.ne.s32.totalorder %s166, %s167
    %p181 = scmp.eq.s32.totalorder %s19, 1
    %p182 = por %p180, %p181
    %p184 = scmp.ne.s32.totalorder %s167, %s183
    %p185 = scmp.eq.s32.totalorder %s19, 0
    %p186 = por %p184, %p185
    %s187 = ssub.s32 %s20, %s32
    %s188 = ssub.s32 %s21, %s28
    %s189 = sor.u32 %s187, %s188
    %p190 = scmp.eq.s32.totalorder %s189, 0
    %s192 = sadd.s32 %s191, 1
    %s193 = scalar_select %p190, %s191, %s192
    %p196 = pneg %p190
    %p197 = scmp.eq.s32.totalorder %s13, 1
    %p198 = por %p196, %p197
    %p199 = scmp.ne.s32.totalorder %s191, %s194
    %p200 = scmp.eq.s32.totalorder %s13, 0
    %p201 = por %p199, %p200
    %p202 = scmp.ne.s32.totalorder %s191, %s194
    %p203 = scmp.eq.s32.totalorder %s18, 1
    %p204 = por %p202, %p203
    %p205 = scmp.ne.s32.totalorder %s194, %s195
    %p206 = scmp.eq.s32.totalorder %s18, 0
    %p207 = por %p205, %p206
    %p208 = scmp.ne.s32.totalorder %s194, %s195
    %p209 = scmp.eq.s32.totalorder %s19, 1
    %p210 = por %p208, %p209
    %p212 = scmp.ne.s32.totalorder %s195, %s211
    %p213 = scmp.eq.s32.totalorder %s19, 0
    %p214 = por %p212, %p213
    %p215 = scmp.le.s32.totalorder 1, %s13
    %p216 = scmp.lt.s32.totalorder %s13, 3
    %p217 = pnand %p215, %p216
    %p218 = pneg %p217
    // Predicated region
    $region9: #{_lambda_.4} parent=5 // pred_check
      _
    $region10: #{_lambda_.4} parent=5 // pred_check_branch
      %220 = sbr.rel (%p217) target = $region12
    $region11: #{_lambda_.4} parent=5 // pred_region
      %s221 = ssub.s32 %s13, 1
      // Predicated region
      $region13: #{_lambda_.4} parent=11 // pred_check
        %p222 = pneg %p130
      $region14: #{_lambda_.4} parent=11 // pred_check_branch
        %224 = sbr.rel (%p222) target = $region16
      $region15: #{_lambda_.4} parent=11 // pred_region
        _
      $region16: #{_lambda_.4} parent=11 // pred_fallthru
        _
      // Predicated region
      $region17: #{_lambda_.4} parent=11 // pred_check
        %p225 = pneg %p151
      $region18: #{_lambda_.4} parent=11 // pred_check_branch
        %227 = sbr.rel (%p225) target = $region20
      $region19: #{_lambda_.4} parent=11 // pred_region
        _
      $region20: #{_lambda_.4} parent=11 // pred_fallthru
        _
    $region12: #{_lambda_.4} parent=5 // pred_fallthru
      _
    %p228 = scmp.lt.s32.totalorder %s13, 2
    // Predicated region
    $region21: #{_lambda_.4} parent=5 // pred_check
      %p229 = pneg %p228
    $region22: #{_lambda_.4} parent=5 // pred_check_branch
      %231 = sbr.rel (%p229) target = $region24
    $region23: #{_lambda_.4} parent=5 // pred_region
      // Predicated region
      $region25: #{_lambda_.4} parent=23 // pred_check
        %p232 = pneg %p47
      $region26: #{_lambda_.4} parent=23 // pred_check_branch
        %234 = sbr.rel (%p232) target = $region28
      $region27: #{_lambda_.4} parent=23 // pred_region
        %s235 = smul.u32 16, %s21
        %p236 = scmp.lt.s32.totalorder %s20, 1
        %s237 = scalar_select %p236, %s20, 1
        %p238 = scmp.lt.s32.totalorder %s235, 15
        %s239 = scalar_select %p238, %s235, 15
        %s240 = smul.addr %s239, 3
        %s241 = smul.addr %s237, 48
        %s242 = sadd.s32 %s240, %s241
        %s243 = smul.addr %s242, 4
        %s244 = scalar_lea.vmem %s0, %s243
        %s245 = smul.u32 16, %s21
      $region28: #{_lambda_.4} parent=23 // pred_fallthru
        _
      // Predicated region
      $region29: #{_lambda_.4} parent=23 // pred_check
        %p246 = pneg %p75
      $region30: #{_lambda_.4} parent=23 // pred_check_branch
        %248 = sbr.rel (%p246) target = $region32
      $region31: #{_lambda_.4} parent=23 // pred_region
        %s249 = smul.u32 16, %s21
        %p250 = scmp.lt.s32.totalorder %s20, 1
        %s251 = scalar_select %p250, %s20, 1
        %p252 = scmp.lt.s32.totalorder %s249, 15
        %s253 = scalar_select %p252, %s249, 15
        %s254 = smul.addr %s253, 3
        %s255 = smul.addr %s251, 48
        %s256 = sadd.s32 %s254, %s255
        %s257 = smul.addr %s256, 4
        %s258 = scalar_lea.vmem %s1, %s257
        %s259 = smul.u32 16, %s21
      $region32: #{_lambda_.4} parent=23 // pred_fallthru
        _
      // Predicated region
      $region33: #{_lambda_.4} parent=23 // pred_check
        %p260 = pneg %p103
      $region34: #{_lambda_.4} parent=23 // pred_check_branch
        %262 = sbr.rel (%p260) target = $region36
      $region35: #{_lambda_.4} parent=23 // pred_region
        %s263 = smul.u32 16, %s21
        %p264 = scmp.lt.s32.totalorder %s20, 1
        %s265 = scalar_select %p264, %s20, 1
        %p266 = scmp.lt.s32.totalorder %s263, 15
        %s267 = scalar_select %p266, %s263, 15
        %s268 = smul.addr %s267, 3
        %s269 = smul.addr %s265, 48
        %s270 = sadd.s32 %s268, %s269
        %s271 = smul.addr %s270, 4
        %s272 = scalar_lea.vmem %s2, %s271
        %s273 = smul.u32 16, %s21
      $region36: #{_lambda_.4} parent=23 // pred_fallthru
        _
    $region24: #{_lambda_.4} parent=5 // pred_fallthru
      _
    %p274 = scmp.le.s32.totalorder 1, %s13
    %p275 = scmp.lt.s32.totalorder %s13, 3
    %p276 = pnand %p274, %p275
    %p277 = pneg %p276
    // Predicated region
    $region37: #{_lambda_.4} parent=5 // pred_check
      _
    $region38: #{_lambda_.4} parent=5 // pred_check_branch
      %279 = sbr.rel (%p276) target = $region40
    $region39: #{_lambda_.4} parent=5 // pred_region
      %s280 = ssub.s32 %s13, 1
      %s281 = smul.u32 16, %s23
      %p282 = scmp.lt.s32.totalorder %s22, 1
      %s283 = scalar_select %p282, %s22, 1
      %p284 = scmp.lt.s32.totalorder %s281, 15
      %s285 = scalar_select %p284, %s281, 15
      %s286 = smul.addr %s285, 3
      %s287 = smul.addr %s283, 48
      %s288 = sadd.s32 %s286, %s287
      %s289 = smul.addr %s288, 4
      %s290 = scalar_lea.vmem %s0, %s289
      %p291 = pneg %p53
      %p292 = pneg %p50
      %s293 = smul.u32 16, %s23
      %p294 = scmp.lt.s32.totalorder %s22, 1
      %s295 = scalar_select %p294, %s22, 1
      %p296 = scmp.lt.s32.totalorder %s293, 15
      %s297 = scalar_select %p296, %s293, 15
      %s298 = smul.addr %s297, 3
      %s299 = smul.addr %s295, 48
      %s300 = sadd.s32 %s298, %s299
      %s301 = smul.addr %s300, 4
      %s302 = scalar_lea.vmem %s1, %s301
      %p303 = pneg %p81
      %p304 = pneg %p78
      %s305 = smul.u32 16, %s23
      %p306 = scmp.lt.s32.totalorder %s22, 1
      %s307 = scalar_select %p306, %s22, 1
      %p308 = scmp.lt.s32.totalorder %s305, 15
      %s309 = scalar_select %p308, %s305, 15
      %s310 = smul.addr %s309, 3
      %s311 = smul.addr %s307, 48
      %s312 = sadd.s32 %s310, %s311
      %s313 = smul.addr %s312, 4
      %s314 = scalar_lea.vmem %s2, %s313
      %p315 = pneg %p109
      %p316 = pneg %p106
      %p317 = pneg %p130
      %p318 = pneg %p127
      %p319 = pneg %p151
      %p320 = pneg %p148
      %p321 = pneg %p179
      %p322 = pneg %p176
      %s323 = smul.u32 16, %s23
      %p324 = scmp.lt.s32.totalorder %s22, 1
      %s325 = scalar_select %p324, %s22, 1
      %p326 = scmp.lt.s32.totalorder %s323, 15
      %s327 = scalar_select %p326, %s323, 15
      %s328 = smul.addr %s327, 2
      %s329 = smul.addr %s325, 32
      %s330 = sadd.s32 %s328, %s329
      %s331 = smul.addr %s330, 8
      %s332 = scalar_lea.vmem %s5, %s331
      %p333 = pneg %p207
      %p334 = pneg %p204
      %p335 = scmp.lt.s32.totalorder %s22, 1
      %s336 = scalar_select %p335, %s22, 1
      %p337 = scmp.lt.s32.totalorder %s23, 0
      %s338 = scalar_select %p337, %s23, 0
      %s339 = sadd.s32 %s338, %s336
      %s340 = smul.addr %s339, 2
      %s341 = scalar_lea.vmem %s6, %s340
      %s342 = smul.u32 16, %s23
      %p343 = scmp.lt.s32.totalorder %s22, 1
      %s344 = scalar_select %p343, %s22, 1
      %p345 = scmp.lt.s32.totalorder %s342, 15
      %s346 = scalar_select %p345, %s342, 15
      %s347 = smul.addr %s346, 3
      %s348 = smul.addr %s344, 48
      %s349 = sadd.s32 %s347, %s348
      %s350 = smul.addr %s349, 4
      %s351 = scalar_lea.vmem %s0, %s350
      %s352 = smul.u32 16, %s23
      %s353 = smul.u32 16, %s23
      %p354 = scmp.lt.s32.totalorder %s22, 1
      %s355 = scalar_select %p354, %s22, 1
      %p356 = scmp.lt.s32.totalorder %s353, 15
      %s357 = scalar_select %p356, %s353, 15
      %s358 = smul.addr %s357, 3
      %s359 = smul.addr %s355, 48
      %s360 = sadd.s32 %s358, %s359
      %s361 = smul.addr %s360, 4
      %s362 = scalar_lea.vmem %s1, %s361
      %s363 = smul.u32 16, %s23
      %s364 = smul.u32 16, %s23
      %p365 = scmp.lt.s32.totalorder %s22, 1
      %s366 = scalar_select %p365, %s22, 1
      %p367 = scmp.lt.s32.totalorder %s364, 15
      %s368 = scalar_select %p367, %s364, 15
      %s369 = smul.addr %s368, 3
      %s370 = smul.addr %s366, 48
      %s371 = sadd.s32 %s369, %s370
      %s372 = smul.addr %s371, 4
      %s373 = scalar_lea.vmem %s2, %s372
      %s374 = smul.u32 16, %s23
      %s375 = smul.u32 16, %s23
      %p376 = scmp.lt.s32.totalorder %s22, 1
      %s377 = scalar_select %p376, %s22, 1
      %p378 = scmp.lt.s32.totalorder %s375, 15
      %s379 = scalar_select %p378, %s375, 15
      %s380 = smul.addr %s379, 2
      %s381 = smul.addr %s377, 32
      %s382 = sadd.s32 %s380, %s381
      %s383 = smul.addr %s382, 8
      %s384 = scalar_lea.vmem %s5, %s383
      %s385 = smul.u32 16, %s23
      %p386 = scmp.lt.s32.totalorder %s22, 1
      %s387 = scalar_select %p386, %s22, 1
      %p388 = scmp.lt.s32.totalorder %s23, 0
      %s389 = scalar_select %p388, %s23, 0
      %s390 = sadd.s32 %s389, %s387
      %s391 = smul.addr %s390, 2
      %s392 = scalar_lea.vmem %s6, %s391
      %v394 = vld [vmem:[%s351] sm:$0xf]
      %v395 = vld [vmem:[%s351 + $0x4] sm:$0xf]
      %v396 = vld [vmem:[%s351 + $0xc] sm:$0xf]
      %v397 = vld [vmem:[%s351 + $0x10] sm:$0xf]
      %v398 = vld [vmem:[%s351 + $0x18] sm:$0xf]
      %v399 = vld [vmem:[%s351 + $0x1c] sm:$0xf]
      %v400 = vld [vmem:[%s351 + $0x24] sm:$0xf]
      %v401 = vld [vmem:[%s351 + $0x28] sm:$0xf]
      %v402 = vld [vmem:[%s351 + $0x30] sm:$0xf]
      %v403 = vld [vmem:[%s351 + $0x34] sm:$0xf]
      %v404 = vld [vmem:[%s351 + $0x3c] sm:$0xf]
      %v405 = vld [vmem:[%s351 + $0x40] sm:$0xf]
      %v406 = vld [vmem:[%s351 + $0x48] sm:$0xf]
      %v407 = vld [vmem:[%s351 + $0x4c] sm:$0xf]
      %v408 = vld [vmem:[%s351 + $0x54] sm:$0xf]
      %v409 = vld [vmem:[%s351 + $0x58] sm:$0xf]
      %v410 = vld [vmem:[%s351 + $0x60] sm:$0xf]
      %v411 = vld [vmem:[%s351 + $0x64] sm:$0xf]
      %v412 = vld [vmem:[%s351 + $0x6c] sm:$0xf]
      %v413 = vld [vmem:[%s351 + $0x70] sm:$0xf]
      %v414 = vld [vmem:[%s351 + $0x78] sm:$0xf]
      %v415 = vld [vmem:[%s351 + $0x7c] sm:$0xf]
      %v416 = vld [vmem:[%s351 + $0x84] sm:$0xf]
      %v417 = vld [vmem:[%s351 + $0x88] sm:$0xf]
      %v418 = vld [vmem:[%s351 + $0x90] sm:$0xf]
      %v419 = vld [vmem:[%s351 + $0x94] sm:$0xf]
      %v420 = vld [vmem:[%s351 + $0x9c] sm:$0xf]
      %v421 = vld [vmem:[%s351 + $0xa0] sm:$0xf]
      %v422 = vld [vmem:[%s351 + $0xa8] sm:$0xf]
      %v423 = vld [vmem:[%s351 + $0xac] sm:$0xf]
      %v424 = vld [vmem:[%s351 + $0xb4] sm:$0xf]
      %v425 = vld [vmem:[%s351 + $0xb8] sm:$0xf]
      %v426 = vld [vmem:[%s3] sm:$0x3]
      %v427 = vld [vmem:[%s351 + $0x8] sm:$0x1]
      %v428 = vld [vmem:[%s351 + $0x14] sm:$0x1]
      %v429 = vld [vmem:[%s351 + $0x20] sm:$0x1]
      %v430 = vld [vmem:[%s351 + $0x2c] sm:$0x1]
      %v431 = vld [vmem:[%s351 + $0x38] sm:$0x1]
      %v432 = vld [vmem:[%s351 + $0x44] sm:$0x1]
      %v433 = vld [vmem:[%s351 + $0x50] sm:$0x1]
      %v434 = vld [vmem:[%s351 + $0x5c] sm:$0x1]
      %v435 = vld [vmem:[%s351 + $0x68] sm:$0x1]
      %v436 = vld [vmem:[%s351 + $0x74] sm:$0x1]
      %v437 = vld [vmem:[%s351 + $0x80] sm:$0x1]
      %v438 = vld [vmem:[%s351 + $0x8c] sm:$0x1]
      %v439 = vld [vmem:[%s351 + $0x98] sm:$0x1]
      %v440 = vld [vmem:[%s351 + $0xa4] sm:$0x1]
      %v441 = vld [vmem:[%s351 + $0xb0] sm:$0x1]
      %v442 = vld [vmem:[%s351 + $0xbc] sm:$0x1]
      %vm443 = vsmask.f32 3328
      %vm444 = vsmask.f32 7440
      %vm445 = vmor %vm443, %vm444
      %v447 = vshrl.u32 %v394, 16
      %v449 = vrot.slane %v447, 4
      %v450 = vshll.u32 %v394, 16
      %v452 = vrot.slane %v450, 5
      %v453 = vor.u32 %v449, %v452
      %v454 = vrot.slane %v453, 4
      %v456 = vshll.u32 %v395, 16
      %v458 = vrot.slane %v456, 5
      %v459 = vsel %vm445, %v454, %v458
      %v460 = vshrl.u32 %v395, 16
      %v462 = vrot.slane %v460, 4
      %v463 = vor.u32 %v462, %v458
      %v464 = vrot.slane %v463, 4
      %v466 = vshll.u32 %v427, 16
      %v468 = vrot.slane %v466, 5
      %v469 = vsel %vm445, %v464, %v468
      %v471 = vshrl.u32 %v396, 16
      %v473 = vrot.slane %v471, 4
      %v474 = vshll.u32 %v396, 16
      %v476 = vrot.slane %v474, 5
      %v477 = vor.u32 %v473, %v476
      %v478 = vrot.slane %v477, 4
      %v480 = vshll.u32 %v397, 16
      %v482 = vrot.slane %v480, 5
      %v483 = vsel %vm445, %v478, %v482
      %v484 = vshrl.u32 %v397, 16
      %v486 = vrot.slane %v484, 4
      %v487 = vor.u32 %v486, %v482
      %v488 = vrot.slane %v487, 4
      %v490 = vshll.u32 %v428, 16
      %v492 = vrot.slane %v490, 5
      %v493 = vsel %vm445, %v488, %v492
      %v495 = vshrl.u32 %v398, 16
      %v497 = vrot.slane %v495, 4
      %v498 = vshll.u32 %v398, 16
      %v500 = vrot.slane %v498, 5
      %v501 = vor.u32 %v497, %v500
      %v502 = vrot.slane %v501, 4
      %v504 = vshll.u32 %v399, 16
      %v506 = vrot.slane %v504, 5
      %v507 = vsel %vm445, %v502, %v506
      %v508 = vshrl.u32 %v399, 16
      %v510 = vrot.slane %v508, 4
      %v511 = vor.u32 %v510, %v506
      %v512 = vrot.slane %v511, 4
      %v514 = vshll.u32 %v429, 16
      %v516 = vrot.slane %v514, 5
      %v517 = vsel %vm445, %v512, %v516
      %v519 = vshrl.u32 %v400, 16
      %v521 = vrot.slane %v519, 4
      %v522 = vshll.u32 %v400, 16
      %v524 = vrot.slane %v522, 5
      %v525 = vor.u32 %v521, %v524
      %v526 = vrot.slane %v525, 4
      %v528 = vshll.u32 %v401, 16
      %v530 = vrot.slane %v528, 5
      %v531 = vsel %vm445, %v526, %v530
      %v532 = vshrl.u32 %v401, 16
      %v534 = vrot.slane %v532, 4
      %v535 = vor.u32 %v534, %v530
      %v536 = vrot.slane %v535, 4
      %v538 = vshll.u32 %v430, 16
      %v540 = vrot.slane %v538, 5
      %v541 = vsel %vm445, %v536, %v540
      %v543 = vshrl.u32 %v402, 16
      %v545 = vrot.slane %v543, 4
      %v546 = vshll.u32 %v402, 16
      %v548 = vrot.slane %v546, 5
      %v549 = vor.u32 %v545, %v548
      %v550 = vrot.slane %v549, 4
      %v552 = vshll.u32 %v403, 16
      %v554 = vrot.slane %v552, 5
      %v555 = vsel %vm445, %v550, %v554
      %v556 = vshrl.u32 %v403, 16
      %v558 = vrot.slane %v556, 4
      %v559 = vor.u32 %v558, %v554
      %v560 = vrot.slane %v559, 4
      %v562 = vshll.u32 %v431, 16
      %v564 = vrot.slane %v562, 5
      %v565 = vsel %vm445, %v560, %v564
      %v567 = vshrl.u32 %v404, 16
      %v569 = vrot.slane %v567, 4
      %v570 = vshll.u32 %v404, 16
      %v572 = vrot.slane %v570, 5
      %v573 = vor.u32 %v569, %v572
      %v574 = vrot.slane %v573, 4
      %v576 = vshll.u32 %v405, 16
      %v578 = vrot.slane %v576, 5
      %v579 = vsel %vm445, %v574, %v578
      %v580 = vshrl.u32 %v405, 16
      %v582 = vrot.slane %v580, 4
      %v583 = vor.u32 %v582, %v578
      %v584 = vrot.slane %v583, 4
      %v586 = vshll.u32 %v432, 16
      %v588 = vrot.slane %v586, 5
      %v589 = vsel %vm445, %v584, %v588
      %v591 = vshrl.u32 %v406, 16
      %v593 = vrot.slane %v591, 4
      %v594 = vshll.u32 %v406, 16
      %v596 = vrot.slane %v594, 5
      %v597 = vor.u32 %v593, %v596
      %v598 = vrot.slane %v597, 4
      %v600 = vshll.u32 %v407, 16
      %v602 = vrot.slane %v600, 5
      %v603 = vsel %vm445, %v598, %v602
      %v604 = vshrl.u32 %v407, 16
      %v606 = vrot.slane %v604, 4
      %v607 = vor.u32 %v606, %v602
      %v608 = vrot.slane %v607, 4
      %v610 = vshll.u32 %v433, 16
      %v612 = vrot.slane %v610, 5
      %v613 = vsel %vm445, %v608, %v612
      %v615 = vshrl.u32 %v408, 16
      %v617 = vrot.slane %v615, 4
      %v618 = vshll.u32 %v408, 16
      %v620 = vrot.slane %v618, 5
      %v621 = vor.u32 %v617, %v620
      %v622 = vrot.slane %v621, 4
      %v624 = vshll.u32 %v409, 16
      %v626 = vrot.slane %v624, 5
      %v627 = vsel %vm445, %v622, %v626
      %v628 = vshrl.u32 %v409, 16
      %v630 = vrot.slane %v628, 4
      %v631 = vor.u32 %v630, %v626
      %v632 = vrot.slane %v631, 4
      %v634 = vshll.u32 %v434, 16
      %v636 = vrot.slane %v634, 5
      %v637 = vsel %vm445, %v632, %v636
      %v639 = vshrl.u32 %v410, 16
      %v641 = vrot.slane %v639, 4
      %v642 = vshll.u32 %v410, 16
      %v644 = vrot.slane %v642, 5
      %v645 = vor.u32 %v641, %v644
      %v646 = vrot.slane %v645, 4
      %v648 = vshll.u32 %v411, 16
      %v650 = vrot.slane %v648, 5
      %v651 = vsel %vm445, %v646, %v650
      %v652 = vshrl.u32 %v411, 16
      %v654 = vrot.slane %v652, 4
      %v655 = vor.u32 %v654, %v650
      %v656 = vrot.slane %v655, 4
      %v658 = vshll.u32 %v435, 16
      %v660 = vrot.slane %v658, 5
      %v661 = vsel %vm445, %v656, %v660
      %v663 = vshrl.u32 %v412, 16
      %v665 = vrot.slane %v663, 4
      %v666 = vshll.u32 %v412, 16
      %v668 = vrot.slane %v666, 5
      %v669 = vor.u32 %v665, %v668
      %v670 = vrot.slane %v669, 4
      %v672 = vshll.u32 %v413, 16
      %v674 = vrot.slane %v672, 5
      %v675 = vsel %vm445, %v670, %v674
      %v676 = vshrl.u32 %v413, 16
      %v678 = vrot.slane %v676, 4
      %v679 = vor.u32 %v678, %v674
      %v680 = vrot.slane %v679, 4
      %v682 = vshll.u32 %v436, 16
      %v684 = vrot.slane %v682, 5
      %v685 = vsel %vm445, %v680, %v684
      %v687 = vshrl.u32 %v414, 16
      %v689 = vrot.slane %v687, 4
      %v690 = vshll.u32 %v414, 16
      %v692 = vrot.slane %v690, 5
      %v693 = vor.u32 %v689, %v692
      %v694 = vrot.slane %v693, 4
      %v696 = vshll.u32 %v415, 16
      %v698 = vrot.slane %v696, 5
      %v699 = vsel %vm445, %v694, %v698
      %v700 = vshrl.u32 %v415, 16
      %v702 = vrot.slane %v700, 4
      %v703 = vor.u32 %v702, %v698
      %v704 = vrot.slane %v703, 4
      %v706 = vshll.u32 %v437, 16
      %v708 = vrot.slane %v706, 5
      %v709 = vsel %vm445, %v704, %v708
      %v711 = vshrl.u32 %v416, 16
      %v713 = vrot.slane %v711, 4
      %v714 = vshll.u32 %v416, 16
      %v716 = vrot.slane %v714, 5
      %v717 = vor.u32 %v713, %v716
      %v718 = vrot.slane %v717, 4
      %v720 = vshll.u32 %v417, 16
      %v722 = vrot.slane %v720, 5
      %v723 = vsel %vm445, %v718, %v722
      %v724 = vshrl.u32 %v417, 16
      %v726 = vrot.slane %v724, 4
      %v727 = vor.u32 %v726, %v722
      %v728 = vrot.slane %v727, 4
      %v730 = vshll.u32 %v438, 16
      %v732 = vrot.slane %v730, 5
      %v733 = vsel %vm445, %v728, %v732
      %v735 = vshrl.u32 %v418, 16
      %v737 = vrot.slane %v735, 4
      %v738 = vshll.u32 %v418, 16
      %v740 = vrot.slane %v738, 5
      %v741 = vor.u32 %v737, %v740
      %v742 = vrot.slane %v741, 4
      %v744 = vshll.u32 %v419, 16
      %v746 = vrot.slane %v744, 5
      %v747 = vsel %vm445, %v742, %v746
      %v748 = vshrl.u32 %v419, 16
      %v750 = vrot.slane %v748, 4
      %v751 = vor.u32 %v750, %v746
      %v752 = vrot.slane %v751, 4
      %v754 = vshll.u32 %v439, 16
      %v756 = vrot.slane %v754, 5
      %v757 = vsel %vm445, %v752, %v756
      %v759 = vshrl.u32 %v420, 16
      %v761 = vrot.slane %v759, 4
      %v762 = vshll.u32 %v420, 16
      %v764 = vrot.slane %v762, 5
      %v765 = vor.u32 %v761, %v764
      %v766 = vrot.slane %v765, 4
      %v768 = vshll.u32 %v421, 16
      %v770 = vrot.slane %v768, 5
      %v771 = vsel %vm445, %v766, %v770
      %v772 = vshrl.u32 %v421, 16
      %v774 = vrot.slane %v772, 4
      %v775 = vor.u32 %v774, %v770
      %v776 = vrot.slane %v775, 4
      %v778 = vshll.u32 %v440, 16
      %v780 = vrot.slane %v778, 5
      %v781 = vsel %vm445, %v776, %v780
      %v783 = vshrl.u32 %v422, 16
      %v785 = vrot.slane %v783, 4
      %v786 = vshll.u32 %v422, 16
      %v788 = vrot.slane %v786, 5
      %v789 = vor.u32 %v785, %v788
      %v790 = vrot.slane %v789, 4
      %v792 = vshll.u32 %v423, 16
      %v794 = vrot.slane %v792, 5
      %v795 = vsel %vm445, %v790, %v794
      %v796 = vshrl.u32 %v423, 16
      %v798 = vrot.slane %v796, 4
      %v799 = vor.u32 %v798, %v794
      %v800 = vrot.slane %v799, 4
      %v802 = vshll.u32 %v441, 16
      %v804 = vrot.slane %v802, 5
      %v805 = vsel %vm445, %v800, %v804
      %v807 = vshrl.u32 %v424, 16
      %v809 = vrot.slane %v807, 4
      %v810 = vshll.u32 %v424, 16
      %v812 = vrot.slane %v810, 5
      %v813 = vor.u32 %v809, %v812
      %v814 = vrot.slane %v813, 4
      %v816 = vshll.u32 %v425, 16
      %v818 = vrot.slane %v816, 5
      %v819 = vsel %vm445, %v814, %v818
      %v820 = vshrl.u32 %v425, 16
      %v822 = vrot.slane %v820, 4
      %v823 = vor.u32 %v822, %v818
      %v824 = vrot.slane %v823, 4
      %v826 = vshll.u32 %v442, 16
      %v828 = vrot.slane %v826, 5
      %v829 = vsel %vm445, %v824, %v828
      %s830 = scalar_lea.vmem %s3, 2
      %v831 = vld [vmem:[%s830] sm:$0x3]
      %v832 = vunpack.c.l.b16 %v459
      %v833 = vunpack.c.l.b16 %v469
      %v834 = vunpack.c.l.b16 %v483
      %v835 = vunpack.c.l.b16 %v493
      %v836 = vunpack.c.l.b16 %v507
      %v837 = vunpack.c.l.b16 %v517
      %v838 = vunpack.c.l.b16 %v531
      %v839 = vunpack.c.l.b16 %v541
      %v840 = vunpack.c.l.b16 %v555
      %v841 = vunpack.c.l.b16 %v565
      %v842 = vunpack.c.l.b16 %v579
      %v843 = vunpack.c.l.b16 %v589
      %v844 = vunpack.c.l.b16 %v603
      %v845 = vunpack.c.l.b16 %v613
      %v846 = vunpack.c.l.b16 %v627
      %v847 = vunpack.c.l.b16 %v637
      %v848 = vunpack.c.l.b16 %v651
      %v849 = vunpack.c.l.b16 %v661
      %v850 = vunpack.c.l.b16 %v675
      %v851 = vunpack.c.l.b16 %v685
      %v852 = vunpack.c.l.b16 %v699
      %v853 = vunpack.c.l.b16 %v709
      %v854 = vunpack.c.l.b16 %v723
      %v855 = vunpack.c.l.b16 %v733
      %v856 = vunpack.c.l.b16 %v747
      %v857 = vunpack.c.l.b16 %v757
      %v858 = vunpack.c.l.b16 %v771
      %v859 = vunpack.c.l.b16 %v781
      %v860 = vunpack.c.l.b16 %v795
      %v861 = vunpack.c.l.b16 %v805
      %v862 = vunpack.c.l.b16 %v819
      %v863 = vunpack.c.l.b16 %v829
      %v864 = vpack.c.b16 %v833, %v832
      %v865 = vpack.c.b16 %v835, %v834
      %v866 = vpack.c.b16 %v837, %v836
      %v867 = vpack.c.b16 %v839, %v838
      %v868 = vpack.c.b16 %v841, %v840
      %v869 = vpack.c.b16 %v843, %v842
      %v870 = vpack.c.b16 %v845, %v844
      %v871 = vpack.c.b16 %v847, %v846
      %v872 = vpack.c.b16 %v849, %v848
      %v873 = vpack.c.b16 %v851, %v850
      %v874 = vpack.c.b16 %v853, %v852
      %v875 = vpack.c.b16 %v855, %v854
      %v876 = vpack.c.b16 %v857, %v856
      %v877 = vpack.c.b16 %v859, %v858
      %v878 = vpack.c.b16 %v861, %v860
      %v879 = vpack.c.b16 %v863, %v862
      %vm880 = vcmask 31744
      %v882 = vsel %vm880, %v864, 0
      %v885 = vsel %vm880, %v865, 0
      %v888 = vsel %vm880, %v866, 0
      %v891 = vsel %vm880, %v867, 0
      %v894 = vsel %vm880, %v868, 0
      %v897 = vsel %vm880, %v869, 0
      %v900 = vsel %vm880, %v870, 0
      %v903 = vsel %vm880, %v871, 0
      %v906 = vsel %vm880, %v872, 0
      %v909 = vsel %vm880, %v873, 0
      %v912 = vsel %vm880, %v874, 0
      %v915 = vsel %vm880, %v875, 0
      %v918 = vsel %vm880, %v876, 0
      %v921 = vsel %vm880, %v877, 0
      %v924 = vsel %vm880, %v878, 0
      %v927 = vsel %vm880, %v879, 0
      %vm929 = vcmask 1041408
      %v931 = vsel %vm929, %v831, 0
      %933 = vmatprep.subr.bf16.mxu0 0
      %934 = vmatpush1.bf16.msra.mxu0 %v931
      %935 = vmatprep.subr.bf16.mxu0 0
      %936 = vmatpush1.bf16.msra.mxu0 0
      %937 = vmatprep.subr.bf16.mxu0 0
      %938 = vmatpush1.bf16.msra.mxu0 0
      %939 = vmatprep.subr.bf16.mxu0 0
      %940 = vmatpush1.bf16.msra.mxu0 0
      %941 = vmatprep.subr.bf16.mxu0 0
      %942 = vmatpush1.bf16.msra.mxu0 0
      %943 = vmatprep.subr.bf16.mxu0 0
      %944 = vmatpush1.bf16.msra.mxu0 0
      %945 = vmatprep.subr.bf16.mxu0 0
      %946 = vmatpush1.bf16.msra.mxu0 0
      %947 = vmatprep.subr.bf16.mxu0 0
      %948 = vmatpush1.bf16.msra.mxu0 0
      %949 = vmatprep.subr.bf16.mxu0 0
      %950 = vmatpush1.bf16.msra.mxu0 0
      %951 = vmatprep.subr.bf16.mxu0 0
      %952 = vmatpush1.bf16.msra.mxu0 0
      %953 = vmatprep.subr.bf16.mxu0 0
      %954 = vmatpush1.bf16.msra.mxu0 0
      %955 = vmatprep.subr.bf16.mxu0 0
      %956 = vmatpush1.bf16.msra.mxu0 0
      %957 = vmatprep.subr.bf16.mxu0 0
      %958 = vmatpush1.bf16.msra.mxu0 0
      %959 = vmatprep.subr.bf16.mxu0 0
      %960 = vmatpush1.bf16.msra.mxu0 0
      %961 = vmatprep.subr.bf16.mxu0 0
      %962 = vmatpush1.bf16.msra.mxu0 0
      %963 = vmatprep.subr.bf16.mxu0 0
      %964 = vmatpush1.bf16.msra.mxu0 0
      %965 = vmatprep.mubr.bf16.mxu0 0
      %966 = vmatmul.mubr.bf16.gmra.mrb[0].mxu0 %v882
      %v967 = vpop.f32.mrb[0].mxu0
      %v968 = vadd.f32 0.0, %v967
      %v969 = vpop.f32.mrb[0].mxu0
      %v970 = vpop.f32.mrb[0].mxu0
      %v971 = vadd.f32 0.0, %v970
      %v972 = vpop.f32.mrb[0].mxu0
      %973 = vmatprep.mubr.bf16.mxu0 0
      %974 = vmatmul.mubr.bf16.gmra.mrb[0].mxu0 %v885
      %v975 = vpop.f32.mrb[0].mxu0
      %v976 = vadd.f32 0.0, %v975
      %v977 = vpop.f32.mrb[0].mxu0
      %v978 = vpop.f32.mrb[0].mxu0
      %v979 = vadd.f32 0.0, %v978
      %v980 = vpop.f32.mrb[0].mxu0
      %981 = vmatprep.mubr.bf16.mxu0 0
      %982 = vmatmul.mubr.bf16.gmra.mrb[0].mxu0 %v888
      %v983 = vpop.f32.mrb[0].mxu0
      %v984 = vadd.f32 0.0, %v983
      %v985 = vpop.f32.mrb[0].mxu0
      %v986 = vpop.f32.mrb[0].mxu0
      %v987 = vadd.f32 0.0, %v986
      %v988 = vpop.f32.mrb[0].mxu0
      %989 = vmatprep.mubr.bf16.mxu0 0
      %990 = vmatmul.mubr.bf16.gmra.mrb[0].mxu0 %v891
      %v991 = vpop.f32.mrb[0].mxu0
      %v992 = vadd.f32 0.0, %v991
      %v993 = vpop.f32.mrb[0].mxu0
      %v994 = vpop.f32.mrb[0].mxu0
      %v995 = vadd.f32 0.0, %v994
      %v996 = vpop.f32.mrb[0].mxu0
      %997 = vmatprep.mubr.bf16.mxu0 0
      %998 = vmatmul.mubr.bf16.gmra.mrb[0].mxu0 %v894
      %v999 = vpop.f32.mrb[0].mxu0
      %v1000 = vadd.f32 0.0, %v999
      %v1001 = vpop.f32.mrb[0].mxu0
      %v1002 = vpop.f32.mrb[0].mxu0
      %v1003 = vadd.f32 0.0, %v1002
      %v1004 = vpop.f32.mrb[0].mxu0
      %1005 = vmatprep.mubr.bf16.mxu0 0
      %1006 = vmatmul.mubr.bf16.gmra.mrb[0].mxu0 %v897
      %v1007 = vpop.f32.mrb[0].mxu0
      %v1008 = vadd.f32 0.0, %v1007
      %v1009 = vpop.f32.mrb[0].mxu0
      %v1010 = vpop.f32.mrb[0].mxu0
      %v1011 = vadd.f32 0.0, %v1010
      %v1012 = vpop.f32.mrb[0].mxu0
      %1013 = vmatprep.mubr.bf16.mxu0 0
      %1014 = vmatmul.mubr.bf16.gmra.mrb[0].mxu0 %v900
      %v1015 = vpop.f32.mrb[0].mxu0
      %v1016 = vadd.f32 0.0, %v1015
      %v1017 = vpop.f32.mrb[0].mxu0
      %v1018 = vpop.f32.mrb[0].mxu0
      %v1019 = vadd.f32 0.0, %v1018
      %v1020 = vpop.f32.mrb[0].mxu0
      %1021 = vmatprep.mubr.bf16.mxu0 0
      %1022 = vmatmul.mubr.bf16.gmra.mrb[0].mxu0 %v903
      %v1023 = vpop.f32.mrb[0].mxu0
      %v1024 = vadd.f32 0.0, %v1023
      %v1025 = vpop.f32.mrb[0].mxu0
      %v1026 = vpop.f32.mrb[0].mxu0
      %v1027 = vadd.f32 0.0, %v1026
      %v1028 = vpop.f32.mrb[0].mxu0
      %1029 = vmatprep.mubr.bf16.mxu0 0
      %1030 = vmatmul.mubr.bf16.gmra.mrb[0].mxu0 %v906
      %v1031 = vpop.f32.mrb[0].mxu0
      %v1032 = vadd.f32 0.0, %v1031
      %v1033 = vpop.f32.mrb[0].mxu0
      %v1034 = vpop.f32.mrb[0].mxu0
      %v1035 = vadd.f32 0.0, %v1034
      %v1036 = vpop.f32.mrb[0].mxu0
      %1037 = vmatprep.mubr.bf16.mxu0 0
      %1038 = vmatmul.mubr.bf16.gmra.mrb[0].mxu0 %v909
      %v1039 = vpop.f32.mrb[0].mxu0
      %v1040 = vadd.f32 0.0, %v1039
      %v1041 = vpop.f32.mrb[0].mxu0
      %v1042 = vpop.f32.mrb[0].mxu0
      %v1043 = vadd.f32 0.0, %v1042
      %v1044 = vpop.f32.mrb[0].mxu0
      %1045 = vmatprep.mubr.bf16.mxu0 0
      %1046 = vmatmul.mubr.bf16.gmra.mrb[0].mxu0 %v912
      %v1047 = vpop.f32.mrb[0].mxu0
      %v1048 = vadd.f32 0.0, %v1047
      %v1049 = vpop.f32.mrb[0].mxu0
      %v1050 = vpop.f32.mrb[0].mxu0
      %v1051 = vadd.f32 0.0, %v1050
      %v1052 = vpop.f32.mrb[0].mxu0
      %1053 = vmatprep.mubr.bf16.mxu0 0
      %1054 = vmatmul.mubr.bf16.gmra.mrb[0].mxu0 %v915
      %v1055 = vpop.f32.mrb[0].mxu0
      %v1056 = vadd.f32 0.0, %v1055
      %v1057 = vpop.f32.mrb[0].mxu0
      %v1058 = vpop.f32.mrb[0].mxu0
      %v1059 = vadd.f32 0.0, %v1058
      %v1060 = vpop.f32.mrb[0].mxu0
      %1061 = vmatprep.mubr.bf16.mxu0 0
      %1062 = vmatmul.mubr.bf16.gmra.mrb[0].mxu0 %v918
      %v1063 = vpop.f32.mrb[0].mxu0
      %v1064 = vadd.f32 0.0, %v1063
      %v1065 = vpop.f32.mrb[0].mxu0
      %v1066 = vpop.f32.mrb[0].mxu0
      %v1067 = vadd.f32 0.0, %v1066
      %v1068 = vpop.f32.mrb[0].mxu0
      %1069 = vmatprep.mubr.bf16.mxu0 0
      %1070 = vmatmul.mubr.bf16.gmra.mrb[0].mxu0 %v921
      %v1071 = vpop.f32.mrb[0].mxu0
      %v1072 = vadd.f32 0.0, %v1071
      %v1073 = vpop.f32.mrb[0].mxu0
      %v1074 = vpop.f32.mrb[0].mxu0
      %v1075 = vadd.f32 0.0, %v1074
      %v1076 = vpop.f32.mrb[0].mxu0
      %1077 = vmatprep.mubr.bf16.mxu0 0
      %1078 = vmatmul.mubr.bf16.gmra.mrb[0].mxu0 %v924
      %v1079 = vpop.f32.mrb[0].mxu0
      %v1080 = vadd.f32 0.0, %v1079
      %v1081 = vpop.f32.mrb[0].mxu0
      %v1082 = vpop.f32.mrb[0].mxu0
      %v1083 = vadd.f32 0.0, %v1082
      %v1084 = vpop.f32.mrb[0].mxu0
      %1085 = vmatprep.mubr.bf16.mxu0 0
      %1086 = vmatmul.mubr.bf16.gmra.mrb[0].mxu0 %v927
      %v1087 = vpop.f32.mrb[0].mxu0
      %v1088 = vadd.f32 0.0, %v1087
      %v1089 = vpop.f32.mrb[0].mxu0
      %v1090 = vpop.f32.mrb[0].mxu0
      %v1091 = vadd.f32 0.0, %v1090
      %v1092 = vpop.f32.mrb[0].mxu0
      %1093 = vdwg.mxu0
      %v1126 = vunpack.c.l.b16 %v394
      %v1127 = vunpack.c.l.b16 %v395
      %v1128 = vunpack.c.l.b16 %v396
      %v1129 = vunpack.c.l.b16 %v397
      %v1130 = vunpack.c.l.b16 %v398
      %v1131 = vunpack.c.l.b16 %v399
      %v1132 = vunpack.c.l.b16 %v400
      %v1133 = vunpack.c.l.b16 %v401
      %v1134 = vunpack.c.l.b16 %v402
      %v1135 = vunpack.c.l.b16 %v403
      %v1136 = vunpack.c.l.b16 %v404
      %v1137 = vunpack.c.l.b16 %v405
      %v1138 = vunpack.c.l.b16 %v406
      %v1139 = vunpack.c.l.b16 %v407
      %v1140 = vunpack.c.l.b16 %v408
      %v1141 = vunpack.c.l.b16 %v409
      %v1142 = vunpack.c.l.b16 %v410
      %v1143 = vunpack.c.l.b16 %v411
      %v1144 = vunpack.c.l.b16 %v412
      %v1145 = vunpack.c.l.b16 %v413
      %v1146 = vunpack.c.l.b16 %v414
      %v1147 = vunpack.c.l.b16 %v415
      %v1148 = vunpack.c.l.b16 %v416
      %v1149 = vunpack.c.l.b16 %v417
      %v1150 = vunpack.c.l.b16 %v418
      %v1151 = vunpack.c.l.b16 %v419
      %v1152 = vunpack.c.l.b16 %v420
      %v1153 = vunpack.c.l.b16 %v421
      %v1154 = vunpack.c.l.b16 %v422
      %v1155 = vunpack.c.l.b16 %v423
      %v1156 = vunpack.c.l.b16 %v424
      %v1157 = vunpack.c.l.b16 %v425
      %v1158 = vpack.c.b16 %v1127, %v1126
      %v1159 = vpack.c.b16 %v1129, %v1128
      %v1160 = vpack.c.b16 %v1131, %v1130
      %v1161 = vpack.c.b16 %v1133, %v1132
      %v1162 = vpack.c.b16 %v1135, %v1134
      %v1163 = vpack.c.b16 %v1137, %v1136
      %v1164 = vpack.c.b16 %v1139, %v1138
      %v1165 = vpack.c.b16 %v1141, %v1140
      %v1166 = vpack.c.b16 %v1143, %v1142
      %v1167 = vpack.c.b16 %v1145, %v1144
      %v1168 = vpack.c.b16 %v1147, %v1146
      %v1169 = vpack.c.b16 %v1149, %v1148
      %v1170 = vpack.c.b16 %v1151, %v1150
      %v1171 = vpack.c.b16 %v1153, %v1152
      %v1172 = vpack.c.b16 %v1155, %v1154
      %v1173 = vpack.c.b16 %v1157, %v1156
      %v1175 = vsel %vm880, %v1158, 0
      %v1178 = vsel %vm880, %v1159, 0
      %v1181 = vsel %vm880, %v1160, 0
      %v1184 = vsel %vm880, %v1161, 0
      %v1187 = vsel %vm880, %v1162, 0
      %v1190 = vsel %vm880, %v1163, 0
      %v1193 = vsel %vm880, %v1164, 0
      %v1196 = vsel %vm880, %v1165, 0
      %v1199 = vsel %vm880, %v1166, 0
      %v1202 = vsel %vm880, %v1167, 0
      %v1205 = vsel %vm880, %v1168, 0
      %v1208 = vsel %vm880, %v1169, 0
      %v1211 = vsel %vm880, %v1170, 0
      %v1214 = vsel %vm880, %v1171, 0
      %v1217 = vsel %vm880, %v1172, 0
      %v1220 = vsel %vm880, %v1173, 0
      %v1223 = vsel %vm929, %v426, 0
      %1225 = vmatprep.subr.bf16.mxu0 0
      %1226 = vmatpush1.bf16.msra.mxu0 %v1223
      %1227 = vmatprep.subr.bf16.mxu0 0
      %1228 = vmatpush1.bf16.msra.mxu0 0
      %1229 = vmatprep.subr.bf16.mxu0 0
      %1230 = vmatpush1.bf16.msra.mxu0 0
      %1231 = vmatprep.subr.bf16.mxu0 0
      %1232 = vmatpush1.bf16.msra.mxu0 0
      %1233 = vmatprep.subr.bf16.mxu0 0
      %1234 = vmatpush1.bf16.msra.mxu0 0
      %1235 = vmatprep.subr.bf16.mxu0 0
      %1236 = vmatpush1.bf16.msra.mxu0 0
      %1237 = vmatprep.subr.bf16.mxu0 0
      %1238 = vmatpush1.bf16.msra.mxu0 0
      %1239 = vmatprep.subr.bf16.mxu0 0
      %1240 = vmatpush1.bf16.msra.mxu0 0
      %1241 = vmatprep.subr.bf16.mxu0 0
      %1242 = vmatpush1.bf16.msra.mxu0 0
      %1243 = vmatprep.subr.bf16.mxu0 0
      %1244 = vmatpush1.bf16.msra.mxu0 0
      %1245 = vmatprep.subr.bf16.mxu0 0
      %1246 = vmatpush1.bf16.msra.mxu0 0
      %1247 = vmatprep.subr.bf16.mxu0 0
      %1248 = vmatpush1.bf16.msra.mxu0 0
      %1249 = vmatprep.subr.bf16.mxu0 0
      %1250 = vmatpush1.bf16.msra.mxu0 0
      %1251 = vmatprep.subr.bf16.mxu0 0
      %1252 = vmatpush1.bf16.msra.mxu0 0
      %1253 = vmatprep.subr.bf16.mxu0 0
      %1254 = vmatpush1.bf16.msra.mxu0 0
      %1255 = vmatprep.subr.bf16.mxu0 0
      %1256 = vmatpush1.bf16.msra.mxu0 0
      %1257 = vmatprep.mubr.bf16.mxu0 0
      %1258 = vmatmul.mubr.bf16.gmra.mrb[0].mxu0 %v1175
      %v1259 = vpop.f32.mrb[0].mxu0
      %v1260 = vadd.f32 %v968, %v1259
      %v1261 = vpop.f32.mrb[0].mxu0
      %v1262 = vpop.f32.mrb[0].mxu0
      %v1263 = vadd.f32 %v971, %v1262
      %v1264 = vpop.f32.mrb[0].mxu0
      %1265 = vmatprep.mubr.bf16.mxu0 0
      %1266 = vmatmul.mubr.bf16.gmra.mrb[0].mxu0 %v1178
      %v1267 = vpop.f32.mrb[0].mxu0
      %v1268 = vadd.f32 %v976, %v1267
      %v1269 = vpop.f32.mrb[0].mxu0
      %v1270 = vpop.f32.mrb[0].mxu0
      %v1271 = vadd.f32 %v979, %v1270
      %v1272 = vpop.f32.mrb[0].mxu0
      %1273 = vmatprep.mubr.bf16.mxu0 0
      %1274 = vmatmul.mubr.bf16.gmra.mrb[0].mxu0 %v1181
      %v1275 = vpop.f32.mrb[0].mxu0
      %v1276 = vadd.f32 %v984, %v1275
      %v1277 = vpop.f32.mrb[0].mxu0
      %v1278 = vpop.f32.mrb[0].mxu0
      %v1279 = vadd.f32 %v987, %v1278
      %v1280 = vpop.f32.mrb[0].mxu0
      %1281 = vmatprep.mubr.bf16.mxu0 0
      %1282 = vmatmul.mubr.bf16.gmra.mrb[0].mxu0 %v1184
      %v1283 = vpop.f32.mrb[0].mxu0
      %v1284 = vadd.f32 %v992, %v1283
      %v1285 = vpop.f32.mrb[0].mxu0
      %v1286 = vpop.f32.mrb[0].mxu0
      %v1287 = vadd.f32 %v995, %v1286
      %v1288 = vpop.f32.mrb[0].mxu0
      %1289 = vmatprep.mubr.bf16.mxu0 0
      %1290 = vmatmul.mubr.bf16.gmra.mrb[0].mxu0 %v1187
      %v1291 = vpop.f32.mrb[0].mxu0
      %v1292 = vadd.f32 %v1000, %v1291
      %v1293 = vpop.f32.mrb[0].mxu0
      %v1294 = vpop.f32.mrb[0].mxu0
      %v1295 = vadd.f32 %v1003, %v1294
      %v1296 = vpop.f32.mrb[0].mxu0
      %1297 = vmatprep.mubr.bf16.mxu0 0
      %1298 = vmatmul.mubr.bf16.gmra.mrb[0].mxu0 %v1190
      %v1299 = vpop.f32.mrb[0].mxu0
      %v1300 = vadd.f32 %v1008, %v1299
      %v1301 = vpop.f32.mrb[0].mxu0
      %v1302 = vpop.f32.mrb[0].mxu0
      %v1303 = vadd.f32 %v1011, %v1302
      %v1304 = vpop.f32.mrb[0].mxu0
      %1305 = vmatprep.mubr.bf16.mxu0 0
      %1306 = vmatmul.mubr.bf16.gmra.mrb[0].mxu0 %v1193
      %v1307 = vpop.f32.mrb[0].mxu0
      %v1308 = vadd.f32 %v1016, %v1307
      %v1309 = vpop.f32.mrb[0].mxu0
      %v1310 = vpop.f32.mrb[0].mxu0
      %v1311 = vadd.f32 %v1019, %v1310
      %v1312 = vpop.f32.mrb[0].mxu0
      %1313 = vmatprep.mubr.bf16.mxu0 0
      %1314 = vmatmul.mubr.bf16.gmra.mrb[0].mxu0 %v1196
      %v1315 = vpop.f32.mrb[0].mxu0
      %v1316 = vadd.f32 %v1024, %v1315
      %v1317 = vpop.f32.mrb[0].mxu0
      %v1318 = vpop.f32.mrb[0].mxu0
      %v1319 = vadd.f32 %v1027, %v1318
      %v1320 = vpop.f32.mrb[0].mxu0
      %1321 = vmatprep.mubr.bf16.mxu0 0
      %1322 = vmatmul.mubr.bf16.gmra.mrb[0].mxu0 %v1199
      %v1323 = vpop.f32.mrb[0].mxu0
      %v1324 = vadd.f32 %v1032, %v1323
      %v1325 = vpop.f32.mrb[0].mxu0
      %v1326 = vpop.f32.mrb[0].mxu0
      %v1327 = vadd.f32 %v1035, %v1326
      %v1328 = vpop.f32.mrb[0].mxu0
      %1329 = vmatprep.mubr.bf16.mxu0 0
      %1330 = vmatmul.mubr.bf16.gmra.mrb[0].mxu0 %v1202
      %v1331 = vpop.f32.mrb[0].mxu0
      %v1332 = vadd.f32 %v1040, %v1331
      %v1333 = vpop.f32.mrb[0].mxu0
      %v1334 = vpop.f32.mrb[0].mxu0
      %v1335 = vadd.f32 %v1043, %v1334
      %v1336 = vpop.f32.mrb[0].mxu0
      %1337 = vmatprep.mubr.bf16.mxu0 0
      %1338 = vmatmul.mubr.bf16.gmra.mrb[0].mxu0 %v1205
      %v1339 = vpop.f32.mrb[0].mxu0
      %v1340 = vadd.f32 %v1048, %v1339
      %v1341 = vpop.f32.mrb[0].mxu0
      %v1342 = vpop.f32.mrb[0].mxu0
      %v1343 = vadd.f32 %v1051, %v1342
      %v1344 = vpop.f32.mrb[0].mxu0
      %1345 = vmatprep.mubr.bf16.mxu0 0
      %1346 = vmatmul.mubr.bf16.gmra.mrb[0].mxu0 %v1208
      %v1347 = vpop.f32.mrb[0].mxu0
      %v1348 = vadd.f32 %v1056, %v1347
      %v1349 = vpop.f32.mrb[0].mxu0
      %v1350 = vpop.f32.mrb[0].mxu0
      %v1351 = vadd.f32 %v1059, %v1350
      %v1352 = vpop.f32.mrb[0].mxu0
      %1353 = vmatprep.mubr.bf16.mxu0 0
      %1354 = vmatmul.mubr.bf16.gmra.mrb[0].mxu0 %v1211
      %v1355 = vpop.f32.mrb[0].mxu0
      %v1356 = vadd.f32 %v1064, %v1355
      %v1357 = vpop.f32.mrb[0].mxu0
      %v1358 = vpop.f32.mrb[0].mxu0
      %v1359 = vadd.f32 %v1067, %v1358
      %v1360 = vpop.f32.mrb[0].mxu0
      %1361 = vmatprep.mubr.bf16.mxu0 0
      %1362 = vmatmul.mubr.bf16.gmra.mrb[0].mxu0 %v1214
      %v1363 = vpop.f32.mrb[0].mxu0
      %v1364 = vadd.f32 %v1072, %v1363
      %v1365 = vpop.f32.mrb[0].mxu0
      %v1366 = vpop.f32.mrb[0].mxu0
      %v1367 = vadd.f32 %v1075, %v1366
      %v1368 = vpop.f32.mrb[0].mxu0
      %1369 = vmatprep.mubr.bf16.mxu0 0
      %1370 = vmatmul.mubr.bf16.gmra.mrb[0].mxu0 %v1217
      %v1371 = vpop.f32.mrb[0].mxu0
      %v1372 = vadd.f32 %v1080, %v1371
      %v1373 = vpop.f32.mrb[0].mxu0
      %v1374 = vpop.f32.mrb[0].mxu0
      %v1375 = vadd.f32 %v1083, %v1374
      %v1376 = vpop.f32.mrb[0].mxu0
      %1377 = vmatprep.mubr.bf16.mxu0 0
      %1378 = vmatmul.mubr.bf16.gmra.mrb[0].mxu0 %v1220
      %v1379 = vpop.f32.mrb[0].mxu0
      %v1380 = vadd.f32 %v1088, %v1379
      %v1381 = vpop.f32.mrb[0].mxu0
      %v1382 = vpop.f32.mrb[0].mxu0
      %v1383 = vadd.f32 %v1091, %v1382
      %v1384 = vpop.f32.mrb[0].mxu0
      %1385 = vdwg.mxu0
      %v1386 = vld [vmem:[%s351] sm:$0xe]
      %v1387 = vld [vmem:[%s351 + $0xc] sm:$0xe]
      %v1388 = vld [vmem:[%s351 + $0x18] sm:$0xe]
      %v1389 = vld [vmem:[%s351 + $0x24] sm:$0xe]
      %v1390 = vld [vmem:[%s351 + $0x30] sm:$0xe]
      %v1391 = vld [vmem:[%s351 + $0x3c] sm:$0xe]
      %v1392 = vld [vmem:[%s351 + $0x48] sm:$0xe]
      %v1393 = vld [vmem:[%s351 + $0x54] sm:$0xe]
      %v1394 = vld [vmem:[%s351 + $0x60] sm:$0xe]
      %v1395 = vld [vmem:[%s351 + $0x6c] sm:$0xe]
      %v1396 = vld [vmem:[%s351 + $0x78] sm:$0xe]
      %v1397 = vld [vmem:[%s351 + $0x84] sm:$0xe]
      %v1398 = vld [vmem:[%s351 + $0x90] sm:$0xe]
      %v1399 = vld [vmem:[%s351 + $0x9c] sm:$0xe]
      %v1400 = vld [vmem:[%s351 + $0xa8] sm:$0xe]
      %v1401 = vld [vmem:[%s351 + $0xb4] sm:$0xe]
      %vm1434 = vcmask 1042432
      %vm1435 = vcmask 1046532
      %vm1436 = vmor %vm1434, %vm1435
      %v1437 = vrot.slane %v1386, 5
      %v1438 = vrot.slane %v1437, 4
      %v1439 = vrot.slane %v395, 5
      %v1440 = vsel %vm1436, %v1438, %v1439
      %v1441 = vrot.slane %v1439, 4
      %v1442 = vrot.slane %v427, 5
      %v1443 = vsel %vm1436, %v1441, %v1442
      %v1444 = vrot.slane %v1387, 5
      %v1445 = vrot.slane %v1444, 4
      %v1446 = vrot.slane %v397, 5
      %v1447 = vsel %vm1436, %v1445, %v1446
      %v1448 = vrot.slane %v1446, 4
      %v1449 = vrot.slane %v428, 5
      %v1450 = vsel %vm1436, %v1448, %v1449
      %v1451 = vrot.slane %v1388, 5
      %v1452 = vrot.slane %v1451, 4
      %v1453 = vrot.slane %v399, 5
      %v1454 = vsel %vm1436, %v1452, %v1453
      %v1455 = vrot.slane %v1453, 4
      %v1456 = vrot.slane %v429, 5
      %v1457 = vsel %vm1436, %v1455, %v1456
      %v1458 = vrot.slane %v1389, 5
      %v1459 = vrot.slane %v1458, 4
      %v1460 = vrot.slane %v401, 5
      %v1461 = vsel %vm1436, %v1459, %v1460
      %v1462 = vrot.slane %v1460, 4
      %v1463 = vrot.slane %v430, 5
      %v1464 = vsel %vm1436, %v1462, %v1463
      %v1465 = vrot.slane %v1390, 5
      %v1466 = vrot.slane %v1465, 4
      %v1467 = vrot.slane %v403, 5
      %v1468 = vsel %vm1436, %v1466, %v1467
      %v1469 = vrot.slane %v1467, 4
      %v1470 = vrot.slane %v431, 5
      %v1471 = vsel %vm1436, %v1469, %v1470
      %v1472 = vrot.slane %v1391, 5
      %v1473 = vrot.slane %v1472, 4
      %v1474 = vrot.slane %v405, 5
      %v1475 = vsel %vm1436, %v1473, %v1474
      %v1476 = vrot.slane %v1474, 4
      %v1477 = vrot.slane %v432, 5
      %v1478 = vsel %vm1436, %v1476, %v1477
      %v1479 = vrot.slane %v1392, 5
      %v1480 = vrot.slane %v1479, 4
      %v1481 = vrot.slane %v407, 5
      %v1482 = vsel %vm1436, %v1480, %v1481
      %v1483 = vrot.slane %v1481, 4
      %v1484 = vrot.slane %v433, 5
      %v1485 = vsel %vm1436, %v1483, %v1484
      %v1486 = vrot.slane %v1393, 5
      %v1487 = vrot.slane %v1486, 4
      %v1488 = vrot.slane %v409, 5
      %v1489 = vsel %vm1436, %v1487, %v1488
      %v1490 = vrot.slane %v1488, 4
      %v1491 = vrot.slane %v434, 5
      %v1492 = vsel %vm1436, %v1490, %v1491
      %v1493 = vrot.slane %v1394, 5
      %v1494 = vrot.slane %v1493, 4
      %v1495 = vrot.slane %v411, 5
      %v1496 = vsel %vm1436, %v1494, %v1495
      %v1497 = vrot.slane %v1495, 4
      %v1498 = vrot.slane %v435, 5
      %v1499 = vsel %vm1436, %v1497, %v1498
      %v1500 = vrot.slane %v1395, 5
      %v1501 = vrot.slane %v1500, 4
      %v1502 = vrot.slane %v413, 5
      %v1503 = vsel %vm1436, %v1501, %v1502
      %v1504 = vrot.slane %v1502, 4
      %v1505 = vrot.slane %v436, 5
      %v1506 = vsel %vm1436, %v1504, %v1505
      %v1507 = vrot.slane %v1396, 5
      %v1508 = vrot.slane %v1507, 4
      %v1509 = vrot.slane %v415, 5
      %v1510 = vsel %vm1436, %v1508, %v1509
      %v1511 = vrot.slane %v1509, 4
      %v1512 = vrot.slane %v437, 5
      %v1513 = vsel %vm1436, %v1511, %v1512
      %v1514 = vrot.slane %v1397, 5
      %v1515 = vrot.slane %v1514, 4
      %v1516 = vrot.slane %v417, 5
      %v1517 = vsel %vm1436, %v1515, %v1516
      %v1518 = vrot.slane %v1516, 4
      %v1519 = vrot.slane %v438, 5
      %v1520 = vsel %vm1436, %v1518, %v1519
      %v1521 = vrot.slane %v1398, 5
      %v1522 = vrot.slane %v1521, 4
      %v1523 = vrot.slane %v419, 5
      %v1524 = vsel %vm1436, %v1522, %v1523
      %v1525 = vrot.slane %v1523, 4
      %v1526 = vrot.slane %v439, 5
      %v1527 = vsel %vm1436, %v1525, %v1526
      %v1528 = vrot.slane %v1399, 5
      %v1529 = vrot.slane %v1528, 4
      %v1530 = vrot.slane %v421, 5
      %v1531 = vsel %vm1436, %v1529, %v1530
      %v1532 = vrot.slane %v1530, 4
      %v1533 = vrot.slane %v440, 5
      %v1534 = vsel %vm1436, %v1532, %v1533
      %v1535 = vrot.slane %v1400, 5
      %v1536 = vrot.slane %v1535, 4
      %v1537 = vrot.slane %v423, 5
      %v1538 = vsel %vm1436, %v1536, %v1537
      %v1539 = vrot.slane %v1537, 4
      %v1540 = vrot.slane %v441, 5
      %v1541 = vsel %vm1436, %v1539, %v1540
      %v1542 = vrot.slane %v1401, 5
      %v1543 = vrot.slane %v1542, 4
      %v1544 = vrot.slane %v425, 5
      %v1545 = vsel %vm1436, %v1543, %v1544
      %v1546 = vrot.slane %v1544, 4
      %v1547 = vrot.slane %v442, 5
      %v1548 = vsel %vm1436, %v1546, %v1547
      %s1549 = scalar_lea.vmem %s3, 4
      %v1550 = vld [vmem:[%s1549] sm:$0x3]
      %v1551 = vunpack.c.l.b16 %v1440
      %v1552 = vunpack.c.l.b16 %v1443
      %v1553 = vunpack.c.l.b16 %v1447
      %v1554 = vunpack.c.l.b16 %v1450
      %v1555 = vunpack.c.l.b16 %v1454
      %v1556 = vunpack.c.l.b16 %v1457
      %v1557 = vunpack.c.l.b16 %v1461
      %v1558 = vunpack.c.l.b16 %v1464
      %v1559 = vunpack.c.l.b16 %v1468
      %v1560 = vunpack.c.l.b16 %v1471
      %v1561 = vunpack.c.l.b16 %v1475
      %v1562 = vunpack.c.l.b16 %v1478
      %v1563 = vunpack.c.l.b16 %v1482
      %v1564 = vunpack.c.l.b16 %v1485
      %v1565 = vunpack.c.l.b16 %v1489
      %v1566 = vunpack.c.l.b16 %v1492
      %v1567 = vunpack.c.l.b16 %v1496
      %v1568 = vunpack.c.l.b16 %v1499
      %v1569 = vunpack.c.l.b16 %v1503
      %v1570 = vunpack.c.l.b16 %v1506
      %v1571 = vunpack.c.l.b16 %v1510
      %v1572 = vunpack.c.l.b16 %v1513
      %v1573 = vunpack.c.l.b16 %v1517
      %v1574 = vunpack.c.l.b16 %v1520
      %v1575 = vunpack.c.l.b16 %v1524
      %v1576 = vunpack.c.l.b16 %v1527
      %v1577 = vunpack.c.l.b16 %v1531
      %v1578 = vunpack.c.l.b16 %v1534
      %v1579 = vunpack.c.l.b16 %v1538
      %v1580 = vunpack.c.l.b16 %v1541
      %v1581 = vunpack.c.l.b16 %v1545
      %v1582 = vunpack.c.l.b16 %v1548
      %v1583 = vpack.c.b16 %v1552, %v1551
      %v1584 = vpack.c.b16 %v1554, %v1553
      %v1585 = vpack.c.b16 %v1556, %v1555
      %v1586 = vpack.c.b16 %v1558, %v1557
      %v1587 = vpack.c.b16 %v1560, %v1559
      %v1588 = vpack.c.b16 %v1562, %v1561
      %v1589 = vpack.c.b16 %v1564, %v1563
      %v1590 = vpack.c.b16 %v1566, %v1565
      %v1591 = vpack.c.b16 %v1568, %v1567
      %v1592 = vpack.c.b16 %v1570, %v1569
      %v1593 = vpack.c.b16 %v1572, %v1571
      %v1594 = vpack.c.b16 %v1574, %v1573
      %v1595 = vpack.c.b16 %v1576, %v1575
      %v1596 = vpack.c.b16 %v1578, %v1577
      %v1597 = vpack.c.b16 %v1580, %v1579
      %v1598 = vpack.c.b16 %v1582, %v1581
      %v1600 = vsel %vm880, %v1583, 0
      %v1603 = vsel %vm880, %v1584, 0
      %v1606 = vsel %vm880, %v1585, 0
      %v1609 = vsel %vm880, %v1586, 0
      %v1612 = vsel %vm880, %v1587, 0
      %v1615 = vsel %vm880, %v1588, 0
      %v1618 = vsel %vm880, %v1589, 0
      %v1621 = vsel %vm880, %v1590, 0
      %v1624 = vsel %vm880, %v1591, 0
      %v1627 = vsel %vm880, %v1592, 0
      %v1630 = vsel %vm880, %v1593, 0
      %v1633 = vsel %vm880, %v1594, 0
      %v1636 = vsel %vm880, %v1595, 0
      %v1639 = vsel %vm880, %v1596, 0
      %v1642 = vsel %vm880, %v1597, 0
      %v1645 = vsel %vm880, %v1598, 0
      %v1648 = vsel %vm929, %v1550, 0
      %1650 = vmatprep.subr.bf16.mxu0 0
      %1651 = vmatpush1.bf16.msra.mxu0 %v1648
      %1652 = vmatprep.subr.bf16.mxu0 0
      %1653 = vmatpush1.bf16.msra.mxu0 0
      %1654 = vmatprep.subr.bf16.mxu0 0
      %1655 = vmatpush1.bf16.msra.mxu0 0
      %1656 = vmatprep.subr.bf16.mxu0 0
      %1657 = vmatpush1.bf16.msra.mxu0 0
      %1658 = vmatprep.subr.bf16.mxu0 0
      %1659 = vmatpush1.bf16.msra.mxu0 0
      %1660 = vmatprep.subr.bf16.mxu0 0
      %1661 = vmatpush1.bf16.msra.mxu0 0
      %1662 = vmatprep.subr.bf16.mxu0 0
      %1663 = vmatpush1.bf16.msra.mxu0 0
      %1664 = vmatprep.subr.bf16.mxu0 0
      %1665 = vmatpush1.bf16.msra.mxu0 0
      %1666 = vmatprep.subr.bf16.mxu0 0
      %1667 = vmatpush1.bf16.msra.mxu0 0
      %1668 = vmatprep.subr.bf16.mxu0 0
      %1669 = vmatpush1.bf16.msra.mxu0 0
      %1670 = vmatprep.subr.bf16.mxu0 0
      %1671 = vmatpush1.bf16.msra.mxu0 0
      %1672 = vmatprep.subr.bf16.mxu0 0
      %1673 = vmatpush1.bf16.msra.mxu0 0
      %1674 = vmatprep.subr.bf16.mxu0 0
      %1675 = vmatpush1.bf16.msra.mxu0 0
      %1676 = vmatprep.subr.bf16.mxu0 0
      %1677 = vmatpush1.bf16.msra.mxu0 0
      %1678 = vmatprep.subr.bf16.mxu0 0
      %1679 = vmatpush1.bf16.msra.mxu0 0
      %1680 = vmatprep.subr.bf16.mxu0 0
      %1681 = vmatpush1.bf16.msra.mxu0 0
      %1682 = vmatprep.mubr.bf16.mxu0 0
      %1683 = vmatmul.mubr.bf16.gmra.mrb[0].mxu0 %v1600
      %v1684 = vpop.f32.mrb[0].mxu0
      %v1685 = vadd.f32 0.0, %v1684
      %v1686 = vpop.f32.mrb[0].mxu0
      %v1687 = vpop.f32.mrb[0].mxu0
      %v1688 = vadd.f32 0.0, %v1687
      %v1689 = vpop.f32.mrb[0].mxu0
      %1690 = vmatprep.mubr.bf16.mxu0 0
      %1691 = vmatmul.mubr.bf16.gmra.mrb[0].mxu0 %v1603
      %v1692 = vpop.f32.mrb[0].mxu0
      %v1693 = vadd.f32 0.0, %v1692
      %v1694 = vpop.f32.mrb[0].mxu0
      %v1695 = vpop.f32.mrb[0].mxu0
      %v1696 = vadd.f32 0.0, %v1695
      %v1697 = vpop.f32.mrb[0].mxu0
      %1698 = vmatprep.mubr.bf16.mxu0 0
      %1699 = vmatmul.mubr.bf16.gmra.mrb[0].mxu0 %v1606
      %v1700 = vpop.f32.mrb[0].mxu0
      %v1701 = vadd.f32 0.0, %v1700
      %v1702 = vpop.f32.mrb[0].mxu0
      %v1703 = vpop.f32.mrb[0].mxu0
      %v1704 = vadd.f32 0.0, %v1703
      %v1705 = vpop.f32.mrb[0].mxu0
      %1706 = vmatprep.mubr.bf16.mxu0 0
      %1707 = vmatmul.mubr.bf16.gmra.mrb[0].mxu0 %v1609
      %v1708 = vpop.f32.mrb[0].mxu0
      %v1709 = vadd.f32 0.0, %v1708
      %v1710 = vpop.f32.mrb[0].mxu0
      %v1711 = vpop.f32.mrb[0].mxu0
      %v1712 = vadd.f32 0.0, %v1711
      %v1713 = vpop.f32.mrb[0].mxu0
      %1714 = vmatprep.mubr.bf16.mxu0 0
      %1715 = vmatmul.mubr.bf16.gmra.mrb[0].mxu0 %v1612
      %v1716 = vpop.f32.mrb[0].mxu0
      %v1717 = vadd.f32 0.0, %v1716
      %v1718 = vpop.f32.mrb[0].mxu0
      %v1719 = vpop.f32.mrb[0].mxu0
      %v1720 = vadd.f32 0.0, %v1719
      %v1721 = vpop.f32.mrb[0].mxu0
      %1722 = vmatprep.mubr.bf16.mxu0 0
      %1723 = vmatmul.mubr.bf16.gmra.mrb[0].mxu0 %v1615
      %v1724 = vpop.f32.mrb[0].mxu0
      %v1725 = vadd.f32 0.0, %v1724
      %v1726 = vpop.f32.mrb[0].mxu0
      %v1727 = vpop.f32.mrb[0].mxu0
      %v1728 = vadd.f32 0.0, %v1727
      %v1729 = vpop.f32.mrb[0].mxu0
      %1730 = vmatprep.mubr.bf16.mxu0 0
      %1731 = vmatmul.mubr.bf16.gmra.mrb[0].mxu0 %v1618
      %v1732 = vpop.f32.mrb[0].mxu0
      %v1733 = vadd.f32 0.0, %v1732
      %v1734 = vpop.f32.mrb[0].mxu0
      %v1735 = vpop.f32.mrb[0].mxu0
      %v1736 = vadd.f32 0.0, %v1735
      %v1737 = vpop.f32.mrb[0].mxu0
      %1738 = vmatprep.mubr.bf16.mxu0 0
      %1739 = vmatmul.mubr.bf16.gmra.mrb[0].mxu0 %v1621
      %v1740 = vpop.f32.mrb[0].mxu0
      %v1741 = vadd.f32 0.0, %v1740
      %v1742 = vpop.f32.mrb[0].mxu0
      %v1743 = vpop.f32.mrb[0].mxu0
      %v1744 = vadd.f32 0.0, %v1743
      %v1745 = vpop.f32.mrb[0].mxu0
      %1746 = vmatprep.mubr.bf16.mxu0 0
      %1747 = vmatmul.mubr.bf16.gmra.mrb[0].mxu0 %v1624
      %v1748 = vpop.f32.mrb[0].mxu0
      %v1749 = vadd.f32 0.0, %v1748
      %v1750 = vpop.f32.mrb[0].mxu0
      %v1751 = vpop.f32.mrb[0].mxu0
      %v1752 = vadd.f32 0.0, %v1751
      %v1753 = vpop.f32.mrb[0].mxu0
      %1754 = vmatprep.mubr.bf16.mxu0 0
      %1755 = vmatmul.mubr.bf16.gmra.mrb[0].mxu0 %v1627
      %v1756 = vpop.f32.mrb[0].mxu0
      %v1757 = vadd.f32 0.0, %v1756
      %v1758 = vpop.f32.mrb[0].mxu0
      %v1759 = vpop.f32.mrb[0].mxu0
      %v1760 = vadd.f32 0.0, %v1759
      %v1761 = vpop.f32.mrb[0].mxu0
      %1762 = vmatprep.mubr.bf16.mxu0 0
      %1763 = vmatmul.mubr.bf16.gmra.mrb[0].mxu0 %v1630
      %v1764 = vpop.f32.mrb[0].mxu0
      %v1765 = vadd.f32 0.0, %v1764
      %v1766 = vpop.f32.mrb[0].mxu0
      %v1767 = vpop.f32.mrb[0].mxu0
      %v1768 = vadd.f32 0.0, %v1767
      %v1769 = vpop.f32.mrb[0].mxu0
      %1770 = vmatprep.mubr.bf16.mxu0 0
      %1771 = vmatmul.mubr.bf16.gmra.mrb[0].mxu0 %v1633
      %v1772 = vpop.f32.mrb[0].mxu0
      %v1773 = vadd.f32 0.0, %v1772
      %v1774 = vpop.f32.mrb[0].mxu0
      %v1775 = vpop.f32.mrb[0].mxu0
      %v1776 = vadd.f32 0.0, %v1775
      %v1777 = vpop.f32.mrb[0].mxu0
      %1778 = vmatprep.mubr.bf16.mxu0 0
      %1779 = vmatmul.mubr.bf16.gmra.mrb[0].mxu0 %v1636
      %v1780 = vpop.f32.mrb[0].mxu0
      %v1781 = vadd.f32 0.0, %v1780
      %v1782 = vpop.f32.mrb[0].mxu0
      %v1783 = vpop.f32.mrb[0].mxu0
      %v1784 = vadd.f32 0.0, %v1783
      %v1785 = vpop.f32.mrb[0].mxu0
      %1786 = vmatprep.mubr.bf16.mxu0 0
      %1787 = vmatmul.mubr.bf16.gmra.mrb[0].mxu0 %v1639
      %v1788 = vpop.f32.mrb[0].mxu0
      %v1789 = vadd.f32 0.0, %v1788
      %v1790 = vpop.f32.mrb[0].mxu0
      %v1791 = vpop.f32.mrb[0].mxu0
      %v1792 = vadd.f32 0.0, %v1791
      %v1793 = vpop.f32.mrb[0].mxu0
      %1794 = vmatprep.mubr.bf16.mxu0 0
      %1795 = vmatmul.mubr.bf16.gmra.mrb[0].mxu0 %v1642
      %v1796 = vpop.f32.mrb[0].mxu0
      %v1797 = vadd.f32 0.0, %v1796
      %v1798 = vpop.f32.mrb[0].mxu0
      %v1799 = vpop.f32.mrb[0].mxu0
      %v1800 = vadd.f32 0.0, %v1799
      %v1801 = vpop.f32.mrb[0].mxu0
      %1802 = vmatprep.mubr.bf16.mxu0 0
      %1803 = vmatmul.mubr.bf16.gmra.mrb[0].mxu0 %v1645
      %v1804 = vpop.f32.mrb[0].mxu0
      %v1805 = vadd.f32 0.0, %v1804
      %v1806 = vpop.f32.mrb[0].mxu0
      %v1807 = vpop.f32.mrb[0].mxu0
      %v1808 = vadd.f32 0.0, %v1807
      %v1809 = vpop.f32.mrb[0].mxu0
      %1810 = vdwg.mxu0
      %v1811 = vadd.f32 %v1260, %v1685
      %v1812 = vadd.f32 %v1263, %v1688
      %v1813 = vadd.f32 %v1268, %v1693
      %v1814 = vadd.f32 %v1271, %v1696
      %v1815 = vadd.f32 %v1276, %v1701
      %v1816 = vadd.f32 %v1279, %v1704
      %v1817 = vadd.f32 %v1284, %v1709
      %v1818 = vadd.f32 %v1287, %v1712
      %v1819 = vadd.f32 %v1292, %v1717
      %v1820 = vadd.f32 %v1295, %v1720
      %v1821 = vadd.f32 %v1300, %v1725
      %v1822 = vadd.f32 %v1303, %v1728
      %v1823 = vadd.f32 %v1308, %v1733
      %v1824 = vadd.f32 %v1311, %v1736
      %v1825 = vadd.f32 %v1316, %v1741
      %v1826 = vadd.f32 %v1319, %v1744
      %v1827 = vadd.f32 %v1324, %v1749
      %v1828 = vadd.f32 %v1327, %v1752
      %v1829 = vadd.f32 %v1332, %v1757
      %v1830 = vadd.f32 %v1335, %v1760
      %v1831 = vadd.f32 %v1340, %v1765
      %v1832 = vadd.f32 %v1343, %v1768
      %v1833 = vadd.f32 %v1348, %v1773
      %v1834 = vadd.f32 %v1351, %v1776
      %v1835 = vadd.f32 %v1356, %v1781
      %v1836 = vadd.f32 %v1359, %v1784
      %v1837 = vadd.f32 %v1364, %v1789
      %v1838 = vadd.f32 %v1367, %v1792
      %v1839 = vadd.f32 %v1372, %v1797
      %v1840 = vadd.f32 %v1375, %v1800
      %v1841 = vadd.f32 %v1380, %v1805
      %v1842 = vadd.f32 %v1383, %v1808
      %v1843 = vld [vmem:[%s362] sm:$0xf]
      %v1844 = vld [vmem:[%s362 + $0x4] sm:$0xf]
      %v1845 = vld [vmem:[%s362 + $0xc] sm:$0xf]
      %v1846 = vld [vmem:[%s362 + $0x10] sm:$0xf]
      %v1847 = vld [vmem:[%s362 + $0x18] sm:$0xf]
      %v1848 = vld [vmem:[%s362 + $0x1c] sm:$0xf]
      %v1849 = vld [vmem:[%s362 + $0x24] sm:$0xf]
      %v1850 = vld [vmem:[%s362 + $0x28] sm:$0xf]
      %v1851 = vld [vmem:[%s362 + $0x30] sm:$0xf]
      %v1852 = vld [vmem:[%s362 + $0x34] sm:$0xf]
      %v1853 = vld [vmem:[%s362 + $0x3c] sm:$0xf]
      %v1854 = vld [vmem:[%s362 + $0x40] sm:$0xf]
      %v1855 = vld [vmem:[%s362 + $0x48] sm:$0xf]
      %v1856 = vld [vmem:[%s362 + $0x4c] sm:$0xf]
      %v1857 = vld [vmem:[%s362 + $0x54] sm:$0xf]
      %v1858 = vld [vmem:[%s362 + $0x58] sm:$0xf]
      %v1859 = vld [vmem:[%s362 + $0x60] sm:$0xf]
      %v1860 = vld [vmem:[%s362 + $0x64] sm:$0xf]
      %v1861 = vld [vmem:[%s362 + $0x6c] sm:$0xf]
      %v1862 = vld [vmem:[%s362 + $0x70] sm:$0xf]
      %v1863 = vld [vmem:[%s362 + $0x78] sm:$0xf]
      %v1864 = vld [vmem:[%s362 + $0x7c] sm:$0xf]
      %v1865 = vld [vmem:[%s362 + $0x84] sm:$0xf]
      %v1866 = vld [vmem:[%s362 + $0x88] sm:$0xf]
      %v1867 = vld [vmem:[%s362 + $0x90] sm:$0xf]
      %v1868 = vld [vmem:[%s362 + $0x94] sm:$0xf]
      %v1869 = vld [vmem:[%s362 + $0x9c] sm:$0xf]
      %v1870 = vld [vmem:[%s362 + $0xa0] sm:$0xf]
      %v1871 = vld [vmem:[%s362 + $0xa8] sm:$0xf]
      %v1872 = vld [vmem:[%s362 + $0xac] sm:$0xf]
      %v1873 = vld [vmem:[%s362 + $0xb4] sm:$0xf]
      %v1874 = vld [vmem:[%s362 + $0xb8] sm:$0xf]
      %s1875 = scalar_lea.vmem %s3, 6
      %v1876 = vld [vmem:[%s1875] sm:$0x3]
      %v1909 = vunpack.c.l.b16 %v1843
      %v1910 = vunpack.c.l.b16 %v1844
      %v1911 = vunpack.c.l.b16 %v1845
      %v1912 = vunpack.c.l.b16 %v1846
      %v1913 = vunpack.c.l.b16 %v1847
      %v1914 = vunpack.c.l.b16 %v1848
      %v1915 = vunpack.c.l.b16 %v1849
      %v1916 = vunpack.c.l.b16 %v1850
      %v1917 = vunpack.c.l.b16 %v1851
      %v1918 = vunpack.c.l.b16 %v1852
      %v1919 = vunpack.c.l.b16 %v1853
      %v1920 = vunpack.c.l.b16 %v1854
      %v1921 = vunpack.c.l.b16 %v1855
      %v1922 = vunpack.c.l.b16 %v1856
      %v1923 = vunpack.c.l.b16 %v1857
      %v1924 = vunpack.c.l.b16 %v1858
      %v1925 = vunpack.c.l.b16 %v1859
      %v1926 = vunpack.c.l.b16 %v1860
      %v1927 = vunpack.c.l.b16 %v1861
      %v1928 = vunpack.c.l.b16 %v1862
      %v1929 = vunpack.c.l.b16 %v1863
      %v1930 = vunpack.c.l.b16 %v1864
      %v1931 = vunpack.c.l.b16 %v1865
      %v1932 = vunpack.c.l.b16 %v1866
      %v1933 = vunpack.c.l.b16 %v1867
      %v1934 = vunpack.c.l.b16 %v1868
      %v1935 = vunpack.c.l.b16 %v1869
      %v1936 = vunpack.c.l.b16 %v1870
      %v1937 = vunpack.c.l.b16 %v1871
      %v1938 = vunpack.c.l.b16 %v1872
      %v1939 = vunpack.c.l.b16 %v1873
      %v1940 = vunpack.c.l.b16 %v1874
      %v1941 = vpack.c.b16 %v1910, %v1909
      %v1942 = vpack.c.b16 %v1912, %v1911
      %v1943 = vpack.c.b16 %v1914, %v1913
      %v1944 = vpack.c.b16 %v1916, %v1915
      %v1945 = vpack.c.b16 %v1918, %v1917
      %v1946 = vpack.c.b16 %v1920, %v1919
      %v1947 = vpack.c.b16 %v1922, %v1921
      %v1948 = vpack.c.b16 %v1924, %v1923
      %v1949 = vpack.c.b16 %v1926, %v1925
      %v1950 = vpack.c.b16 %v1928, %v1927
      %v1951 = vpack.c.b16 %v1930, %v1929
      %v1952 = vpack.c.b16 %v1932, %v1931
      %v1953 = vpack.c.b16 %v1934, %v1933
      %v1954 = vpack.c.b16 %v1936, %v1935
      %v1955 = vpack.c.b16 %v1938, %v1937
      %v1956 = vpack.c.b16 %v1940, %v1939
      %v1958 = vsel %vm880, %v1941, 0
      %v1961 = vsel %vm880, %v1942, 0
      %v1964 = vsel %vm880, %v1943, 0
      %v1967 = vsel %vm880, %v1944, 0
      %v1970 = vsel %vm880, %v1945, 0
      %v1973 = vsel %vm880, %v1946, 0
      %v1976 = vsel %vm880, %v1947, 0
      %v1979 = vsel %vm880, %v1948, 0
      %v1982 = vsel %vm880, %v1949, 0
      %v1985 = vsel %vm880, %v1950, 0
      %v1988 = vsel %vm880, %v1951, 0
      %v1991 = vsel %vm880, %v1952, 0
      %v1994 = vsel %vm880, %v1953, 0
      %v1997 = vsel %vm880, %v1954, 0
      %v2000 = vsel %vm880, %v1955, 0
      %v2003 = vsel %vm880, %v1956, 0
      %v2006 = vsel %vm929, %v1876, 0
      %2008 = vmatprep.subr.bf16.mxu0 0
      %2009 = vmatpush1.bf16.msra.mxu0 %v2006
      %2010 = vmatprep.subr.bf16.mxu0 0
      %2011 = vmatpush1.bf16.msra.mxu0 0
      %2012 = vmatprep.subr.bf16.mxu0 0
      %2013 = vmatpush1.bf16.msra.mxu0 0
      %2014 = vmatprep.subr.bf16.mxu0 0
      %2015 = vmatpush1.bf16.msra.mxu0 0
      %2016 = vmatprep.subr.bf16.mxu0 0
      %2017 = vmatpush1.bf16.msra.mxu0 0
      %2018 = vmatprep.subr.bf16.mxu0 0
      %2019 = vmatpush1.bf16.msra.mxu0 0
      %2020 = vmatprep.subr.bf16.mxu0 0
      %2021 = vmatpush1.bf16.msra.mxu0 0
      %2022 = vmatprep.subr.bf16.mxu0 0
      %2023 = vmatpush1.bf16.msra.mxu0 0
      %2024 = vmatprep.subr.bf16.mxu0 0
      %2025 = vmatpush1.bf16.msra.mxu0 0
      %2026 = vmatprep.subr.bf16.mxu0 0
      %2027 = vmatpush1.bf16.msra.mxu0 0
      %2028 = vmatprep.subr.bf16.mxu0 0
      %2029 = vmatpush1.bf16.msra.mxu0 0
      %2030 = vmatprep.subr.bf16.mxu0 0
      %2031 = vmatpush1.bf16.msra.mxu0 0
      %2032 = vmatprep.subr.bf16.mxu0 0
      %2033 = vmatpush1.bf16.msra.mxu0 0
      %2034 = vmatprep.subr.bf16.mxu0 0
      %2035 = vmatpush1.bf16.msra.mxu0 0
      %2036 = vmatprep.subr.bf16.mxu0 0
      %2037 = vmatpush1.bf16.msra.mxu0 0
      %2038 = vmatprep.subr.bf16.mxu0 0
      %2039 = vmatpush1.bf16.msra.mxu0 0
      %2040 = vmatprep.mubr.bf16.mxu0 0
      %2041 = vmatmul.mubr.bf16.gmra.mrb[0].mxu0 %v1958
      %v2042 = vpop.f32.mrb[0].mxu0
      %v2043 = vadd.f32 0.0, %v2042
      %v2044 = vpop.f32.mrb[0].mxu0
      %v2045 = vpop.f32.mrb[0].mxu0
      %v2046 = vadd.f32 0.0, %v2045
      %v2047 = vpop.f32.mrb[0].mxu0
      %2048 = vmatprep.mubr.bf16.mxu0 0
      %2049 = vmatmul.mubr.bf16.gmra.mrb[0].mxu0 %v1961
      %v2050 = vpop.f32.mrb[0].mxu0
      %v2051 = vadd.f32 0.0, %v2050
      %v2052 = vpop.f32.mrb[0].mxu0
      %v2053 = vpop.f32.mrb[0].mxu0
      %v2054 = vadd.f32 0.0, %v2053
      %v2055 = vpop.f32.mrb[0].mxu0
      %2056 = vmatprep.mubr.bf16.mxu0 0
      %2057 = vmatmul.mubr.bf16.gmra.mrb[0].mxu0 %v1964
      %v2058 = vpop.f32.mrb[0].mxu0
      %v2059 = vadd.f32 0.0, %v2058
      %v2060 = vpop.f32.mrb[0].mxu0
      %v2061 = vpop.f32.mrb[0].mxu0
      %v2062 = vadd.f32 0.0, %v2061
      %v2063 = vpop.f32.mrb[0].mxu0
      %2064 = vmatprep.mubr.bf16.mxu0 0
      %2065 = vmatmul.mubr.bf16.gmra.mrb[0].mxu0 %v1967
      %v2066 = vpop.f32.mrb[0].mxu0
      %v2067 = vadd.f32 0.0, %v2066
      %v2068 = vpop.f32.mrb[0].mxu0
      %v2069 = vpop.f32.mrb[0].mxu0
      %v2070 = vadd.f32 0.0, %v2069
      %v2071 = vpop.f32.mrb[0].mxu0
      %2072 = vmatprep.mubr.bf16.mxu0 0
      %2073 = vmatmul.mubr.bf16.gmra.mrb[0].mxu0 %v1970
      %v2074 = vpop.f32.mrb[0].mxu0
      %v2075 = vadd.f32 0.0, %v2074
      %v2076 = vpop.f32.mrb[0].mxu0
      %v2077 = vpop.f32.mrb[0].mxu0
      %v2078 = vadd.f32 0.0, %v2077
      %v2079 = vpop.f32.mrb[0].mxu0
      %2080 = vmatprep.mubr.bf16.mxu0 0
      %2081 = vmatmul.mubr.bf16.gmra.mrb[0].mxu0 %v1973
      %v2082 = vpop.f32.mrb[0].mxu0
      %v2083 = vadd.f32 0.0, %v2082
      %v2084 = vpop.f32.mrb[0].mxu0
      %v2085 = vpop.f32.mrb[0].mxu0
      %v2086 = vadd.f32 0.0, %v2085
      %v2087 = vpop.f32.mrb[0].mxu0
      %2088 = vmatprep.mubr.bf16.mxu0 0
      %2089 = vmatmul.mubr.bf16.gmra.mrb[0].mxu0 %v1976
      %v2090 = vpop.f32.mrb[0].mxu0
      %v2091 = vadd.f32 0.0, %v2090
      %v2092 = vpop.f32.mrb[0].mxu0
      %v2093 = vpop.f32.mrb[0].mxu0
      %v2094 = vadd.f32 0.0, %v2093
      %v2095 = vpop.f32.mrb[0].mxu0
      %2096 = vmatprep.mubr.bf16.mxu0 0
      %2097 = vmatmul.mubr.bf16.gmra.mrb[0].mxu0 %v1979
      %v2098 = vpop.f32.mrb[0].mxu0
      %v2099 = vadd.f32 0.0, %v2098
      %v2100 = vpop.f32.mrb[0].mxu0
      %v2101 = vpop.f32.mrb[0].mxu0
      %v2102 = vadd.f32 0.0, %v2101
      %v2103 = vpop.f32.mrb[0].mxu0
      %2104 = vmatprep.mubr.bf16.mxu0 0
      %2105 = vmatmul.mubr.bf16.gmra.mrb[0].mxu0 %v1982
      %v2106 = vpop.f32.mrb[0].mxu0
      %v2107 = vadd.f32 0.0, %v2106
      %v2108 = vpop.f32.mrb[0].mxu0
      %v2109 = vpop.f32.mrb[0].mxu0
      %v2110 = vadd.f32 0.0, %v2109
      %v2111 = vpop.f32.mrb[0].mxu0
      %2112 = vmatprep.mubr.bf16.mxu0 0
      %2113 = vmatmul.mubr.bf16.gmra.mrb[0].mxu0 %v1985
      %v2114 = vpop.f32.mrb[0].mxu0
      %v2115 = vadd.f32 0.0, %v2114
      %v2116 = vpop.f32.mrb[0].mxu0
      %v2117 = vpop.f32.mrb[0].mxu0
      %v2118 = vadd.f32 0.0, %v2117
      %v2119 = vpop.f32.mrb[0].mxu0
      %2120 = vmatprep.mubr.bf16.mxu0 0
      %2121 = vmatmul.mubr.bf16.gmra.mrb[0].mxu0 %v1988
      %v2122 = vpop.f32.mrb[0].mxu0
      %v2123 = vadd.f32 0.0, %v2122
      %v2124 = vpop.f32.mrb[0].mxu0
      %v2125 = vpop.f32.mrb[0].mxu0
      %v2126 = vadd.f32 0.0, %v2125
      %v2127 = vpop.f32.mrb[0].mxu0
      %2128 = vmatprep.mubr.bf16.mxu0 0
      %2129 = vmatmul.mubr.bf16.gmra.mrb[0].mxu0 %v1991
      %v2130 = vpop.f32.mrb[0].mxu0
      %v2131 = vadd.f32 0.0, %v2130
      %v2132 = vpop.f32.mrb[0].mxu0
      %v2133 = vpop.f32.mrb[0].mxu0
      %v2134 = vadd.f32 0.0, %v2133
      %v2135 = vpop.f32.mrb[0].mxu0
      %2136 = vmatprep.mubr.bf16.mxu0 0
      %2137 = vmatmul.mubr.bf16.gmra.mrb[0].mxu0 %v1994
      %v2138 = vpop.f32.mrb[0].mxu0
      %v2139 = vadd.f32 0.0, %v2138
      %v2140 = vpop.f32.mrb[0].mxu0
      %v2141 = vpop.f32.mrb[0].mxu0
      %v2142 = vadd.f32 0.0, %v2141
      %v2143 = vpop.f32.mrb[0].mxu0
      %2144 = vmatprep.mubr.bf16.mxu0 0
      %2145 = vmatmul.mubr.bf16.gmra.mrb[0].mxu0 %v1997
      %v2146 = vpop.f32.mrb[0].mxu0
      %v2147 = vadd.f32 0.0, %v2146
      %v2148 = vpop.f32.mrb[0].mxu0
      %v2149 = vpop.f32.mrb[0].mxu0
      %v2150 = vadd.f32 0.0, %v2149
      %v2151 = vpop.f32.mrb[0].mxu0
      %2152 = vmatprep.mubr.bf16.mxu0 0
      %2153 = vmatmul.mubr.bf16.gmra.mrb[0].mxu0 %v2000
      %v2154 = vpop.f32.mrb[0].mxu0
      %v2155 = vadd.f32 0.0, %v2154
      %v2156 = vpop.f32.mrb[0].mxu0
      %v2157 = vpop.f32.mrb[0].mxu0
      %v2158 = vadd.f32 0.0, %v2157
      %v2159 = vpop.f32.mrb[0].mxu0
      %2160 = vmatprep.mubr.bf16.mxu0 0
      %2161 = vmatmul.mubr.bf16.gmra.mrb[0].mxu0 %v2003
      %v2162 = vpop.f32.mrb[0].mxu0
      %v2163 = vadd.f32 0.0, %v2162
      %v2164 = vpop.f32.mrb[0].mxu0
      %v2165 = vpop.f32.mrb[0].mxu0
      %v2166 = vadd.f32 0.0, %v2165
      %v2167 = vpop.f32.mrb[0].mxu0
      %2168 = vdwg.mxu0
      %v2169 = vadd.f32 %v1811, %v2043
      %v2170 = vadd.f32 %v1812, %v2046
      %v2171 = vadd.f32 %v1813, %v2051
      %v2172 = vadd.f32 %v1814, %v2054
      %v2173 = vadd.f32 %v1815, %v2059
      %v2174 = vadd.f32 %v1816, %v2062
      %v2175 = vadd.f32 %v1817, %v2067
      %v2176 = vadd.f32 %v1818, %v2070
      %v2177 = vadd.f32 %v1819, %v2075
      %v2178 = vadd.f32 %v1820, %v2078
      %v2179 = vadd.f32 %v1821, %v2083
      %v2180 = vadd.f32 %v1822, %v2086
      %v2181 = vadd.f32 %v1823, %v2091
      %v2182 = vadd.f32 %v1824, %v2094
      %v2183 = vadd.f32 %v1825, %v2099
      %v2184 = vadd.f32 %v1826, %v2102
      %v2185 = vadd.f32 %v1827, %v2107
      %v2186 = vadd.f32 %v1828, %v2110
      %v2187 = vadd.f32 %v1829, %v2115
      %v2188 = vadd.f32 %v1830, %v2118
      %v2189 = vadd.f32 %v1831, %v2123
      %v2190 = vadd.f32 %v1832, %v2126
      %v2191 = vadd.f32 %v1833, %v2131
      %v2192 = vadd.f32 %v1834, %v2134
      %v2193 = vadd.f32 %v1835, %v2139
      %v2194 = vadd.f32 %v1836, %v2142
      %v2195 = vadd.f32 %v1837, %v2147
      %v2196 = vadd.f32 %v1838, %v2150
      %v2197 = vadd.f32 %v1839, %v2155
      %v2198 = vadd.f32 %v1840, %v2158
      %v2199 = vadd.f32 %v1841, %v2163
      %v2200 = vadd.f32 %v1842, %v2166
      %v2201 = vld [vmem:[%s362] sm:$0xf]
      %v2202 = vld [vmem:[%s362 + $0x4] sm:$0xf]
      %v2203 = vld [vmem:[%s362 + $0x8] sm:$0x1]
      %v2204 = vld [vmem:[%s362 + $0xc] sm:$0xf]
      %v2205 = vld [vmem:[%s362 + $0x10] sm:$0xf]
      %v2206 = vld [vmem:[%s362 + $0x14] sm:$0x1]
      %v2207 = vld [vmem:[%s362 + $0x18] sm:$0xf]
      %v2208 = vld [vmem:[%s362 + $0x1c] sm:$0xf]
      %v2209 = vld [vmem:[%s362 + $0x20] sm:$0x1]
      %v2210 = vld [vmem:[%s362 + $0x24] sm:$0xf]
      %v2211 = vld [vmem:[%s362 + $0x28] sm:$0xf]
      %v2212 = vld [vmem:[%s362 + $0x2c] sm:$0x1]
      %v2213 = vld [vmem:[%s362 + $0x30] sm:$0xf]
      %v2214 = vld [vmem:[%s362 + $0x34] sm:$0xf]
      %v2215 = vld [vmem:[%s362 + $0x38] sm:$0x1]
      %v2216 = vld [vmem:[%s362 + $0x3c] sm:$0xf]
      %v2217 = vld [vmem:[%s362 + $0x40] sm:$0xf]
      %v2218 = vld [vmem:[%s362 + $0x44] sm:$0x1]
      %v2219 = vld [vmem:[%s362 + $0x48] sm:$0xf]
      %v2220 = vld [vmem:[%s362 + $0x4c] sm:$0xf]
      %v2221 = vld [vmem:[%s362 + $0x50] sm:$0x1]
      %v2222 = vld [vmem:[%s362 + $0x54] sm:$0xf]
      %v2223 = vld [vmem:[%s362 + $0x58] sm:$0xf]
      %v2224 = vld [vmem:[%s362 + $0x5c] sm:$0x1]
      %v2225 = vld [vmem:[%s362 + $0x60] sm:$0xf]
      %v2226 = vld [vmem:[%s362 + $0x64] sm:$0xf]
      %v2227 = vld [vmem:[%s362 + $0x68] sm:$0x1]
      %v2228 = vld [vmem:[%s362 + $0x6c] sm:$0xf]
      %v2229 = vld [vmem:[%s362 + $0x70] sm:$0xf]
      %v2230 = vld [vmem:[%s362 + $0x74] sm:$0x1]
      %v2231 = vld [vmem:[%s362 + $0x78] sm:$0xf]
      %v2232 = vld [vmem:[%s362 + $0x7c] sm:$0xf]
      %v2233 = vld [vmem:[%s362 + $0x80] sm:$0x1]
      %v2234 = vld [vmem:[%s362 + $0x84] sm:$0xf]
      %v2235 = vld [vmem:[%s362 + $0x88] sm:$0xf]
      %v2236 = vld [vmem:[%s362 + $0x8c] sm:$0x1]
      %v2237 = vld [vmem:[%s362 + $0x90] sm:$0xf]
      %v2238 = vld [vmem:[%s362 + $0x94] sm:$0xf]
      %v2239 = vld [vmem:[%s362 + $0x98] sm:$0x1]
      %v2240 = vld [vmem:[%s362 + $0x9c] sm:$0xf]
      %v2241 = vld [vmem:[%s362 + $0xa0] sm:$0xf]
      %v2242 = vld [vmem:[%s362 + $0xa4] sm:$0x1]
      %v2243 = vld [vmem:[%s362 + $0xa8] sm:$0xf]
      %v2244 = vld [vmem:[%s362 + $0xac] sm:$0xf]
      %v2245 = vld [vmem:[%s362 + $0xb0] sm:$0x1]
      %v2246 = vld [vmem:[%s362 + $0xb4] sm:$0xf]
      %v2247 = vld [vmem:[%s362 + $0xb8] sm:$0xf]
      %v2248 = vld [vmem:[%s362 + $0xbc] sm:$0x1]
      %v2250 = vshrl.u32 %v2201, 16
      %v2252 = vrot.slane %v2250, 4
      %v2253 = vshll.u32 %v2201, 16
      %v2255 = vrot.slane %v2253, 5
      %v2256 = vor.u32 %v2252, %v2255
      %v2257 = vrot.slane %v2256, 4
      %v2259 = vshll.u32 %v2202, 16
      %v2261 = vrot.slane %v2259, 5
      %v2262 = vsel %vm445, %v2257, %v2261
      %v2263 = vshrl.u32 %v2202, 16
      %v2265 = vrot.slane %v2263, 4
      %v2266 = vor.u32 %v2265, %v2261
      %v2267 = vrot.slane %v2266, 4
      %v2269 = vshll.u32 %v2203, 16
      %v2271 = vrot.slane %v2269, 5
      %v2272 = vsel %vm445, %v2267, %v2271
      %v2274 = vshrl.u32 %v2204, 16
      %v2276 = vrot.slane %v2274, 4
      %v2277 = vshll.u32 %v2204, 16
      %v2279 = vrot.slane %v2277, 5
      %v2280 = vor.u32 %v2276, %v2279
      %v2281 = vrot.slane %v2280, 4
      %v2283 = vshll.u32 %v2205, 16
      %v2285 = vrot.slane %v2283, 5
      %v2286 = vsel %vm445, %v2281, %v2285
      %v2287 = vshrl.u32 %v2205, 16
      %v2289 = vrot.slane %v2287, 4
      %v2290 = vor.u32 %v2289, %v2285
      %v2291 = vrot.slane %v2290, 4
      %v2293 = vshll.u32 %v2206, 16
      %v2295 = vrot.slane %v2293, 5
      %v2296 = vsel %vm445, %v2291, %v2295
      %v2298 = vshrl.u32 %v2207, 16
      %v2300 = vrot.slane %v2298, 4
      %v2301 = vshll.u32 %v2207, 16
      %v2303 = vrot.slane %v2301, 5
      %v2304 = vor.u32 %v2300, %v2303
      %v2305 = vrot.slane %v2304, 4
      %v2307 = vshll.u32 %v2208, 16
      %v2309 = vrot.slane %v2307, 5
      %v2310 = vsel %vm445, %v2305, %v2309
      %v2311 = vshrl.u32 %v2208, 16
      %v2313 = vrot.slane %v2311, 4
      %v2314 = vor.u32 %v2313, %v2309
      %v2315 = vrot.slane %v2314, 4
      %v2317 = vshll.u32 %v2209, 16
      %v2319 = vrot.slane %v2317, 5
      %v2320 = vsel %vm445, %v2315, %v2319
      %v2322 = vshrl.u32 %v2210, 16
      %v2324 = vrot.slane %v2322, 4
      %v2325 = vshll.u32 %v2210, 16
      %v2327 = vrot.slane %v2325, 5
      %v2328 = vor.u32 %v2324, %v2327
      %v2329 = vrot.slane %v2328, 4
      %v2331 = vshll.u32 %v2211, 16
      %v2333 = vrot.slane %v2331, 5
      %v2334 = vsel %vm445, %v2329, %v2333
      %v2335 = vshrl.u32 %v2211, 16
      %v2337 = vrot.slane %v2335, 4
      %v2338 = vor.u32 %v2337, %v2333
      %v2339 = vrot.slane %v2338, 4
      %v2341 = vshll.u32 %v2212, 16
      %v2343 = vrot.slane %v2341, 5
      %v2344 = vsel %vm445, %v2339, %v2343
      %v2346 = vshrl.u32 %v2213, 16
      %v2348 = vrot.slane %v2346, 4
      %v2349 = vshll.u32 %v2213, 16
      %v2351 = vrot.slane %v2349, 5
      %v2352 = vor.u32 %v2348, %v2351
      %v2353 = vrot.slane %v2352, 4
      %v2355 = vshll.u32 %v2214, 16
      %v2357 = vrot.slane %v2355, 5
      %v2358 = vsel %vm445, %v2353, %v2357
      %v2359 = vshrl.u32 %v2214, 16
      %v2361 = vrot.slane %v2359, 4
      %v2362 = vor.u32 %v2361, %v2357
      %v2363 = vrot.slane %v2362, 4
      %v2365 = vshll.u32 %v2215, 16
      %v2367 = vrot.slane %v2365, 5
      %v2368 = vsel %vm445, %v2363, %v2367
      %v2370 = vshrl.u32 %v2216, 16
      %v2372 = vrot.slane %v2370, 4
      %v2373 = vshll.u32 %v2216, 16
      %v2375 = vrot.slane %v2373, 5
      %v2376 = vor.u32 %v2372, %v2375
      %v2377 = vrot.slane %v2376, 4
      %v2379 = vshll.u32 %v2217, 16
      %v2381 = vrot.slane %v2379, 5
      %v2382 = vsel %vm445, %v2377, %v2381
      %v2383 = vshrl.u32 %v2217, 16
      %v2385 = vrot.slane %v2383, 4
      %v2386 = vor.u32 %v2385, %v2381
      %v2387 = vrot.slane %v2386, 4
      %v2389 = vshll.u32 %v2218, 16
      %v2391 = vrot.slane %v2389, 5
      %v2392 = vsel %vm445, %v2387, %v2391
      %v2394 = vshrl.u32 %v2219, 16
      %v2396 = vrot.slane %v2394, 4
      %v2397 = vshll.u32 %v2219, 16
      %v2399 = vrot.slane %v2397, 5
      %v2400 = vor.u32 %v2396, %v2399
      %v2401 = vrot.slane %v2400, 4
      %v2403 = vshll.u32 %v2220, 16
      %v2405 = vrot.slane %v2403, 5
      %v2406 = vsel %vm445, %v2401, %v2405
      %v2407 = vshrl.u32 %v2220, 16
      %v2409 = vrot.slane %v2407, 4
      %v2410 = vor.u32 %v2409, %v2405
      %v2411 = vrot.slane %v2410, 4
      %v2413 = vshll.u32 %v2221, 16
      %v2415 = vrot.slane %v2413, 5
      %v2416 = vsel %vm445, %v2411, %v2415
      %v2418 = vshrl.u32 %v2222, 16
      %v2420 = vrot.slane %v2418, 4
      %v2421 = vshll.u32 %v2222, 16
      %v2423 = vrot.slane %v2421, 5
      %v2424 = vor.u32 %v2420, %v2423
      %v2425 = vrot.slane %v2424, 4
      %v2427 = vshll.u32 %v2223, 16
      %v2429 = vrot.slane %v2427, 5
      %v2430 = vsel %vm445, %v2425, %v2429
      %v2431 = vshrl.u32 %v2223, 16
      %v2433 = vrot.slane %v2431, 4
      %v2434 = vor.u32 %v2433, %v2429
      %v2435 = vrot.slane %v2434, 4
      %v2437 = vshll.u32 %v2224, 16
      %v2439 = vrot.slane %v2437, 5
      %v2440 = vsel %vm445, %v2435, %v2439
      %v2442 = vshrl.u32 %v2225, 16
      %v2444 = vrot.slane %v2442, 4
      %v2445 = vshll.u32 %v2225, 16
      %v2447 = vrot.slane %v2445, 5
      %v2448 = vor.u32 %v2444, %v2447
      %v2449 = vrot.slane %v2448, 4
      %v2451 = vshll.u32 %v2226, 16
      %v2453 = vrot.slane %v2451, 5
      %v2454 = vsel %vm445, %v2449, %v2453
      %v2455 = vshrl.u32 %v2226, 16
      %v2457 = vrot.slane %v2455, 4
      %v2458 = vor.u32 %v2457, %v2453
      %v2459 = vrot.slane %v2458, 4
      %v2461 = vshll.u32 %v2227, 16
      %v2463 = vrot.slane %v2461, 5
      %v2464 = vsel %vm445, %v2459, %v2463
      %v2466 = vshrl.u32 %v2228, 16
      %v2468 = vrot.slane %v2466, 4
      %v2469 = vshll.u32 %v2228, 16
      %v2471 = vrot.slane %v2469, 5
      %v2472 = vor.u32 %v2468, %v2471
      %v2473 = vrot.slane %v2472, 4
      %v2475 = vshll.u32 %v2229, 16
      %v2477 = vrot.slane %v2475, 5
      %v2478 = vsel %vm445, %v2473, %v2477
      %v2479 = vshrl.u32 %v2229, 16
      %v2481 = vrot.slane %v2479, 4
      %v2482 = vor.u32 %v2481, %v2477
      %v2483 = vrot.slane %v2482, 4
      %v2485 = vshll.u32 %v2230, 16
      %v2487 = vrot.slane %v2485, 5
      %v2488 = vsel %vm445, %v2483, %v2487
      %v2490 = vshrl.u32 %v2231, 16
      %v2492 = vrot.slane %v2490, 4
      %v2493 = vshll.u32 %v2231, 16
      %v2495 = vrot.slane %v2493, 5
      %v2496 = vor.u32 %v2492, %v2495
      %v2497 = vrot.slane %v2496, 4
      %v2499 = vshll.u32 %v2232, 16
      %v2501 = vrot.slane %v2499, 5
      %v2502 = vsel %vm445, %v2497, %v2501
      %v2503 = vshrl.u32 %v2232, 16
      %v2505 = vrot.slane %v2503, 4
      %v2506 = vor.u32 %v2505, %v2501
      %v2507 = vrot.slane %v2506, 4
      %v2509 = vshll.u32 %v2233, 16
      %v2511 = vrot.slane %v2509, 5
      %v2512 = vsel %vm445, %v2507, %v2511
      %v2514 = vshrl.u32 %v2234, 16
      %v2516 = vrot.slane %v2514, 4
      %v2517 = vshll.u32 %v2234, 16
      %v2519 = vrot.slane %v2517, 5
      %v2520 = vor.u32 %v2516, %v2519
      %v2521 = vrot.slane %v2520, 4
      %v2523 = vshll.u32 %v2235, 16
      %v2525 = vrot.slane %v2523, 5
      %v2526 = vsel %vm445, %v2521, %v2525
      %v2527 = vshrl.u32 %v2235, 16
      %v2529 = vrot.slane %v2527, 4
      %v2530 = vor.u32 %v2529, %v2525
      %v2531 = vrot.slane %v2530, 4
      %v2533 = vshll.u32 %v2236, 16
      %v2535 = vrot.slane %v2533, 5
      %v2536 = vsel %vm445, %v2531, %v2535
      %v2538 = vshrl.u32 %v2237, 16
      %v2540 = vrot.slane %v2538, 4
      %v2541 = vshll.u32 %v2237, 16
      %v2543 = vrot.slane %v2541, 5
      %v2544 = vor.u32 %v2540, %v2543
      %v2545 = vrot.slane %v2544, 4
      %v2547 = vshll.u32 %v2238, 16
      %v2549 = vrot.slane %v2547, 5
      %v2550 = vsel %vm445, %v2545, %v2549
      %v2551 = vshrl.u32 %v2238, 16
      %v2553 = vrot.slane %v2551, 4
      %v2554 = vor.u32 %v2553, %v2549
      %v2555 = vrot.slane %v2554, 4
      %v2557 = vshll.u32 %v2239, 16
      %v2559 = vrot.slane %v2557, 5
      %v2560 = vsel %vm445, %v2555, %v2559
      %v2562 = vshrl.u32 %v2240, 16
      %v2564 = vrot.slane %v2562, 4
      %v2565 = vshll.u32 %v2240, 16
      %v2567 = vrot.slane %v2565, 5
      %v2568 = vor.u32 %v2564, %v2567
      %v2569 = vrot.slane %v2568, 4
      %v2571 = vshll.u32 %v2241, 16
      %v2573 = vrot.slane %v2571, 5
      %v2574 = vsel %vm445, %v2569, %v2573
      %v2575 = vshrl.u32 %v2241, 16
      %v2577 = vrot.slane %v2575, 4
      %v2578 = vor.u32 %v2577, %v2573
      %v2579 = vrot.slane %v2578, 4
      %v2581 = vshll.u32 %v2242, 16
      %v2583 = vrot.slane %v2581, 5
      %v2584 = vsel %vm445, %v2579, %v2583
      %v2586 = vshrl.u32 %v2243, 16
      %v2588 = vrot.slane %v2586, 4
      %v2589 = vshll.u32 %v2243, 16
      %v2591 = vrot.slane %v2589, 5
      %v2592 = vor.u32 %v2588, %v2591
      %v2593 = vrot.slane %v2592, 4
      %v2595 = vshll.u32 %v2244, 16
      %v2597 = vrot.slane %v2595, 5
      %v2598 = vsel %vm445, %v2593, %v2597
      %v2599 = vshrl.u32 %v2244, 16
      %v2601 = vrot.slane %v2599, 4
      %v2602 = vor.u32 %v2601, %v2597
      %v2603 = vrot.slane %v2602, 4
      %v2605 = vshll.u32 %v2245, 16
      %v2607 = vrot.slane %v2605, 5
      %v2608 = vsel %vm445, %v2603, %v2607
      %v2610 = vshrl.u32 %v2246, 16
      %v2612 = vrot.slane %v2610, 4
      %v2613 = vshll.u32 %v2246, 16
      %v2615 = vrot.slane %v2613, 5
      %v2616 = vor.u32 %v2612, %v2615
      %v2617 = vrot.slane %v2616, 4
      %v2619 = vshll.u32 %v2247, 16
      %v2621 = vrot.slane %v2619, 5
      %v2622 = vsel %vm445, %v2617, %v2621
      %v2623 = vshrl.u32 %v2247, 16
      %v2625 = vrot.slane %v2623, 4
      %v2626 = vor.u32 %v2625, %v2621
      %v2627 = vrot.slane %v2626, 4
      %v2629 = vshll.u32 %v2248, 16
      %v2631 = vrot.slane %v2629, 5
      %v2632 = vsel %vm445, %v2627, %v2631
      %s2633 = scalar_lea.vmem %s3, 8
      %v2634 = vld [vmem:[%s2633] sm:$0x3]
      %v2635 = vunpack.c.l.b16 %v2262
      %v2636 = vunpack.c.l.b16 %v2272
      %v2637 = vunpack.c.l.b16 %v2286
      %v2638 = vunpack.c.l.b16 %v2296
      %v2639 = vunpack.c.l.b16 %v2310
      %v2640 = vunpack.c.l.b16 %v2320
      %v2641 = vunpack.c.l.b16 %v2334
      %v2642 = vunpack.c.l.b16 %v2344
      %v2643 = vunpack.c.l.b16 %v2358
      %v2644 = vunpack.c.l.b16 %v2368
      %v2645 = vunpack.c.l.b16 %v2382
      %v2646 = vunpack.c.l.b16 %v2392
      %v2647 = vunpack.c.l.b16 %v2406
      %v2648 = vunpack.c.l.b16 %v2416
      %v2649 = vunpack.c.l.b16 %v2430
      %v2650 = vunpack.c.l.b16 %v2440
      %v2651 = vunpack.c.l.b16 %v2454
      %v2652 = vunpack.c.l.b16 %v2464
      %v2653 = vunpack.c.l.b16 %v2478
      %v2654 = vunpack.c.l.b16 %v2488
      %v2655 = vunpack.c.l.b16 %v2502
      %v2656 = vunpack.c.l.b16 %v2512
      %v2657 = vunpack.c.l.b16 %v2526
      %v2658 = vunpack.c.l.b16 %v2536
      %v2659 = vunpack.c.l.b16 %v2550
      %v2660 = vunpack.c.l.b16 %v2560
      %v2661 = vunpack.c.l.b16 %v2574
      %v2662 = vunpack.c.l.b16 %v2584
      %v2663 = vunpack.c.l.b16 %v2598
      %v2664 = vunpack.c.l.b16 %v2608
      %v2665 = vunpack.c.l.b16 %v2622
      %v2666 = vunpack.c.l.b16 %v2632
      %v2667 = vpack.c.b16 %v2636, %v2635
      %v2668 = vpack.c.b16 %v2638, %v2637
      %v2669 = vpack.c.b16 %v2640, %v2639
      %v2670 = vpack.c.b16 %v2642, %v2641
      %v2671 = vpack.c.b16 %v2644, %v2643
      %v2672 = vpack.c.b16 %v2646, %v2645
      %v2673 = vpack.c.b16 %v2648, %v2647
      %v2674 = vpack.c.b16 %v2650, %v2649
      %v2675 = vpack.c.b16 %v2652, %v2651
      %v2676 = vpack.c.b16 %v2654, %v2653
      %v2677 = vpack.c.b16 %v2656, %v2655
      %v2678 = vpack.c.b16 %v2658, %v2657
      %v2679 = vpack.c.b16 %v2660, %v2659
      %v2680 = vpack.c.b16 %v2662, %v2661
      %v2681 = vpack.c.b16 %v2664, %v2663
      %v2682 = vpack.c.b16 %v2666, %v2665
      %v2684 = vsel %vm880, %v2667, 0
      %v2687 = vsel %vm880, %v2668, 0
      %v2690 = vsel %vm880, %v2669, 0
      %v2693 = vsel %vm880, %v2670, 0
      %v2696 = vsel %vm880, %v2671, 0
      %v2699 = vsel %vm880, %v2672, 0
      %v2702 = vsel %vm880, %v2673, 0
      %v2705 = vsel %vm880, %v2674, 0
      %v2708 = vsel %vm880, %v2675, 0
      %v2711 = vsel %vm880, %v2676, 0
      %v2714 = vsel %vm880, %v2677, 0
      %v2717 = vsel %vm880, %v2678, 0
      %v2720 = vsel %vm880, %v2679, 0
      %v2723 = vsel %vm880, %v2680, 0
      %v2726 = vsel %vm880, %v2681, 0
      %v2729 = vsel %vm880, %v2682, 0
      %v2732 = vsel %vm929, %v2634, 0
      %2734 = vmatprep.subr.bf16.mxu0 0
      %2735 = vmatpush1.bf16.msra.mxu0 %v2732
      %2736 = vmatprep.subr.bf16.mxu0 0
      %2737 = vmatpush1.bf16.msra.mxu0 0
      %2738 = vmatprep.subr.bf16.mxu0 0
      %2739 = vmatpush1.bf16.msra.mxu0 0
      %2740 = vmatprep.subr.bf16.mxu0 0
      %2741 = vmatpush1.bf16.msra.mxu0 0
      %2742 = vmatprep.subr.bf16.mxu0 0
      %2743 = vmatpush1.bf16.msra.mxu0 0
      %2744 = vmatprep.subr.bf16.mxu0 0
      %2745 = vmatpush1.bf16.msra.mxu0 0
      %2746 = vmatprep.subr.bf16.mxu0 0
      %2747 = vmatpush1.bf16.msra.mxu0 0
      %2748 = vmatprep.subr.bf16.mxu0 0
      %2749 = vmatpush1.bf16.msra.mxu0 0
      %2750 = vmatprep.subr.bf16.mxu0 0
      %2751 = vmatpush1.bf16.msra.mxu0 0
      %2752 = vmatprep.subr.bf16.mxu0 0
      %2753 = vmatpush1.bf16.msra.mxu0 0
      %2754 = vmatprep.subr.bf16.mxu0 0
      %2755 = vmatpush1.bf16.msra.mxu0 0
      %2756 = vmatprep.subr.bf16.mxu0 0
      %2757 = vmatpush1.bf16.msra.mxu0 0
      %2758 = vmatprep.subr.bf16.mxu0 0
      %2759 = vmatpush1.bf16.msra.mxu0 0
      %2760 = vmatprep.subr.bf16.mxu0 0
      %2761 = vmatpush1.bf16.msra.mxu0 0
      %2762 = vmatprep.subr.bf16.mxu0 0
      %2763 = vmatpush1.bf16.msra.mxu0 0
      %2764 = vmatprep.subr.bf16.mxu0 0
      %2765 = vmatpush1.bf16.msra.mxu0 0
      %2766 = vmatprep.mubr.bf16.mxu0 0
      %2767 = vmatmul.mubr.bf16.gmra.mrb[0].mxu0 %v2684
      %v2768 = vpop.f32.mrb[0].mxu0
      %v2769 = vadd.f32 0.0, %v2768
      %v2770 = vpop.f32.mrb[0].mxu0
      %v2771 = vpop.f32.mrb[0].mxu0
      %v2772 = vadd.f32 0.0, %v2771
      %v2773 = vpop.f32.mrb[0].mxu0
      %2774 = vmatprep.mubr.bf16.mxu0 0
      %2775 = vmatmul.mubr.bf16.gmra.mrb[0].mxu0 %v2687
      %v2776 = vpop.f32.mrb[0].mxu0
      %v2777 = vadd.f32 0.0, %v2776
      %v2778 = vpop.f32.mrb[0].mxu0
      %v2779 = vpop.f32.mrb[0].mxu0
      %v2780 = vadd.f32 0.0, %v2779
      %v2781 = vpop.f32.mrb[0].mxu0
      %2782 = vmatprep.mubr.bf16.mxu0 0
      %2783 = vmatmul.mubr.bf16.gmra.mrb[0].mxu0 %v2690
      %v2784 = vpop.f32.mrb[0].mxu0
      %v2785 = vadd.f32 0.0, %v2784
      %v2786 = vpop.f32.mrb[0].mxu0
      %v2787 = vpop.f32.mrb[0].mxu0
      %v2788 = vadd.f32 0.0, %v2787
      %v2789 = vpop.f32.mrb[0].mxu0
      %2790 = vmatprep.mubr.bf16.mxu0 0
      %2791 = vmatmul.mubr.bf16.gmra.mrb[0].mxu0 %v2693
      %v2792 = vpop.f32.mrb[0].mxu0
      %v2793 = vadd.f32 0.0, %v2792
      %v2794 = vpop.f32.mrb[0].mxu0
      %v2795 = vpop.f32.mrb[0].mxu0
      %v2796 = vadd.f32 0.0, %v2795
      %v2797 = vpop.f32.mrb[0].mxu0
      %2798 = vmatprep.mubr.bf16.mxu0 0
      %2799 = vmatmul.mubr.bf16.gmra.mrb[0].mxu0 %v2696
      %v2800 = vpop.f32.mrb[0].mxu0
      %v2801 = vadd.f32 0.0, %v2800
      %v2802 = vpop.f32.mrb[0].mxu0
      %v2803 = vpop.f32.mrb[0].mxu0
      %v2804 = vadd.f32 0.0, %v2803
      %v2805 = vpop.f32.mrb[0].mxu0
      %2806 = vmatprep.mubr.bf16.mxu0 0
      %2807 = vmatmul.mubr.bf16.gmra.mrb[0].mxu0 %v2699
      %v2808 = vpop.f32.mrb[0].mxu0
      %v2809 = vadd.f32 0.0, %v2808
      %v2810 = vpop.f32.mrb[0].mxu0
      %v2811 = vpop.f32.mrb[0].mxu0
      %v2812 = vadd.f32 0.0, %v2811
      %v2813 = vpop.f32.mrb[0].mxu0
      %2814 = vmatprep.mubr.bf16.mxu0 0
      %2815 = vmatmul.mubr.bf16.gmra.mrb[0].mxu0 %v2702
      %v2816 = vpop.f32.mrb[0].mxu0
      %v2817 = vadd.f32 0.0, %v2816
      %v2818 = vpop.f32.mrb[0].mxu0
      %v2819 = vpop.f32.mrb[0].mxu0
      %v2820 = vadd.f32 0.0, %v2819
      %v2821 = vpop.f32.mrb[0].mxu0
      %2822 = vmatprep.mubr.bf16.mxu0 0
      %2823 = vmatmul.mubr.bf16.gmra.mrb[0].mxu0 %v2705
      %v2824 = vpop.f32.mrb[0].mxu0
      %v2825 = vadd.f32 0.0, %v2824
      %v2826 = vpop.f32.mrb[0].mxu0
      %v2827 = vpop.f32.mrb[0].mxu0
      %v2828 = vadd.f32 0.0, %v2827
      %v2829 = vpop.f32.mrb[0].mxu0
      %2830 = vmatprep.mubr.bf16.mxu0 0
      %2831 = vmatmul.mubr.bf16.gmra.mrb[0].mxu0 %v2708
      %v2832 = vpop.f32.mrb[0].mxu0
      %v2833 = vadd.f32 0.0, %v2832
      %v2834 = vpop.f32.mrb[0].mxu0
      %v2835 = vpop.f32.mrb[0].mxu0
      %v2836 = vadd.f32 0.0, %v2835
      %v2837 = vpop.f32.mrb[0].mxu0
      %2838 = vmatprep.mubr.bf16.mxu0 0
      %2839 = vmatmul.mubr.bf16.gmra.mrb[0].mxu0 %v2711
      %v2840 = vpop.f32.mrb[0].mxu0
      %v2841 = vadd.f32 0.0, %v2840
      %v2842 = vpop.f32.mrb[0].mxu0
      %v2843 = vpop.f32.mrb[0].mxu0
      %v2844 = vadd.f32 0.0, %v2843
      %v2845 = vpop.f32.mrb[0].mxu0
      %2846 = vmatprep.mubr.bf16.mxu0 0
      %2847 = vmatmul.mubr.bf16.gmra.mrb[0].mxu0 %v2714
      %v2848 = vpop.f32.mrb[0].mxu0
      %v2849 = vadd.f32 0.0, %v2848
      %v2850 = vpop.f32.mrb[0].mxu0
      %v2851 = vpop.f32.mrb[0].mxu0
      %v2852 = vadd.f32 0.0, %v2851
      %v2853 = vpop.f32.mrb[0].mxu0
      %2854 = vmatprep.mubr.bf16.mxu0 0
      %2855 = vmatmul.mubr.bf16.gmra.mrb[0].mxu0 %v2717
      %v2856 = vpop.f32.mrb[0].mxu0
      %v2857 = vadd.f32 0.0, %v2856
      %v2858 = vpop.f32.mrb[0].mxu0
      %v2859 = vpop.f32.mrb[0].mxu0
      %v2860 = vadd.f32 0.0, %v2859
      %v2861 = vpop.f32.mrb[0].mxu0
      %2862 = vmatprep.mubr.bf16.mxu0 0
      %2863 = vmatmul.mubr.bf16.gmra.mrb[0].mxu0 %v2720
      %v2864 = vpop.f32.mrb[0].mxu0
      %v2865 = vadd.f32 0.0, %v2864
      %v2866 = vpop.f32.mrb[0].mxu0
      %v2867 = vpop.f32.mrb[0].mxu0
      %v2868 = vadd.f32 0.0, %v2867
      %v2869 = vpop.f32.mrb[0].mxu0
      %2870 = vmatprep.mubr.bf16.mxu0 0
      %2871 = vmatmul.mubr.bf16.gmra.mrb[0].mxu0 %v2723
      %v2872 = vpop.f32.mrb[0].mxu0
      %v2873 = vadd.f32 0.0, %v2872
      %v2874 = vpop.f32.mrb[0].mxu0
      %v2875 = vpop.f32.mrb[0].mxu0
      %v2876 = vadd.f32 0.0, %v2875
      %v2877 = vpop.f32.mrb[0].mxu0
      %2878 = vmatprep.mubr.bf16.mxu0 0
      %2879 = vmatmul.mubr.bf16.gmra.mrb[0].mxu0 %v2726
      %v2880 = vpop.f32.mrb[0].mxu0
      %v2881 = vadd.f32 0.0, %v2880
      %v2882 = vpop.f32.mrb[0].mxu0
      %v2883 = vpop.f32.mrb[0].mxu0
      %v2884 = vadd.f32 0.0, %v2883
      %v2885 = vpop.f32.mrb[0].mxu0
      %2886 = vmatprep.mubr.bf16.mxu0 0
      %2887 = vmatmul.mubr.bf16.gmra.mrb[0].mxu0 %v2729
      %v2888 = vpop.f32.mrb[0].mxu0
      %v2889 = vadd.f32 0.0, %v2888
      %v2890 = vpop.f32.mrb[0].mxu0
      %v2891 = vpop.f32.mrb[0].mxu0
      %v2892 = vadd.f32 0.0, %v2891
      %v2893 = vpop.f32.mrb[0].mxu0
      %2894 = vdwg.mxu0
      %v2895 = vadd.f32 %v2169, %v2769
      %v2896 = vadd.f32 %v2170, %v2772
      %v2897 = vadd.f32 %v2171, %v2777
      %v2898 = vadd.f32 %v2172, %v2780
      %v2899 = vadd.f32 %v2173, %v2785
      %v2900 = vadd.f32 %v2174, %v2788
      %v2901 = vadd.f32 %v2175, %v2793
      %v2902 = vadd.f32 %v2176, %v2796
      %v2903 = vadd.f32 %v2177, %v2801
      %v2904 = vadd.f32 %v2178, %v2804
      %v2905 = vadd.f32 %v2179, %v2809
      %v2906 = vadd.f32 %v2180, %v2812
      %v2907 = vadd.f32 %v2181, %v2817
      %v2908 = vadd.f32 %v2182, %v2820
      %v2909 = vadd.f32 %v2183, %v2825
      %v2910 = vadd.f32 %v2184, %v2828
      %v2911 = vadd.f32 %v2185, %v2833
      %v2912 = vadd.f32 %v2186, %v2836
      %v2913 = vadd.f32 %v2187, %v2841
      %v2914 = vadd.f32 %v2188, %v2844
      %v2915 = vadd.f32 %v2189, %v2849
      %v2916 = vadd.f32 %v2190, %v2852
      %v2917 = vadd.f32 %v2191, %v2857
      %v2918 = vadd.f32 %v2192, %v2860
      %v2919 = vadd.f32 %v2193, %v2865
      %v2920 = vadd.f32 %v2194, %v2868
      %v2921 = vadd.f32 %v2195, %v2873
      %v2922 = vadd.f32 %v2196, %v2876
      %v2923 = vadd.f32 %v2197, %v2881
      %v2924 = vadd.f32 %v2198, %v2884
      %v2925 = vadd.f32 %v2199, %v2889
      %v2926 = vadd.f32 %v2200, %v2892
      %v2927 = vld [vmem:[%s362] sm:$0xe]
      %v2928 = vld [vmem:[%s362 + $0xc] sm:$0xe]
      %v2929 = vld [vmem:[%s362 + $0x18] sm:$0xe]
      %v2930 = vld [vmem:[%s362 + $0x24] sm:$0xe]
      %v2931 = vld [vmem:[%s362 + $0x30] sm:$0xe]
      %v2932 = vld [vmem:[%s362 + $0x3c] sm:$0xe]
      %v2933 = vld [vmem:[%s362 + $0x48] sm:$0xe]
      %v2934 = vld [vmem:[%s362 + $0x54] sm:$0xe]
      %v2935 = vld [vmem:[%s362 + $0x60] sm:$0xe]
      %v2936 = vld [vmem:[%s362 + $0x6c] sm:$0xe]
      %v2937 = vld [vmem:[%s362 + $0x78] sm:$0xe]
      %v2938 = vld [vmem:[%s362 + $0x84] sm:$0xe]
      %v2939 = vld [vmem:[%s362 + $0x90] sm:$0xe]
      %v2940 = vld [vmem:[%s362 + $0x9c] sm:$0xe]
      %v2941 = vld [vmem:[%s362 + $0xa8] sm:$0xe]
      %v2942 = vld [vmem:[%s362 + $0xb4] sm:$0xe]
      %v2991 = vrot.slane %v2927, 5
      %v2992 = vrot.slane %v2991, 4
      %v2993 = vrot.slane %v2202, 5
      %v2994 = vsel %vm1436, %v2992, %v2993
      %v2995 = vrot.slane %v2993, 4
      %v2996 = vrot.slane %v2203, 5
      %v2997 = vsel %vm1436, %v2995, %v2996
      %v2998 = vrot.slane %v2928, 5
      %v2999 = vrot.slane %v2998, 4
      %v3000 = vrot.slane %v2205, 5
      %v3001 = vsel %vm1436, %v2999, %v3000
      %v3002 = vrot.slane %v3000, 4
      %v3003 = vrot.slane %v2206, 5
      %v3004 = vsel %vm1436, %v3002, %v3003
      %v3005 = vrot.slane %v2929, 5
      %v3006 = vrot.slane %v3005, 4
      %v3007 = vrot.slane %v2208, 5
      %v3008 = vsel %vm1436, %v3006, %v3007
      %v3009 = vrot.slane %v3007, 4
      %v3010 = vrot.slane %v2209, 5
      %v3011 = vsel %vm1436, %v3009, %v3010
      %v3012 = vrot.slane %v2930, 5
      %v3013 = vrot.slane %v3012, 4
      %v3014 = vrot.slane %v2211, 5
      %v3015 = vsel %vm1436, %v3013, %v3014
      %v3016 = vrot.slane %v3014, 4
      %v3017 = vrot.slane %v2212, 5
      %v3018 = vsel %vm1436, %v3016, %v3017
      %v3019 = vrot.slane %v2931, 5
      %v3020 = vrot.slane %v3019, 4
      %v3021 = vrot.slane %v2214, 5
      %v3022 = vsel %vm1436, %v3020, %v3021
      %v3023 = vrot.slane %v3021, 4
      %v3024 = vrot.slane %v2215, 5
      %v3025 = vsel %vm1436, %v3023, %v3024
      %v3026 = vrot.slane %v2932, 5
      %v3027 = vrot.slane %v3026, 4
      %v3028 = vrot.slane %v2217, 5
      %v3029 = vsel %vm1436, %v3027, %v3028
      %v3030 = vrot.slane %v3028, 4
      %v3031 = vrot.slane %v2218, 5
      %v3032 = vsel %vm1436, %v3030, %v3031
      %v3033 = vrot.slane %v2933, 5
      %v3034 = vrot.slane %v3033, 4
      %v3035 = vrot.slane %v2220, 5
      %v3036 = vsel %vm1436, %v3034, %v3035
      %v3037 = vrot.slane %v3035, 4
      %v3038 = vrot.slane %v2221, 5
      %v3039 = vsel %vm1436, %v3037, %v3038
      %v3040 = vrot.slane %v2934, 5
      %v3041 = vrot.slane %v3040, 4
      %v3042 = vrot.slane %v2223, 5
      %v3043 = vsel %vm1436, %v3041, %v3042
      %v3044 = vrot.slane %v3042, 4
      %v3045 = vrot.slane %v2224, 5
      %v3046 = vsel %vm1436, %v3044, %v3045
      %v3047 = vrot.slane %v2935, 5
      %v3048 = vrot.slane %v3047, 4
      %v3049 = vrot.slane %v2226, 5
      %v3050 = vsel %vm1436, %v3048, %v3049
      %v3051 = vrot.slane %v3049, 4
      %v3052 = vrot.slane %v2227, 5
      %v3053 = vsel %vm1436, %v3051, %v3052
      %v3054 = vrot.slane %v2936, 5
      %v3055 = vrot.slane %v3054, 4
      %v3056 = vrot.slane %v2229, 5
      %v3057 = vsel %vm1436, %v3055, %v3056
      %v3058 = vrot.slane %v3056, 4
      %v3059 = vrot.slane %v2230, 5
      %v3060 = vsel %vm1436, %v3058, %v3059
      %v3061 = vrot.slane %v2937, 5
      %v3062 = vrot.slane %v3061, 4
      %v3063 = vrot.slane %v2232, 5
      %v3064 = vsel %vm1436, %v3062, %v3063
      %v3065 = vrot.slane %v3063, 4
      %v3066 = vrot.slane %v2233, 5
      %v3067 = vsel %vm1436, %v3065, %v3066
      %v3068 = vrot.slane %v2938, 5
      %v3069 = vrot.slane %v3068, 4
      %v3070 = vrot.slane %v2235, 5
      %v3071 = vsel %vm1436, %v3069, %v3070
      %v3072 = vrot.slane %v3070, 4
      %v3073 = vrot.slane %v2236, 5
      %v3074 = vsel %vm1436, %v3072, %v3073
      %v3075 = vrot.slane %v2939, 5
      %v3076 = vrot.slane %v3075, 4
      %v3077 = vrot.slane %v2238, 5
      %v3078 = vsel %vm1436, %v3076, %v3077
      %v3079 = vrot.slane %v3077, 4
      %v3080 = vrot.slane %v2239, 5
      %v3081 = vsel %vm1436, %v3079, %v3080
      %v3082 = vrot.slane %v2940, 5
      %v3083 = vrot.slane %v3082, 4
      %v3084 = vrot.slane %v2241, 5
      %v3085 = vsel %vm1436, %v3083, %v3084
      %v3086 = vrot.slane %v3084, 4
      %v3087 = vrot.slane %v2242, 5
      %v3088 = vsel %vm1436, %v3086, %v3087
      %v3089 = vrot.slane %v2941, 5
      %v3090 = vrot.slane %v3089, 4
      %v3091 = vrot.slane %v2244, 5
      %v3092 = vsel %vm1436, %v3090, %v3091
      %v3093 = vrot.slane %v3091, 4
      %v3094 = vrot.slane %v2245, 5
      %v3095 = vsel %vm1436, %v3093, %v3094
      %v3096 = vrot.slane %v2942, 5
      %v3097 = vrot.slane %v3096, 4
      %v3098 = vrot.slane %v2247, 5
      %v3099 = vsel %vm1436, %v3097, %v3098
      %v3100 = vrot.slane %v3098, 4
      %v3101 = vrot.slane %v2248, 5
      %v3102 = vsel %vm1436, %v3100, %v3101
      %s3103 = scalar_lea.vmem %s3, 10
      %v3104 = vld [vmem:[%s3103] sm:$0x3]
      %v3105 = vunpack.c.l.b16 %v2994
      %v3106 = vunpack.c.l.b16 %v2997
      %v3107 = vunpack.c.l.b16 %v3001
      %v3108 = vunpack.c.l.b16 %v3004
      %v3109 = vunpack.c.l.b16 %v3008
      %v3110 = vunpack.c.l.b16 %v3011
      %v3111 = vunpack.c.l.b16 %v3015
      %v3112 = vunpack.c.l.b16 %v3018
      %v3113 = vunpack.c.l.b16 %v3022
      %v3114 = vunpack.c.l.b16 %v3025
      %v3115 = vunpack.c.l.b16 %v3029
      %v3116 = vunpack.c.l.b16 %v3032
      %v3117 = vunpack.c.l.b16 %v3036
      %v3118 = vunpack.c.l.b16 %v3039
      %v3119 = vunpack.c.l.b16 %v3043
      %v3120 = vunpack.c.l.b16 %v3046
      %v3121 = vunpack.c.l.b16 %v3050
      %v3122 = vunpack.c.l.b16 %v3053
      %v3123 = vunpack.c.l.b16 %v3057
      %v3124 = vunpack.c.l.b16 %v3060
      %v3125 = vunpack.c.l.b16 %v3064
      %v3126 = vunpack.c.l.b16 %v3067
      %v3127 = vunpack.c.l.b16 %v3071
      %v3128 = vunpack.c.l.b16 %v3074
      %v3129 = vunpack.c.l.b16 %v3078
      %v3130 = vunpack.c.l.b16 %v3081
      %v3131 = vunpack.c.l.b16 %v3085
      %v3132 = vunpack.c.l.b16 %v3088
      %v3133 = vunpack.c.l.b16 %v3092
      %v3134 = vunpack.c.l.b16 %v3095
      %v3135 = vunpack.c.l.b16 %v3099
      %v3136 = vunpack.c.l.b16 %v3102
      %v3137 = vpack.c.b16 %v3106, %v3105
      %v3138 = vpack.c.b16 %v3108, %v3107
      %v3139 = vpack.c.b16 %v3110, %v3109
      %v3140 = vpack.c.b16 %v3112, %v3111
      %v3141 = vpack.c.b16 %v3114, %v3113
      %v3142 = vpack.c.b16 %v3116, %v3115
      %v3143 = vpack.c.b16 %v3118, %v3117
      %v3144 = vpack.c.b16 %v3120, %v3119
      %v3145 = vpack.c.b16 %v3122, %v3121
      %v3146 = vpack.c.b16 %v3124, %v3123
      %v3147 = vpack.c.b16 %v3126, %v3125
      %v3148 = vpack.c.b16 %v3128, %v3127
      %v3149 = vpack.c.b16 %v3130, %v3129
      %v3150 = vpack.c.b16 %v3132, %v3131
      %v3151 = vpack.c.b16 %v3134, %v3133
      %v3152 = vpack.c.b16 %v3136, %v3135
      %v3154 = vsel %vm880, %v3137, 0
      %v3157 = vsel %vm880, %v3138, 0
      %v3160 = vsel %vm880, %v3139, 0
      %v3163 = vsel %vm880, %v3140, 0
      %v3166 = vsel %vm880, %v3141, 0
      %v3169 = vsel %vm880, %v3142, 0
      %v3172 = vsel %vm880, %v3143, 0
      %v3175 = vsel %vm880, %v3144, 0
      %v3178 = vsel %vm880, %v3145, 0
      %v3181 = vsel %vm880, %v3146, 0
      %v3184 = vsel %vm880, %v3147, 0
      %v3187 = vsel %vm880, %v3148, 0
      %v3190 = vsel %vm880, %v3149, 0
      %v3193 = vsel %vm880, %v3150, 0
      %v3196 = vsel %vm880, %v3151, 0
      %v3199 = vsel %vm880, %v3152, 0
      %v3202 = vsel %vm929, %v3104, 0
      %3204 = vmatprep.subr.bf16.mxu0 0
      %3205 = vmatpush1.bf16.msra.mxu0 %v3202
      %3206 = vmatprep.subr.bf16.mxu0 0
      %3207 = vmatpush1.bf16.msra.mxu0 0
      %3208 = vmatprep.subr.bf16.mxu0 0
      %3209 = vmatpush1.bf16.msra.mxu0 0
      %3210 = vmatprep.subr.bf16.mxu0 0
      %3211 = vmatpush1.bf16.msra.mxu0 0
      %3212 = vmatprep.subr.bf16.mxu0 0
      %3213 = vmatpush1.bf16.msra.mxu0 0
      %3214 = vmatprep.subr.bf16.mxu0 0
      %3215 = vmatpush1.bf16.msra.mxu0 0
      %3216 = vmatprep.subr.bf16.mxu0 0
      %3217 = vmatpush1.bf16.msra.mxu0 0
      %3218 = vmatprep.subr.bf16.mxu0 0
      %3219 = vmatpush1.bf16.msra.mxu0 0
      %3220 = vmatprep.subr.bf16.mxu0 0
      %3221 = vmatpush1.bf16.msra.mxu0 0
      %3222 = vmatprep.subr.bf16.mxu0 0
      %3223 = vmatpush1.bf16.msra.mxu0 0
      %3224 = vmatprep.subr.bf16.mxu0 0
      %3225 = vmatpush1.bf16.msra.mxu0 0
      %3226 = vmatprep.subr.bf16.mxu0 0
      %3227 = vmatpush1.bf16.msra.mxu0 0
      %3228 = vmatprep.subr.bf16.mxu0 0
      %3229 = vmatpush1.bf16.msra.mxu0 0
      %3230 = vmatprep.subr.bf16.mxu0 0
      %3231 = vmatpush1.bf16.msra.mxu0 0
      %3232 = vmatprep.subr.bf16.mxu0 0
      %3233 = vmatpush1.bf16.msra.mxu0 0
      %3234 = vmatprep.subr.bf16.mxu0 0
      %3235 = vmatpush1.bf16.msra.mxu0 0
      %3236 = vmatprep.mubr.bf16.mxu0 0
      %3237 = vmatmul.mubr.bf16.gmra.mrb[0].mxu0 %v3154
      %v3238 = vpop.f32.mrb[0].mxu0
      %v3239 = vadd.f32 0.0, %v3238
      %v3240 = vpop.f32.mrb[0].mxu0
      %v3241 = vpop.f32.mrb[0].mxu0
      %v3242 = vadd.f32 0.0, %v3241
      %v3243 = vpop.f32.mrb[0].mxu0
      %3244 = vmatprep.mubr.bf16.mxu0 0
      %3245 = vmatmul.mubr.bf16.gmra.mrb[0].mxu0 %v3157
      %v3246 = vpop.f32.mrb[0].mxu0
      %v3247 = vadd.f32 0.0, %v3246
      %v3248 = vpop.f32.mrb[0].mxu0
      %v3249 = vpop.f32.mrb[0].mxu0
      %v3250 = vadd.f32 0.0, %v3249
      %v3251 = vpop.f32.mrb[0].mxu0
      %3252 = vmatprep.mubr.bf16.mxu0 0
      %3253 = vmatmul.mubr.bf16.gmra.mrb[0].mxu0 %v3160
      %v3254 = vpop.f32.mrb[0].mxu0
      %v3255 = vadd.f32 0.0, %v3254
      %v3256 = vpop.f32.mrb[0].mxu0
      %v3257 = vpop.f32.mrb[0].mxu0
      %v3258 = vadd.f32 0.0, %v3257
      %v3259 = vpop.f32.mrb[0].mxu0
      %3260 = vmatprep.mubr.bf16.mxu0 0
      %3261 = vmatmul.mubr.bf16.gmra.mrb[0].mxu0 %v3163
      %v3262 = vpop.f32.mrb[0].mxu0
      %v3263 = vadd.f32 0.0, %v3262
      %v3264 = vpop.f32.mrb[0].mxu0
      %v3265 = vpop.f32.mrb[0].mxu0
      %v3266 = vadd.f32 0.0, %v3265
      %v3267 = vpop.f32.mrb[0].mxu0
      %3268 = vmatprep.mubr.bf16.mxu0 0
      %3269 = vmatmul.mubr.bf16.gmra.mrb[0].mxu0 %v3166
      %v3270 = vpop.f32.mrb[0].mxu0
      %v3271 = vadd.f32 0.0, %v3270
      %v3272 = vpop.f32.mrb[0].mxu0
      %v3273 = vpop.f32.mrb[0].mxu0
      %v3274 = vadd.f32 0.0, %v3273
      %v3275 = vpop.f32.mrb[0].mxu0
      %3276 = vmatprep.mubr.bf16.mxu0 0
      %3277 = vmatmul.mubr.bf16.gmra.mrb[0].mxu0 %v3169
      %v3278 = vpop.f32.mrb[0].mxu0
      %v3279 = vadd.f32 0.0, %v3278
      %v3280 = vpop.f32.mrb[0].mxu0
      %v3281 = vpop.f32.mrb[0].mxu0
      %v3282 = vadd.f32 0.0, %v3281
      %v3283 = vpop.f32.mrb[0].mxu0
      %3284 = vmatprep.mubr.bf16.mxu0 0
      %3285 = vmatmul.mubr.bf16.gmra.mrb[0].mxu0 %v3172
      %v3286 = vpop.f32.mrb[0].mxu0
      %v3287 = vadd.f32 0.0, %v3286
      %v3288 = vpop.f32.mrb[0].mxu0
      %v3289 = vpop.f32.mrb[0].mxu0
      %v3290 = vadd.f32 0.0, %v3289
      %v3291 = vpop.f32.mrb[0].mxu0
      %3292 = vmatprep.mubr.bf16.mxu0 0
      %3293 = vmatmul.mubr.bf16.gmra.mrb[0].mxu0 %v3175
      %v3294 = vpop.f32.mrb[0].mxu0
      %v3295 = vadd.f32 0.0, %v3294
      %v3296 = vpop.f32.mrb[0].mxu0
      %v3297 = vpop.f32.mrb[0].mxu0
      %v3298 = vadd.f32 0.0, %v3297
      %v3299 = vpop.f32.mrb[0].mxu0
      %3300 = vmatprep.mubr.bf16.mxu0 0
      %3301 = vmatmul.mubr.bf16.gmra.mrb[0].mxu0 %v3178
      %v3302 = vpop.f32.mrb[0].mxu0
      %v3303 = vadd.f32 0.0, %v3302
      %v3304 = vpop.f32.mrb[0].mxu0
      %v3305 = vpop.f32.mrb[0].mxu0
      %v3306 = vadd.f32 0.0, %v3305
      %v3307 = vpop.f32.mrb[0].mxu0
      %3308 = vmatprep.mubr.bf16.mxu0 0
      %3309 = vmatmul.mubr.bf16.gmra.mrb[0].mxu0 %v3181
      %v3310 = vpop.f32.mrb[0].mxu0
      %v3311 = vadd.f32 0.0, %v3310
      %v3312 = vpop.f32.mrb[0].mxu0
      %v3313 = vpop.f32.mrb[0].mxu0
      %v3314 = vadd.f32 0.0, %v3313
      %v3315 = vpop.f32.mrb[0].mxu0
      %3316 = vmatprep.mubr.bf16.mxu0 0
      %3317 = vmatmul.mubr.bf16.gmra.mrb[0].mxu0 %v3184
      %v3318 = vpop.f32.mrb[0].mxu0
      %v3319 = vadd.f32 0.0, %v3318
      %v3320 = vpop.f32.mrb[0].mxu0
      %v3321 = vpop.f32.mrb[0].mxu0
      %v3322 = vadd.f32 0.0, %v3321
      %v3323 = vpop.f32.mrb[0].mxu0
      %3324 = vmatprep.mubr.bf16.mxu0 0
      %3325 = vmatmul.mubr.bf16.gmra.mrb[0].mxu0 %v3187
      %v3326 = vpop.f32.mrb[0].mxu0
      %v3327 = vadd.f32 0.0, %v3326
      %v3328 = vpop.f32.mrb[0].mxu0
      %v3329 = vpop.f32.mrb[0].mxu0
      %v3330 = vadd.f32 0.0, %v3329
      %v3331 = vpop.f32.mrb[0].mxu0
      %3332 = vmatprep.mubr.bf16.mxu0 0
      %3333 = vmatmul.mubr.bf16.gmra.mrb[0].mxu0 %v3190
      %v3334 = vpop.f32.mrb[0].mxu0
      %v3335 = vadd.f32 0.0, %v3334
      %v3336 = vpop.f32.mrb[0].mxu0
      %v3337 = vpop.f32.mrb[0].mxu0
      %v3338 = vadd.f32 0.0, %v3337
      %v3339 = vpop.f32.mrb[0].mxu0
      %3340 = vmatprep.mubr.bf16.mxu0 0
      %3341 = vmatmul.mubr.bf16.gmra.mrb[0].mxu0 %v3193
      %v3342 = vpop.f32.mrb[0].mxu0
      %v3343 = vadd.f32 0.0, %v3342
      %v3344 = vpop.f32.mrb[0].mxu0
      %v3345 = vpop.f32.mrb[0].mxu0
      %v3346 = vadd.f32 0.0, %v3345
      %v3347 = vpop.f32.mrb[0].mxu0
      %3348 = vmatprep.mubr.bf16.mxu0 0
      %3349 = vmatmul.mubr.bf16.gmra.mrb[0].mxu0 %v3196
      %v3350 = vpop.f32.mrb[0].mxu0
      %v3351 = vadd.f32 0.0, %v3350
      %v3352 = vpop.f32.mrb[0].mxu0
      %v3353 = vpop.f32.mrb[0].mxu0
      %v3354 = vadd.f32 0.0, %v3353
      %v3355 = vpop.f32.mrb[0].mxu0
      %3356 = vmatprep.mubr.bf16.mxu0 0
      %3357 = vmatmul.mubr.bf16.gmra.mrb[0].mxu0 %v3199
      %v3358 = vpop.f32.mrb[0].mxu0
      %v3359 = vadd.f32 0.0, %v3358
      %v3360 = vpop.f32.mrb[0].mxu0
      %v3361 = vpop.f32.mrb[0].mxu0
      %v3362 = vadd.f32 0.0, %v3361
      %v3363 = vpop.f32.mrb[0].mxu0
      %3364 = vdwg.mxu0
      %v3365 = vadd.f32 %v2895, %v3239
      %v3366 = vadd.f32 %v2896, %v3242
      %v3367 = vadd.f32 %v2897, %v3247
      %v3368 = vadd.f32 %v2898, %v3250
      %v3369 = vadd.f32 %v2899, %v3255
      %v3370 = vadd.f32 %v2900, %v3258
      %v3371 = vadd.f32 %v2901, %v3263
      %v3372 = vadd.f32 %v2902, %v3266
      %v3373 = vadd.f32 %v2903, %v3271
      %v3374 = vadd.f32 %v2904, %v3274
      %v3375 = vadd.f32 %v2905, %v3279
      %v3376 = vadd.f32 %v2906, %v3282
      %v3377 = vadd.f32 %v2907, %v3287
      %v3378 = vadd.f32 %v2908, %v3290
      %v3379 = vadd.f32 %v2909, %v3295
      %v3380 = vadd.f32 %v2910, %v3298
      %v3381 = vadd.f32 %v2911, %v3303
      %v3382 = vadd.f32 %v2912, %v3306
      %v3383 = vadd.f32 %v2913, %v3311
      %v3384 = vadd.f32 %v2914, %v3314
      %v3385 = vadd.f32 %v2915, %v3319
      %v3386 = vadd.f32 %v2916, %v3322
      %v3387 = vadd.f32 %v2917, %v3327
      %v3388 = vadd.f32 %v2918, %v3330
      %v3389 = vadd.f32 %v2919, %v3335
      %v3390 = vadd.f32 %v2920, %v3338
      %v3391 = vadd.f32 %v2921, %v3343
      %v3392 = vadd.f32 %v2922, %v3346
      %v3393 = vadd.f32 %v2923, %v3351
      %v3394 = vadd.f32 %v2924, %v3354
      %v3395 = vadd.f32 %v2925, %v3359
      %v3396 = vadd.f32 %v2926, %v3362
      %v3397 = vld [vmem:[%s373] sm:$0xf]
      %v3398 = vld [vmem:[%s373 + $0x4] sm:$0xf]
      %v3399 = vld [vmem:[%s373 + $0xc] sm:$0xf]
      %v3400 = vld [vmem:[%s373 + $0x10] sm:$0xf]
      %v3401 = vld [vmem:[%s373 + $0x18] sm:$0xf]
      %v3402 = vld [vmem:[%s373 + $0x1c] sm:$0xf]
      %v3403 = vld [vmem:[%s373 + $0x24] sm:$0xf]
      %v3404 = vld [vmem:[%s373 + $0x28] sm:$0xf]
      %v3405 = vld [vmem:[%s373 + $0x30] sm:$0xf]
      %v3406 = vld [vmem:[%s373 + $0x34] sm:$0xf]
      %v3407 = vld [vmem:[%s373 + $0x3c] sm:$0xf]
      %v3408 = vld [vmem:[%s373 + $0x40] sm:$0xf]
      %v3409 = vld [vmem:[%s373 + $0x48] sm:$0xf]
      %v3410 = vld [vmem:[%s373 + $0x4c] sm:$0xf]
      %v3411 = vld [vmem:[%s373 + $0x54] sm:$0xf]
      %v3412 = vld [vmem:[%s373 + $0x58] sm:$0xf]
      %v3413 = vld [vmem:[%s373 + $0x60] sm:$0xf]
      %v3414 = vld [vmem:[%s373 + $0x64] sm:$0xf]
      %v3415 = vld [vmem:[%s373 + $0x6c] sm:$0xf]
      %v3416 = vld [vmem:[%s373 + $0x70] sm:$0xf]
      %v3417 = vld [vmem:[%s373 + $0x78] sm:$0xf]
      %v3418 = vld [vmem:[%s373 + $0x7c] sm:$0xf]
      %v3419 = vld [vmem:[%s373 + $0x84] sm:$0xf]
      %v3420 = vld [vmem:[%s373 + $0x88] sm:$0xf]
      %v3421 = vld [vmem:[%s373 + $0x90] sm:$0xf]
      %v3422 = vld [vmem:[%s373 + $0x94] sm:$0xf]
      %v3423 = vld [vmem:[%s373 + $0x9c] sm:$0xf]
      %v3424 = vld [vmem:[%s373 + $0xa0] sm:$0xf]
      %v3425 = vld [vmem:[%s373 + $0xa8] sm:$0xf]
      %v3426 = vld [vmem:[%s373 + $0xac] sm:$0xf]
      %v3427 = vld [vmem:[%s373 + $0xb4] sm:$0xf]
      %v3428 = vld [vmem:[%s373 + $0xb8] sm:$0xf]
      %s3429 = scalar_lea.vmem %s3, 12
      %v3430 = vld [vmem:[%s3429] sm:$0x3]
      %v3463 = vunpack.c.l.b16 %v3397
      %v3464 = vunpack.c.l.b16 %v3398
      %v3465 = vunpack.c.l.b16 %v3399
      %v3466 = vunpack.c.l.b16 %v3400
      %v3467 = vunpack.c.l.b16 %v3401
      %v3468 = vunpack.c.l.b16 %v3402
      %v3469 = vunpack.c.l.b16 %v3403
      %v3470 = vunpack.c.l.b16 %v3404
      %v3471 = vunpack.c.l.b16 %v3405
      %v3472 = vunpack.c.l.b16 %v3406
      %v3473 = vunpack.c.l.b16 %v3407
      %v3474 = vunpack.c.l.b16 %v3408
      %v3475 = vunpack.c.l.b16 %v3409
      %v3476 = vunpack.c.l.b16 %v3410
      %v3477 = vunpack.c.l.b16 %v3411
      %v3478 = vunpack.c.l.b16 %v3412
      %v3479 = vunpack.c.l.b16 %v3413
      %v3480 = vunpack.c.l.b16 %v3414
      %v3481 = vunpack.c.l.b16 %v3415
      %v3482 = vunpack.c.l.b16 %v3416
      %v3483 = vunpack.c.l.b16 %v3417
      %v3484 = vunpack.c.l.b16 %v3418
      %v3485 = vunpack.c.l.b16 %v3419
      %v3486 = vunpack.c.l.b16 %v3420
      %v3487 = vunpack.c.l.b16 %v3421
      %v3488 = vunpack.c.l.b16 %v3422
      %v3489 = vunpack.c.l.b16 %v3423
      %v3490 = vunpack.c.l.b16 %v3424
      %v3491 = vunpack.c.l.b16 %v3425
      %v3492 = vunpack.c.l.b16 %v3426
      %v3493 = vunpack.c.l.b16 %v3427
      %v3494 = vunpack.c.l.b16 %v3428
      %v3495 = vpack.c.b16 %v3464, %v3463
      %v3496 = vpack.c.b16 %v3466, %v3465
      %v3497 = vpack.c.b16 %v3468, %v3467
      %v3498 = vpack.c.b16 %v3470, %v3469
      %v3499 = vpack.c.b16 %v3472, %v3471
      %v3500 = vpack.c.b16 %v3474, %v3473
      %v3501 = vpack.c.b16 %v3476, %v3475
      %v3502 = vpack.c.b16 %v3478, %v3477
      %v3503 = vpack.c.b16 %v3480, %v3479
      %v3504 = vpack.c.b16 %v3482, %v3481
      %v3505 = vpack.c.b16 %v3484, %v3483
      %v3506 = vpack.c.b16 %v3486, %v3485
      %v3507 = vpack.c.b16 %v3488, %v3487
      %v3508 = vpack.c.b16 %v3490, %v3489
      %v3509 = vpack.c.b16 %v3492, %v3491
      %v3510 = vpack.c.b16 %v3494, %v3493
      %v3512 = vsel %vm880, %v3495, 0
      %v3515 = vsel %vm880, %v3496, 0
      %v3518 = vsel %vm880, %v3497, 0
      %v3521 = vsel %vm880, %v3498, 0
      %v3524 = vsel %vm880, %v3499, 0
      %v3527 = vsel %vm880, %v3500, 0
      %v3530 = vsel %vm880, %v3501, 0
      %v3533 = vsel %vm880, %v3502, 0
      %v3536 = vsel %vm880, %v3503, 0
      %v3539 = vsel %vm880, %v3504, 0
      %v3542 = vsel %vm880, %v3505, 0
      %v3545 = vsel %vm880, %v3506, 0
      %v3548 = vsel %vm880, %v3507, 0
      %v3551 = vsel %vm880, %v3508, 0
      %v3554 = vsel %vm880, %v3509, 0
      %v3557 = vsel %vm880, %v3510, 0
      %v3560 = vsel %vm929, %v3430, 0
      %3562 = vmatprep.subr.bf16.mxu0 0
      %3563 = vmatpush1.bf16.msra.mxu0 %v3560
      %3564 = vmatprep.subr.bf16.mxu0 0
      %3565 = vmatpush1.bf16.msra.mxu0 0
      %3566 = vmatprep.subr.bf16.mxu0 0
      %3567 = vmatpush1.bf16.msra.mxu0 0
      %3568 = vmatprep.subr.bf16.mxu0 0
      %3569 = vmatpush1.bf16.msra.mxu0 0
      %3570 = vmatprep.subr.bf16.mxu0 0
      %3571 = vmatpush1.bf16.msra.mxu0 0
      %3572 = vmatprep.subr.bf16.mxu0 0
      %3573 = vmatpush1.bf16.msra.mxu0 0
      %3574 = vmatprep.subr.bf16.mxu0 0
      %3575 = vmatpush1.bf16.msra.mxu0 0
      %3576 = vmatprep.subr.bf16.mxu0 0
      %3577 = vmatpush1.bf16.msra.mxu0 0
      %3578 = vmatprep.subr.bf16.mxu0 0
      %3579 = vmatpush1.bf16.msra.mxu0 0
      %3580 = vmatprep.subr.bf16.mxu0 0
      %3581 = vmatpush1.bf16.msra.mxu0 0
      %3582 = vmatprep.subr.bf16.mxu0 0
      %3583 = vmatpush1.bf16.msra.mxu0 0
      %3584 = vmatprep.subr.bf16.mxu0 0
      %3585 = vmatpush1.bf16.msra.mxu0 0
      %3586 = vmatprep.subr.bf16.mxu0 0
      %3587 = vmatpush1.bf16.msra.mxu0 0
      %3588 = vmatprep.subr.bf16.mxu0 0
      %3589 = vmatpush1.bf16.msra.mxu0 0
      %3590 = vmatprep.subr.bf16.mxu0 0
      %3591 = vmatpush1.bf16.msra.mxu0 0
      %3592 = vmatprep.subr.bf16.mxu0 0
      %3593 = vmatpush1.bf16.msra.mxu0 0
      %3594 = vmatprep.mubr.bf16.mxu0 0
      %3595 = vmatmul.mubr.bf16.gmra.mrb[0].mxu0 %v3512
      %v3596 = vpop.f32.mrb[0].mxu0
      %v3597 = vadd.f32 0.0, %v3596
      %v3598 = vpop.f32.mrb[0].mxu0
      %v3599 = vpop.f32.mrb[0].mxu0
      %v3600 = vadd.f32 0.0, %v3599
      %v3601 = vpop.f32.mrb[0].mxu0
      %3602 = vmatprep.mubr.bf16.mxu0 0
      %3603 = vmatmul.mubr.bf16.gmra.mrb[0].mxu0 %v3515
      %v3604 = vpop.f32.mrb[0].mxu0
      %v3605 = vadd.f32 0.0, %v3604
      %v3606 = vpop.f32.mrb[0].mxu0
      %v3607 = vpop.f32.mrb[0].mxu0
      %v3608 = vadd.f32 0.0, %v3607
      %v3609 = vpop.f32.mrb[0].mxu0
      %3610 = vmatprep.mubr.bf16.mxu0 0
      %3611 = vmatmul.mubr.bf16.gmra.mrb[0].mxu0 %v3518
      %v3612 = vpop.f32.mrb[0].mxu0
      %v3613 = vadd.f32 0.0, %v3612
      %v3614 = vpop.f32.mrb[0].mxu0
      %v3615 = vpop.f32.mrb[0].mxu0
      %v3616 = vadd.f32 0.0, %v3615
      %v3617 = vpop.f32.mrb[0].mxu0
      %3618 = vmatprep.mubr.bf16.mxu0 0
      %3619 = vmatmul.mubr.bf16.gmra.mrb[0].mxu0 %v3521
      %v3620 = vpop.f32.mrb[0].mxu0
      %v3621 = vadd.f32 0.0, %v3620
      %v3622 = vpop.f32.mrb[0].mxu0
      %v3623 = vpop.f32.mrb[0].mxu0
      %v3624 = vadd.f32 0.0, %v3623
      %v3625 = vpop.f32.mrb[0].mxu0
      %3626 = vmatprep.mubr.bf16.mxu0 0
      %3627 = vmatmul.mubr.bf16.gmra.mrb[0].mxu0 %v3524
      %v3628 = vpop.f32.mrb[0].mxu0
      %v3629 = vadd.f32 0.0, %v3628
      %v3630 = vpop.f32.mrb[0].mxu0
      %v3631 = vpop.f32.mrb[0].mxu0
      %v3632 = vadd.f32 0.0, %v3631
      %v3633 = vpop.f32.mrb[0].mxu0
      %3634 = vmatprep.mubr.bf16.mxu0 0
      %3635 = vmatmul.mubr.bf16.gmra.mrb[0].mxu0 %v3527
      %v3636 = vpop.f32.mrb[0].mxu0
      %v3637 = vadd.f32 0.0, %v3636
      %v3638 = vpop.f32.mrb[0].mxu0
      %v3639 = vpop.f32.mrb[0].mxu0
      %v3640 = vadd.f32 0.0, %v3639
      %v3641 = vpop.f32.mrb[0].mxu0
      %3642 = vmatprep.mubr.bf16.mxu0 0
      %3643 = vmatmul.mubr.bf16.gmra.mrb[0].mxu0 %v3530
      %v3644 = vpop.f32.mrb[0].mxu0
      %v3645 = vadd.f32 0.0, %v3644
      %v3646 = vpop.f32.mrb[0].mxu0
      %v3647 = vpop.f32.mrb[0].mxu0
      %v3648 = vadd.f32 0.0, %v3647
      %v3649 = vpop.f32.mrb[0].mxu0
      %3650 = vmatprep.mubr.bf16.mxu0 0
      %3651 = vmatmul.mubr.bf16.gmra.mrb[0].mxu0 %v3533
      %v3652 = vpop.f32.mrb[0].mxu0
      %v3653 = vadd.f32 0.0, %v3652
      %v3654 = vpop.f32.mrb[0].mxu0
      %v3655 = vpop.f32.mrb[0].mxu0
      %v3656 = vadd.f32 0.0, %v3655
      %v3657 = vpop.f32.mrb[0].mxu0
      %3658 = vmatprep.mubr.bf16.mxu0 0
      %3659 = vmatmul.mubr.bf16.gmra.mrb[0].mxu0 %v3536
      %v3660 = vpop.f32.mrb[0].mxu0
      %v3661 = vadd.f32 0.0, %v3660
      %v3662 = vpop.f32.mrb[0].mxu0
      %v3663 = vpop.f32.mrb[0].mxu0
      %v3664 = vadd.f32 0.0, %v3663
      %v3665 = vpop.f32.mrb[0].mxu0
      %3666 = vmatprep.mubr.bf16.mxu0 0
      %3667 = vmatmul.mubr.bf16.gmra.mrb[0].mxu0 %v3539
      %v3668 = vpop.f32.mrb[0].mxu0
      %v3669 = vadd.f32 0.0, %v3668
      %v3670 = vpop.f32.mrb[0].mxu0
      %v3671 = vpop.f32.mrb[0].mxu0
      %v3672 = vadd.f32 0.0, %v3671
      %v3673 = vpop.f32.mrb[0].mxu0
      %3674 = vmatprep.mubr.bf16.mxu0 0
      %3675 = vmatmul.mubr.bf16.gmra.mrb[0].mxu0 %v3542
      %v3676 = vpop.f32.mrb[0].mxu0
      %v3677 = vadd.f32 0.0, %v3676
      %v3678 = vpop.f32.mrb[0].mxu0
      %v3679 = vpop.f32.mrb[0].mxu0
      %v3680 = vadd.f32 0.0, %v3679
      %v3681 = vpop.f32.mrb[0].mxu0
      %3682 = vmatprep.mubr.bf16.mxu0 0
      %3683 = vmatmul.mubr.bf16.gmra.mrb[0].mxu0 %v3545
      %v3684 = vpop.f32.mrb[0].mxu0
      %v3685 = vadd.f32 0.0, %v3684
      %v3686 = vpop.f32.mrb[0].mxu0
      %v3687 = vpop.f32.mrb[0].mxu0
      %v3688 = vadd.f32 0.0, %v3687
      %v3689 = vpop.f32.mrb[0].mxu0
      %3690 = vmatprep.mubr.bf16.mxu0 0
      %3691 = vmatmul.mubr.bf16.gmra.mrb[0].mxu0 %v3548
      %v3692 = vpop.f32.mrb[0].mxu0
      %v3693 = vadd.f32 0.0, %v3692
      %v3694 = vpop.f32.mrb[0].mxu0
      %v3695 = vpop.f32.mrb[0].mxu0
      %v3696 = vadd.f32 0.0, %v3695
      %v3697 = vpop.f32.mrb[0].mxu0
      %3698 = vmatprep.mubr.bf16.mxu0 0
      %3699 = vmatmul.mubr.bf16.gmra.mrb[0].mxu0 %v3551
      %v3700 = vpop.f32.mrb[0].mxu0
      %v3701 = vadd.f32 0.0, %v3700
      %v3702 = vpop.f32.mrb[0].mxu0
      %v3703 = vpop.f32.mrb[0].mxu0
      %v3704 = vadd.f32 0.0, %v3703
      %v3705 = vpop.f32.mrb[0].mxu0
      %3706 = vmatprep.mubr.bf16.mxu0 0
      %3707 = vmatmul.mubr.bf16.gmra.mrb[0].mxu0 %v3554
      %v3708 = vpop.f32.mrb[0].mxu0
      %v3709 = vadd.f32 0.0, %v3708
      %v3710 = vpop.f32.mrb[0].mxu0
      %v3711 = vpop.f32.mrb[0].mxu0
      %v3712 = vadd.f32 0.0, %v3711
      %v3713 = vpop.f32.mrb[0].mxu0
      %3714 = vmatprep.mubr.bf16.mxu0 0
      %3715 = vmatmul.mubr.bf16.gmra.mrb[0].mxu0 %v3557
      %v3716 = vpop.f32.mrb[0].mxu0
      %v3717 = vadd.f32 0.0, %v3716
      %v3718 = vpop.f32.mrb[0].mxu0
      %v3719 = vpop.f32.mrb[0].mxu0
      %v3720 = vadd.f32 0.0, %v3719
      %v3721 = vpop.f32.mrb[0].mxu0
      %3722 = vdwg.mxu0
      %v3723 = vadd.f32 %v3365, %v3597
      %v3724 = vadd.f32 %v3366, %v3600
      %v3725 = vadd.f32 %v3367, %v3605
      %v3726 = vadd.f32 %v3368, %v3608
      %v3727 = vadd.f32 %v3369, %v3613
      %v3728 = vadd.f32 %v3370, %v3616
      %v3729 = vadd.f32 %v3371, %v3621
      %v3730 = vadd.f32 %v3372, %v3624
      %v3731 = vadd.f32 %v3373, %v3629
      %v3732 = vadd.f32 %v3374, %v3632
      %v3733 = vadd.f32 %v3375, %v3637
      %v3734 = vadd.f32 %v3376, %v3640
      %v3735 = vadd.f32 %v3377, %v3645
      %v3736 = vadd.f32 %v3378, %v3648
      %v3737 = vadd.f32 %v3379, %v3653
      %v3738 = vadd.f32 %v3380, %v3656
      %v3739 = vadd.f32 %v3381, %v3661
      %v3740 = vadd.f32 %v3382, %v3664
      %v3741 = vadd.f32 %v3383, %v3669
      %v3742 = vadd.f32 %v3384, %v3672
      %v3743 = vadd.f32 %v3385, %v3677
      %v3744 = vadd.f32 %v3386, %v3680
      %v3745 = vadd.f32 %v3387, %v3685
      %v3746 = vadd.f32 %v3388, %v3688
      %v3747 = vadd.f32 %v3389, %v3693
      %v3748 = vadd.f32 %v3390, %v3696
      %v3749 = vadd.f32 %v3391, %v3701
      %v3750 = vadd.f32 %v3392, %v3704
      %v3751 = vadd.f32 %v3393, %v3709
      %v3752 = vadd.f32 %v3394, %v3712
      %v3753 = vadd.f32 %v3395, %v3717
      %v3754 = vadd.f32 %v3396, %v3720
      %v3755 = vld [vmem:[%s373] sm:$0xf]
      %v3756 = vld [vmem:[%s373 + $0x4] sm:$0xf]
      %v3757 = vld [vmem:[%s373 + $0x8] sm:$0x1]
      %v3758 = vld [vmem:[%s373 + $0xc] sm:$0xf]
      %v3759 = vld [vmem:[%s373 + $0x10] sm:$0xf]
      %v3760 = vld [vmem:[%s373 + $0x14] sm:$0x1]
      %v3761 = vld [vmem:[%s373 + $0x18] sm:$0xf]
      %v3762 = vld [vmem:[%s373 + $0x1c] sm:$0xf]
      %v3763 = vld [vmem:[%s373 + $0x20] sm:$0x1]
      %v3764 = vld [vmem:[%s373 + $0x24] sm:$0xf]
      %v3765 = vld [vmem:[%s373 + $0x28] sm:$0xf]
      %v3766 = vld [vmem:[%s373 + $0x2c] sm:$0x1]
      %v3767 = vld [vmem:[%s373 + $0x30] sm:$0xf]
      %v3768 = vld [vmem:[%s373 + $0x34] sm:$0xf]
      %v3769 = vld [vmem:[%s373 + $0x38] sm:$0x1]
      %v3770 = vld [vmem:[%s373 + $0x3c] sm:$0xf]
      %v3771 = vld [vmem:[%s373 + $0x40] sm:$0xf]
      %v3772 = vld [vmem:[%s373 + $0x44] sm:$0x1]
      %v3773 = vld [vmem:[%s373 + $0x48] sm:$0xf]
      %v3774 = vld [vmem:[%s373 + $0x4c] sm:$0xf]
      %v3775 = vld [vmem:[%s373 + $0x50] sm:$0x1]
      %v3776 = vld [vmem:[%s373 + $0x54] sm:$0xf]
      %v3777 = vld [vmem:[%s373 + $0x58] sm:$0xf]
      %v3778 = vld [vmem:[%s373 + $0x5c] sm:$0x1]
      %v3779 = vld [vmem:[%s373 + $0x60] sm:$0xf]
      %v3780 = vld [vmem:[%s373 + $0x64] sm:$0xf]
      %v3781 = vld [vmem:[%s373 + $0x68] sm:$0x1]
      %v3782 = vld [vmem:[%s373 + $0x6c] sm:$0xf]
      %v3783 = vld [vmem:[%s373 + $0x70] sm:$0xf]
      %v3784 = vld [vmem:[%s373 + $0x74] sm:$0x1]
      %v3785 = vld [vmem:[%s373 + $0x78] sm:$0xf]
      %v3786 = vld [vmem:[%s373 + $0x7c] sm:$0xf]
      %v3787 = vld [vmem:[%s373 + $0x80] sm:$0x1]
      %v3788 = vld [vmem:[%s373 + $0x84] sm:$0xf]
      %v3789 = vld [vmem:[%s373 + $0x88] sm:$0xf]
      %v3790 = vld [vmem:[%s373 + $0x8c] sm:$0x1]
      %v3791 = vld [vmem:[%s373 + $0x90] sm:$0xf]
      %v3792 = vld [vmem:[%s373 + $0x94] sm:$0xf]
      %v3793 = vld [vmem:[%s373 + $0x98] sm:$0x1]
      %v3794 = vld [vmem:[%s373 + $0x9c] sm:$0xf]
      %v3795 = vld [vmem:[%s373 + $0xa0] sm:$0xf]
      %v3796 = vld [vmem:[%s373 + $0xa4] sm:$0x1]
      %v3797 = vld [vmem:[%s373 + $0xa8] sm:$0xf]
      %v3798 = vld [vmem:[%s373 + $0xac] sm:$0xf]
      %v3799 = vld [vmem:[%s373 + $0xb0] sm:$0x1]
      %v3800 = vld [vmem:[%s373 + $0xb4] sm:$0xf]
      %v3801 = vld [vmem:[%s373 + $0xb8] sm:$0xf]
      %v3802 = vld [vmem:[%s373 + $0xbc] sm:$0x1]
      %v3804 = vshrl.u32 %v3755, 16
      %v3806 = vrot.slane %v3804, 4
      %v3807 = vshll.u32 %v3755, 16
      %v3809 = vrot.slane %v3807, 5
      %v3810 = vor.u32 %v3806, %v3809
      %v3811 = vrot.slane %v3810, 4
      %v3813 = vshll.u32 %v3756, 16
      %v3815 = vrot.slane %v3813, 5
      %v3816 = vsel %vm445, %v3811, %v3815
      %v3817 = vshrl.u32 %v3756, 16
      %v3819 = vrot.slane %v3817, 4
      %v3820 = vor.u32 %v3819, %v3815
      %v3821 = vrot.slane %v3820, 4
      %v3823 = vshll.u32 %v3757, 16
      %v3825 = vrot.slane %v3823, 5
      %v3826 = vsel %vm445, %v3821, %v3825
      %v3828 = vshrl.u32 %v3758, 16
      %v3830 = vrot.slane %v3828, 4
      %v3831 = vshll.u32 %v3758, 16
      %v3833 = vrot.slane %v3831, 5
      %v3834 = vor.u32 %v3830, %v3833
      %v3835 = vrot.slane %v3834, 4
      %v3837 = vshll.u32 %v3759, 16
      %v3839 = vrot.slane %v3837, 5
      %v3840 = vsel %vm445, %v3835, %v3839
      %v3841 = vshrl.u32 %v3759, 16
      %v3843 = vrot.slane %v3841, 4
      %v3844 = vor.u32 %v3843, %v3839
      %v3845 = vrot.slane %v3844, 4
      %v3847 = vshll.u32 %v3760, 16
      %v3849 = vrot.slane %v3847, 5
      %v3850 = vsel %vm445, %v3845, %v3849
      %v3852 = vshrl.u32 %v3761, 16
      %v3854 = vrot.slane %v3852, 4
      %v3855 = vshll.u32 %v3761, 16
      %v3857 = vrot.slane %v3855, 5
      %v3858 = vor.u32 %v3854, %v3857
      %v3859 = vrot.slane %v3858, 4
      %v3861 = vshll.u32 %v3762, 16
      %v3863 = vrot.slane %v3861, 5
      %v3864 = vsel %vm445, %v3859, %v3863
      %v3865 = vshrl.u32 %v3762, 16
      %v3867 = vrot.slane %v3865, 4
      %v3868 = vor.u32 %v3867, %v3863
      %v3869 = vrot.slane %v3868, 4
      %v3871 = vshll.u32 %v3763, 16
      %v3873 = vrot.slane %v3871, 5
      %v3874 = vsel %vm445, %v3869, %v3873
      %v3876 = vshrl.u32 %v3764, 16
      %v3878 = vrot.slane %v3876, 4
      %v3879 = vshll.u32 %v3764, 16
      %v3881 = vrot.slane %v3879, 5
      %v3882 = vor.u32 %v3878, %v3881
      %v3883 = vrot.slane %v3882, 4
      %v3885 = vshll.u32 %v3765, 16
      %v3887 = vrot.slane %v3885, 5
      %v3888 = vsel %vm445, %v3883, %v3887
      %v3889 = vshrl.u32 %v3765, 16
      %v3891 = vrot.slane %v3889, 4
      %v3892 = vor.u32 %v3891, %v3887
      %v3893 = vrot.slane %v3892, 4
      %v3895 = vshll.u32 %v3766, 16
      %v3897 = vrot.slane %v3895, 5
      %v3898 = vsel %vm445, %v3893, %v3897
      %v3900 = vshrl.u32 %v3767, 16
      %v3902 = vrot.slane %v3900, 4
      %v3903 = vshll.u32 %v3767, 16
      %v3905 = vrot.slane %v3903, 5
      %v3906 = vor.u32 %v3902, %v3905
      %v3907 = vrot.slane %v3906, 4
      %v3909 = vshll.u32 %v3768, 16
      %v3911 = vrot.slane %v3909, 5
      %v3912 = vsel %vm445, %v3907, %v3911
      %v3913 = vshrl.u32 %v3768, 16
      %v3915 = vrot.slane %v3913, 4
      %v3916 = vor.u32 %v3915, %v3911
      %v3917 = vrot.slane %v3916, 4
      %v3919 = vshll.u32 %v3769, 16
      %v3921 = vrot.slane %v3919, 5
      %v3922 = vsel %vm445, %v3917, %v3921
      %v3924 = vshrl.u32 %v3770, 16
      %v3926 = vrot.slane %v3924, 4
      %v3927 = vshll.u32 %v3770, 16
      %v3929 = vrot.slane %v3927, 5
      %v3930 = vor.u32 %v3926, %v3929
      %v3931 = vrot.slane %v3930, 4
      %v3933 = vshll.u32 %v3771, 16
      %v3935 = vrot.slane %v3933, 5
      %v3936 = vsel %vm445, %v3931, %v3935
      %v3937 = vshrl.u32 %v3771, 16
      %v3939 = vrot.slane %v3937, 4
      %v3940 = vor.u32 %v3939, %v3935
      %v3941 = vrot.slane %v3940, 4
      %v3943 = vshll.u32 %v3772, 16
      %v3945 = vrot.slane %v3943, 5
      %v3946 = vsel %vm445, %v3941, %v3945
      %v3948 = vshrl.u32 %v3773, 16
      %v3950 = vrot.slane %v3948, 4
      %v3951 = vshll.u32 %v3773, 16
      %v3953 = vrot.slane %v3951, 5
      %v3954 = vor.u32 %v3950, %v3953
      %v3955 = vrot.slane %v3954, 4
      %v3957 = vshll.u32 %v3774, 16
      %v3959 = vrot.slane %v3957, 5
      %v3960 = vsel %vm445, %v3955, %v3959
      %v3961 = vshrl.u32 %v3774, 16
      %v3963 = vrot.slane %v3961, 4
      %v3964 = vor.u32 %v3963, %v3959
      %v3965 = vrot.slane %v3964, 4
      %v3967 = vshll.u32 %v3775, 16
      %v3969 = vrot.slane %v3967, 5
      %v3970 = vsel %vm445, %v3965, %v3969
      %v3972 = vshrl.u32 %v3776, 16
      %v3974 = vrot.slane %v3972, 4
      %v3975 = vshll.u32 %v3776, 16
      %v3977 = vrot.slane %v3975, 5
      %v3978 = vor.u32 %v3974, %v3977
      %v3979 = vrot.slane %v3978, 4
      %v3981 = vshll.u32 %v3777, 16
      %v3983 = vrot.slane %v3981, 5
      %v3984 = vsel %vm445, %v3979, %v3983
      %v3985 = vshrl.u32 %v3777, 16
      %v3987 = vrot.slane %v3985, 4
      %v3988 = vor.u32 %v3987, %v3983
      %v3989 = vrot.slane %v3988, 4
      %v3991 = vshll.u32 %v3778, 16
      %v3993 = vrot.slane %v3991, 5
      %v3994 = vsel %vm445, %v3989, %v3993
      %v3996 = vshrl.u32 %v3779, 16
      %v3998 = vrot.slane %v3996, 4
      %v3999 = vshll.u32 %v3779, 16
      %v4001 = vrot.slane %v3999, 5
      %v4002 = vor.u32 %v3998, %v4001
      %v4003 = vrot.slane %v4002, 4
      %v4005 = vshll.u32 %v3780, 16
      %v4007 = vrot.slane %v4005, 5
      %v4008 = vsel %vm445, %v4003, %v4007
      %v4009 = vshrl.u32 %v3780, 16
      %v4011 = vrot.slane %v4009, 4
      %v4012 = vor.u32 %v4011, %v4007
      %v4013 = vrot.slane %v4012, 4
      %v4015 = vshll.u32 %v3781, 16
      %v4017 = vrot.slane %v4015, 5
      %v4018 = vsel %vm445, %v4013, %v4017
      %v4020 = vshrl.u32 %v3782, 16
      %v4022 = vrot.slane %v4020, 4
      %v4023 = vshll.u32 %v3782, 16
      %v4025 = vrot.slane %v4023, 5
      %v4026 = vor.u32 %v4022, %v4025
      %v4027 = vrot.slane %v4026, 4
      %v4029 = vshll.u32 %v3783, 16
      %v4031 = vrot.slane %v4029, 5
      %v4032 = vsel %vm445, %v4027, %v4031
      %v4033 = vshrl.u32 %v3783, 16
      %v4035 = vrot.slane %v4033, 4
      %v4036 = vor.u32 %v4035, %v4031
      %v4037 = vrot.slane %v4036, 4
      %v4039 = vshll.u32 %v3784, 16
      %v4041 = vrot.slane %v4039, 5
      %v4042 = vsel %vm445, %v4037, %v4041
      %v4044 = vshrl.u32 %v3785, 16
      %v4046 = vrot.slane %v4044, 4
      %v4047 = vshll.u32 %v3785, 16
      %v4049 = vrot.slane %v4047, 5
      %v4050 = vor.u32 %v4046, %v4049
      %v4051 = vrot.slane %v4050, 4
      %v4053 = vshll.u32 %v3786, 16
      %v4055 = vrot.slane %v4053, 5
      %v4056 = vsel %vm445, %v4051, %v4055
      %v4057 = vshrl.u32 %v3786, 16
      %v4059 = vrot.slane %v4057, 4
      %v4060 = vor.u32 %v4059, %v4055
      %v4061 = vrot.slane %v4060, 4
      %v4063 = vshll.u32 %v3787, 16
      %v4065 = vrot.slane %v4063, 5
      %v4066 = vsel %vm445, %v4061, %v4065
      %v4068 = vshrl.u32 %v3788, 16
      %v4070 = vrot.slane %v4068, 4
      %v4071 = vshll.u32 %v3788, 16
      %v4073 = vrot.slane %v4071, 5
      %v4074 = vor.u32 %v4070, %v4073
      %v4075 = vrot.slane %v4074, 4
      %v4077 = vshll.u32 %v3789, 16
      %v4079 = vrot.slane %v4077, 5
      %v4080 = vsel %vm445, %v4075, %v4079
      %v4081 = vshrl.u32 %v3789, 16
      %v4083 = vrot.slane %v4081, 4
      %v4084 = vor.u32 %v4083, %v4079
      %v4085 = vrot.slane %v4084, 4
      %v4087 = vshll.u32 %v3790, 16
      %v4089 = vrot.slane %v4087, 5
      %v4090 = vsel %vm445, %v4085, %v4089
      %v4092 = vshrl.u32 %v3791, 16
      %v4094 = vrot.slane %v4092, 4
      %v4095 = vshll.u32 %v3791, 16
      %v4097 = vrot.slane %v4095, 5
      %v4098 = vor.u32 %v4094, %v4097
      %v4099 = vrot.slane %v4098, 4
      %v4101 = vshll.u32 %v3792, 16
      %v4103 = vrot.slane %v4101, 5
      %v4104 = vsel %vm445, %v4099, %v4103
      %v4105 = vshrl.u32 %v3792, 16
      %v4107 = vrot.slane %v4105, 4
      %v4108 = vor.u32 %v4107, %v4103
      %v4109 = vrot.slane %v4108, 4
      %v4111 = vshll.u32 %v3793, 16
      %v4113 = vrot.slane %v4111, 5
      %v4114 = vsel %vm445, %v4109, %v4113
      %v4116 = vshrl.u32 %v3794, 16
      %v4118 = vrot.slane %v4116, 4
      %v4119 = vshll.u32 %v3794, 16
      %v4121 = vrot.slane %v4119, 5
      %v4122 = vor.u32 %v4118, %v4121
      %v4123 = vrot.slane %v4122, 4
      %v4125 = vshll.u32 %v3795, 16
      %v4127 = vrot.slane %v4125, 5
      %v4128 = vsel %vm445, %v4123, %v4127
      %v4129 = vshrl.u32 %v3795, 16
      %v4131 = vrot.slane %v4129, 4
      %v4132 = vor.u32 %v4131, %v4127
      %v4133 = vrot.slane %v4132, 4
      %v4135 = vshll.u32 %v3796, 16
      %v4137 = vrot.slane %v4135, 5
      %v4138 = vsel %vm445, %v4133, %v4137
      %v4140 = vshrl.u32 %v3797, 16
      %v4142 = vrot.slane %v4140, 4
      %v4143 = vshll.u32 %v3797, 16
      %v4145 = vrot.slane %v4143, 5
      %v4146 = vor.u32 %v4142, %v4145
      %v4147 = vrot.slane %v4146, 4
      %v4149 = vshll.u32 %v3798, 16
      %v4151 = vrot.slane %v4149, 5
      %v4152 = vsel %vm445, %v4147, %v4151
      %v4153 = vshrl.u32 %v3798, 16
      %v4155 = vrot.slane %v4153, 4
      %v4156 = vor.u32 %v4155, %v4151
      %v4157 = vrot.slane %v4156, 4
      %v4159 = vshll.u32 %v3799, 16
      %v4161 = vrot.slane %v4159, 5
      %v4162 = vsel %vm445, %v4157, %v4161
      %v4164 = vshrl.u32 %v3800, 16
      %v4166 = vrot.slane %v4164, 4
      %v4167 = vshll.u32 %v3800, 16
      %v4169 = vrot.slane %v4167, 5
      %v4170 = vor.u32 %v4166, %v4169
      %v4171 = vrot.slane %v4170, 4
      %v4173 = vshll.u32 %v3801, 16
      %v4175 = vrot.slane %v4173, 5
      %v4176 = vsel %vm445, %v4171, %v4175
      %v4177 = vshrl.u32 %v3801, 16
      %v4179 = vrot.slane %v4177, 4
      %v4180 = vor.u32 %v4179, %v4175
      %v4181 = vrot.slane %v4180, 4
      %v4183 = vshll.u32 %v3802, 16
      %v4185 = vrot.slane %v4183, 5
      %v4186 = vsel %vm445, %v4181, %v4185
      %s4187 = scalar_lea.vmem %s3, 14
      %v4188 = vld [vmem:[%s4187] sm:$0x3]
      %v4189 = vunpack.c.l.b16 %v3816
      %v4190 = vunpack.c.l.b16 %v3826
      %v4191 = vunpack.c.l.b16 %v3840
      %v4192 = vunpack.c.l.b16 %v3850
      %v4193 = vunpack.c.l.b16 %v3864
      %v4194 = vunpack.c.l.b16 %v3874
      %v4195 = vunpack.c.l.b16 %v3888
      %v4196 = vunpack.c.l.b16 %v3898
      %v4197 = vunpack.c.l.b16 %v3912
      %v4198 = vunpack.c.l.b16 %v3922
      %v4199 = vunpack.c.l.b16 %v3936
      %v4200 = vunpack.c.l.b16 %v3946
      %v4201 = vunpack.c.l.b16 %v3960
      %v4202 = vunpack.c.l.b16 %v3970
      %v4203 = vunpack.c.l.b16 %v3984
      %v4204 = vunpack.c.l.b16 %v3994
      %v4205 = vunpack.c.l.b16 %v4008
      %v4206 = vunpack.c.l.b16 %v4018
      %v4207 = vunpack.c.l.b16 %v4032
      %v4208 = vunpack.c.l.b16 %v4042
      %v4209 = vunpack.c.l.b16 %v4056
      %v4210 = vunpack.c.l.b16 %v4066
      %v4211 = vunpack.c.l.b16 %v4080
      %v4212 = vunpack.c.l.b16 %v4090
      %v4213 = vunpack.c.l.b16 %v4104
      %v4214 = vunpack.c.l.b16 %v4114
      %v4215 = vunpack.c.l.b16 %v4128
      %v4216 = vunpack.c.l.b16 %v4138
      %v4217 = vunpack.c.l.b16 %v4152
      %v4218 = vunpack.c.l.b16 %v4162
      %v4219 = vunpack.c.l.b16 %v4176
      %v4220 = vunpack.c.l.b16 %v4186
      %v4221 = vpack.c.b16 %v4190, %v4189
      %v4222 = vpack.c.b16 %v4192, %v4191
      %v4223 = vpack.c.b16 %v4194, %v4193
      %v4224 = vpack.c.b16 %v4196, %v4195
      %v4225 = vpack.c.b16 %v4198, %v4197
      %v4226 = vpack.c.b16 %v4200, %v4199
      %v4227 = vpack.c.b16 %v4202, %v4201
      %v4228 = vpack.c.b16 %v4204, %v4203
      %v4229 = vpack.c.b16 %v4206, %v4205
      %v4230 = vpack.c.b16 %v4208, %v4207
      %v4231 = vpack.c.b16 %v4210, %v4209
      %v4232 = vpack.c.b16 %v4212, %v4211
      %v4233 = vpack.c.b16 %v4214, %v4213
      %v4234 = vpack.c.b16 %v4216, %v4215
      %v4235 = vpack.c.b16 %v4218, %v4217
      %v4236 = vpack.c.b16 %v4220, %v4219
      %v4238 = vsel %vm880, %v4221, 0
      %v4241 = vsel %vm880, %v4222, 0
      %v4244 = vsel %vm880, %v4223, 0
      %v4247 = vsel %vm880, %v4224, 0
      %v4250 = vsel %vm880, %v4225, 0
      %v4253 = vsel %vm880, %v4226, 0
      %v4256 = vsel %vm880, %v4227, 0
      %v4259 = vsel %vm880, %v4228, 0
      %v4262 = vsel %vm880, %v4229, 0
      %v4265 = vsel %vm880, %v4230, 0
      %v4268 = vsel %vm880, %v4231, 0
      %v4271 = vsel %vm880, %v4232, 0
      %v4274 = vsel %vm880, %v4233, 0
      %v4277 = vsel %vm880, %v4234, 0
      %v4280 = vsel %vm880, %v4235, 0
      %v4283 = vsel %vm880, %v4236, 0
      %v4286 = vsel %vm929, %v4188, 0
      %4288 = vmatprep.subr.bf16.mxu0 0
      %4289 = vmatpush1.bf16.msra.mxu0 %v4286
      %4290 = vmatprep.subr.bf16.mxu0 0
      %4291 = vmatpush1.bf16.msra.mxu0 0
      %4292 = vmatprep.subr.bf16.mxu0 0
      %4293 = vmatpush1.bf16.msra.mxu0 0
      %4294 = vmatprep.subr.bf16.mxu0 0
      %4295 = vmatpush1.bf16.msra.mxu0 0
      %4296 = vmatprep.subr.bf16.mxu0 0
      %4297 = vmatpush1.bf16.msra.mxu0 0
      %4298 = vmatprep.subr.bf16.mxu0 0
      %4299 = vmatpush1.bf16.msra.mxu0 0
      %4300 = vmatprep.subr.bf16.mxu0 0
      %4301 = vmatpush1.bf16.msra.mxu0 0
      %4302 = vmatprep.subr.bf16.mxu0 0
      %4303 = vmatpush1.bf16.msra.mxu0 0
      %4304 = vmatprep.subr.bf16.mxu0 0
      %4305 = vmatpush1.bf16.msra.mxu0 0
      %4306 = vmatprep.subr.bf16.mxu0 0
      %4307 = vmatpush1.bf16.msra.mxu0 0
      %4308 = vmatprep.subr.bf16.mxu0 0
      %4309 = vmatpush1.bf16.msra.mxu0 0
      %4310 = vmatprep.subr.bf16.mxu0 0
      %4311 = vmatpush1.bf16.msra.mxu0 0
      %4312 = vmatprep.subr.bf16.mxu0 0
      %4313 = vmatpush1.bf16.msra.mxu0 0
      %4314 = vmatprep.subr.bf16.mxu0 0
      %4315 = vmatpush1.bf16.msra.mxu0 0
      %4316 = vmatprep.subr.bf16.mxu0 0
      %4317 = vmatpush1.bf16.msra.mxu0 0
      %4318 = vmatprep.subr.bf16.mxu0 0
      %4319 = vmatpush1.bf16.msra.mxu0 0
      %4320 = vmatprep.mubr.bf16.mxu0 0
      %4321 = vmatmul.mubr.bf16.gmra.mrb[0].mxu0 %v4238
      %v4322 = vpop.f32.mrb[0].mxu0
      %v4323 = vadd.f32 0.0, %v4322
      %v4324 = vpop.f32.mrb[0].mxu0
      %v4325 = vpop.f32.mrb[0].mxu0
      %v4326 = vadd.f32 0.0, %v4325
      %v4327 = vpop.f32.mrb[0].mxu0
      %4328 = vmatprep.mubr.bf16.mxu0 0
      %4329 = vmatmul.mubr.bf16.gmra.mrb[0].mxu0 %v4241
      %v4330 = vpop.f32.mrb[0].mxu0
      %v4331 = vadd.f32 0.0, %v4330
      %v4332 = vpop.f32.mrb[0].mxu0
      %v4333 = vpop.f32.mrb[0].mxu0
      %v4334 = vadd.f32 0.0, %v4333
      %v4335 = vpop.f32.mrb[0].mxu0
      %4336 = vmatprep.mubr.bf16.mxu0 0
      %4337 = vmatmul.mubr.bf16.gmra.mrb[0].mxu0 %v4244
      %v4338 = vpop.f32.mrb[0].mxu0
      %v4339 = vadd.f32 0.0, %v4338
      %v4340 = vpop.f32.mrb[0].mxu0
      %v4341 = vpop.f32.mrb[0].mxu0
      %v4342 = vadd.f32 0.0, %v4341
      %v4343 = vpop.f32.mrb[0].mxu0
      %4344 = vmatprep.mubr.bf16.mxu0 0
      %4345 = vmatmul.mubr.bf16.gmra.mrb[0].mxu0 %v4247
      %v4346 = vpop.f32.mrb[0].mxu0
      %v4347 = vadd.f32 0.0, %v4346
      %v4348 = vpop.f32.mrb[0].mxu0
      %v4349 = vpop.f32.mrb[0].mxu0
      %v4350 = vadd.f32 0.0, %v4349
      %v4351 = vpop.f32.mrb[0].mxu0
      %4352 = vmatprep.mubr.bf16.mxu0 0
      %4353 = vmatmul.mubr.bf16.gmra.mrb[0].mxu0 %v4250
      %v4354 = vpop.f32.mrb[0].mxu0
      %v4355 = vadd.f32 0.0, %v4354
      %v4356 = vpop.f32.mrb[0].mxu0
      %v4357 = vpop.f32.mrb[0].mxu0
      %v4358 = vadd.f32 0.0, %v4357
      %v4359 = vpop.f32.mrb[0].mxu0
      %4360 = vmatprep.mubr.bf16.mxu0 0
      %4361 = vmatmul.mubr.bf16.gmra.mrb[0].mxu0 %v4253
      %v4362 = vpop.f32.mrb[0].mxu0
      %v4363 = vadd.f32 0.0, %v4362
      %v4364 = vpop.f32.mrb[0].mxu0
      %v4365 = vpop.f32.mrb[0].mxu0
      %v4366 = vadd.f32 0.0, %v4365
      %v4367 = vpop.f32.mrb[0].mxu0
      %4368 = vmatprep.mubr.bf16.mxu0 0
      %4369 = vmatmul.mubr.bf16.gmra.mrb[0].mxu0 %v4256
      %v4370 = vpop.f32.mrb[0].mxu0
      %v4371 = vadd.f32 0.0, %v4370
      %v4372 = vpop.f32.mrb[0].mxu0
      %v4373 = vpop.f32.mrb[0].mxu0
      %v4374 = vadd.f32 0.0, %v4373
      %v4375 = vpop.f32.mrb[0].mxu0
      %4376 = vmatprep.mubr.bf16.mxu0 0
      %4377 = vmatmul.mubr.bf16.gmra.mrb[0].mxu0 %v4259
      %v4378 = vpop.f32.mrb[0].mxu0
      %v4379 = vadd.f32 0.0, %v4378
      %v4380 = vpop.f32.mrb[0].mxu0
      %v4381 = vpop.f32.mrb[0].mxu0
      %v4382 = vadd.f32 0.0, %v4381
      %v4383 = vpop.f32.mrb[0].mxu0
      %4384 = vmatprep.mubr.bf16.mxu0 0
      %4385 = vmatmul.mubr.bf16.gmra.mrb[0].mxu0 %v4262
      %v4386 = vpop.f32.mrb[0].mxu0
      %v4387 = vadd.f32 0.0, %v4386
      %v4388 = vpop.f32.mrb[0].mxu0
      %v4389 = vpop.f32.mrb[0].mxu0
      %v4390 = vadd.f32 0.0, %v4389
      %v4391 = vpop.f32.mrb[0].mxu0
      %4392 = vmatprep.mubr.bf16.mxu0 0
      %4393 = vmatmul.mubr.bf16.gmra.mrb[0].mxu0 %v4265
      %v4394 = vpop.f32.mrb[0].mxu0
      %v4395 = vadd.f32 0.0, %v4394
      %v4396 = vpop.f32.mrb[0].mxu0
      %v4397 = vpop.f32.mrb[0].mxu0
      %v4398 = vadd.f32 0.0, %v4397
      %v4399 = vpop.f32.mrb[0].mxu0
      %4400 = vmatprep.mubr.bf16.mxu0 0
      %4401 = vmatmul.mubr.bf16.gmra.mrb[0].mxu0 %v4268
      %v4402 = vpop.f32.mrb[0].mxu0
      %v4403 = vadd.f32 0.0, %v4402
      %v4404 = vpop.f32.mrb[0].mxu0
      %v4405 = vpop.f32.mrb[0].mxu0
      %v4406 = vadd.f32 0.0, %v4405
      %v4407 = vpop.f32.mrb[0].mxu0
      %4408 = vmatprep.mubr.bf16.mxu0 0
      %4409 = vmatmul.mubr.bf16.gmra.mrb[0].mxu0 %v4271
      %v4410 = vpop.f32.mrb[0].mxu0
      %v4411 = vadd.f32 0.0, %v4410
      %v4412 = vpop.f32.mrb[0].mxu0
      %v4413 = vpop.f32.mrb[0].mxu0
      %v4414 = vadd.f32 0.0, %v4413
      %v4415 = vpop.f32.mrb[0].mxu0
      %4416 = vmatprep.mubr.bf16.mxu0 0
      %4417 = vmatmul.mubr.bf16.gmra.mrb[0].mxu0 %v4274
      %v4418 = vpop.f32.mrb[0].mxu0
      %v4419 = vadd.f32 0.0, %v4418
      %v4420 = vpop.f32.mrb[0].mxu0
      %v4421 = vpop.f32.mrb[0].mxu0
      %v4422 = vadd.f32 0.0, %v4421
      %v4423 = vpop.f32.mrb[0].mxu0
      %4424 = vmatprep.mubr.bf16.mxu0 0
      %4425 = vmatmul.mubr.bf16.gmra.mrb[0].mxu0 %v4277
      %v4426 = vpop.f32.mrb[0].mxu0
      %v4427 = vadd.f32 0.0, %v4426
      %v4428 = vpop.f32.mrb[0].mxu0
      %v4429 = vpop.f32.mrb[0].mxu0
      %v4430 = vadd.f32 0.0, %v4429
      %v4431 = vpop.f32.mrb[0].mxu0
      %4432 = vmatprep.mubr.bf16.mxu0 0
      %4433 = vmatmul.mubr.bf16.gmra.mrb[0].mxu0 %v4280
      %v4434 = vpop.f32.mrb[0].mxu0
      %v4435 = vadd.f32 0.0, %v4434
      %v4436 = vpop.f32.mrb[0].mxu0
      %v4437 = vpop.f32.mrb[0].mxu0
      %v4438 = vadd.f32 0.0, %v4437
      %v4439 = vpop.f32.mrb[0].mxu0
      %4440 = vmatprep.mubr.bf16.mxu0 0
      %4441 = vmatmul.mubr.bf16.gmra.mrb[0].mxu0 %v4283
      %v4442 = vpop.f32.mrb[0].mxu0
      %v4443 = vadd.f32 0.0, %v4442
      %v4444 = vpop.f32.mrb[0].mxu0
      %v4445 = vpop.f32.mrb[0].mxu0
      %v4446 = vadd.f32 0.0, %v4445
      %v4447 = vpop.f32.mrb[0].mxu0
      %4448 = vdwg.mxu0
      %v4449 = vadd.f32 %v3723, %v4323
      %v4450 = vadd.f32 %v3724, %v4326
      %v4451 = vadd.f32 %v3725, %v4331
      %v4452 = vadd.f32 %v3726, %v4334
      %v4453 = vadd.f32 %v3727, %v4339
      %v4454 = vadd.f32 %v3728, %v4342
      %v4455 = vadd.f32 %v3729, %v4347
      %v4456 = vadd.f32 %v3730, %v4350
      %v4457 = vadd.f32 %v3731, %v4355
      %v4458 = vadd.f32 %v3732, %v4358
      %v4459 = vadd.f32 %v3733, %v4363
      %v4460 = vadd.f32 %v3734, %v4366
      %v4461 = vadd.f32 %v3735, %v4371
      %v4462 = vadd.f32 %v3736, %v4374
      %v4463 = vadd.f32 %v3737, %v4379
      %v4464 = vadd.f32 %v3738, %v4382
      %v4465 = vadd.f32 %v3739, %v4387
      %v4466 = vadd.f32 %v3740, %v4390
      %v4467 = vadd.f32 %v3741, %v4395
      %v4468 = vadd.f32 %v3742, %v4398
      %v4469 = vadd.f32 %v3743, %v4403
      %v4470 = vadd.f32 %v3744, %v4406
      %v4471 = vadd.f32 %v3745, %v4411
      %v4472 = vadd.f32 %v3746, %v4414
      %v4473 = vadd.f32 %v3747, %v4419
      %v4474 = vadd.f32 %v3748, %v4422
      %v4475 = vadd.f32 %v3749, %v4427
      %v4476 = vadd.f32 %v3750, %v4430
      %v4477 = vadd.f32 %v3751, %v4435
      %v4478 = vadd.f32 %v3752, %v4438
      %v4479 = vadd.f32 %v3753, %v4443
      %v4480 = vadd.f32 %v3754, %v4446
      %v4481 = vld [vmem:[%s373] sm:$0xe]
      %v4482 = vld [vmem:[%s373 + $0xc] sm:$0xe]
      %v4483 = vld [vmem:[%s373 + $0x18] sm:$0xe]
      %v4484 = vld [vmem:[%s373 + $0x24] sm:$0xe]
      %v4485 = vld [vmem:[%s373 + $0x30] sm:$0xe]
      %v4486 = vld [vmem:[%s373 + $0x3c] sm:$0xe]
      %v4487 = vld [vmem:[%s373 + $0x48] sm:$0xe]
      %v4488 = vld [vmem:[%s373 + $0x54] sm:$0xe]
      %v4489 = vld [vmem:[%s373 + $0x60] sm:$0xe]
      %v4490 = vld [vmem:[%s373 + $0x6c] sm:$0xe]
      %v4491 = vld [vmem:[%s373 + $0x78] sm:$0xe]
      %v4492 = vld [vmem:[%s373 + $0x84] sm:$0xe]
      %v4493 = vld [vmem:[%s373 + $0x90] sm:$0xe]
      %v4494 = vld [vmem:[%s373 + $0x9c] sm:$0xe]
      %v4495 = vld [vmem:[%s373 + $0xa8] sm:$0xe]
      %v4496 = vld [vmem:[%s373 + $0xb4] sm:$0xe]
      %v4545 = vrot.slane %v4481, 5
      %v4546 = vrot.slane %v4545, 4
      %v4547 = vrot.slane %v3756, 5
      %v4548 = vsel %vm1436, %v4546, %v4547
      %v4549 = vrot.slane %v4547, 4
      %v4550 = vrot.slane %v3757, 5
      %v4551 = vsel %vm1436, %v4549, %v4550
      %v4552 = vrot.slane %v4482, 5
      %v4553 = vrot.slane %v4552, 4
      %v4554 = vrot.slane %v3759, 5
      %v4555 = vsel %vm1436, %v4553, %v4554
      %v4556 = vrot.slane %v4554, 4
      %v4557 = vrot.slane %v3760, 5
      %v4558 = vsel %vm1436, %v4556, %v4557
      %v4559 = vrot.slane %v4483, 5
      %v4560 = vrot.slane %v4559, 4
      %v4561 = vrot.slane %v3762, 5
      %v4562 = vsel %vm1436, %v4560, %v4561
      %v4563 = vrot.slane %v4561, 4
      %v4564 = vrot.slane %v3763, 5
      %v4565 = vsel %vm1436, %v4563, %v4564
      %v4566 = vrot.slane %v4484, 5
      %v4567 = vrot.slane %v4566, 4
      %v4568 = vrot.slane %v3765, 5
      %v4569 = vsel %vm1436, %v4567, %v4568
      %v4570 = vrot.slane %v4568, 4
      %v4571 = vrot.slane %v3766, 5
      %v4572 = vsel %vm1436, %v4570, %v4571
      %v4573 = vrot.slane %v4485, 5
      %v4574 = vrot.slane %v4573, 4
      %v4575 = vrot.slane %v3768, 5
      %v4576 = vsel %vm1436, %v4574, %v4575
      %v4577 = vrot.slane %v4575, 4
      %v4578 = vrot.slane %v3769, 5
      %v4579 = vsel %vm1436, %v4577, %v4578
      %v4580 = vrot.slane %v4486, 5
      %v4581 = vrot.slane %v4580, 4
      %v4582 = vrot.slane %v3771, 5
      %v4583 = vsel %vm1436, %v4581, %v4582
      %v4584 = vrot.slane %v4582, 4
      %v4585 = vrot.slane %v3772, 5
      %v4586 = vsel %vm1436, %v4584, %v4585
      %v4587 = vrot.slane %v4487, 5
      %v4588 = vrot.slane %v4587, 4
      %v4589 = vrot.slane %v3774, 5
      %v4590 = vsel %vm1436, %v4588, %v4589
      %v4591 = vrot.slane %v4589, 4
      %v4592 = vrot.slane %v3775, 5
      %v4593 = vsel %vm1436, %v4591, %v4592
      %v4594 = vrot.slane %v4488, 5
      %v4595 = vrot.slane %v4594, 4
      %v4596 = vrot.slane %v3777, 5
      %v4597 = vsel %vm1436, %v4595, %v4596
      %v4598 = vrot.slane %v4596, 4
      %v4599 = vrot.slane %v3778, 5
      %v4600 = vsel %vm1436, %v4598, %v4599
      %v4601 = vrot.slane %v4489, 5
      %v4602 = vrot.slane %v4601, 4
      %v4603 = vrot.slane %v3780, 5
      %v4604 = vsel %vm1436, %v4602, %v4603
      %v4605 = vrot.slane %v4603, 4
      %v4606 = vrot.slane %v3781, 5
      %v4607 = vsel %vm1436, %v4605, %v4606
      %v4608 = vrot.slane %v4490, 5
      %v4609 = vrot.slane %v4608, 4
      %v4610 = vrot.slane %v3783, 5
      %v4611 = vsel %vm1436, %v4609, %v4610
      %v4612 = vrot.slane %v4610, 4
      %v4613 = vrot.slane %v3784, 5
      %v4614 = vsel %vm1436, %v4612, %v4613
      %v4615 = vrot.slane %v4491, 5
      %v4616 = vrot.slane %v4615, 4
      %v4617 = vrot.slane %v3786, 5
      %v4618 = vsel %vm1436, %v4616, %v4617
      %v4619 = vrot.slane %v4617, 4
      %v4620 = vrot.slane %v3787, 5
      %v4621 = vsel %vm1436, %v4619, %v4620
      %v4622 = vrot.slane %v4492, 5
      %v4623 = vrot.slane %v4622, 4
      %v4624 = vrot.slane %v3789, 5
      %v4625 = vsel %vm1436, %v4623, %v4624
      %v4626 = vrot.slane %v4624, 4
      %v4627 = vrot.slane %v3790, 5
      %v4628 = vsel %vm1436, %v4626, %v4627
      %v4629 = vrot.slane %v4493, 5
      %v4630 = vrot.slane %v4629, 4
      %v4631 = vrot.slane %v3792, 5
      %v4632 = vsel %vm1436, %v4630, %v4631
      %v4633 = vrot.slane %v4631, 4
      %v4634 = vrot.slane %v3793, 5
      %v4635 = vsel %vm1436, %v4633, %v4634
      %v4636 = vrot.slane %v4494, 5
      %v4637 = vrot.slane %v4636, 4
      %v4638 = vrot.slane %v3795, 5
      %v4639 = vsel %vm1436, %v4637, %v4638
      %v4640 = vrot.slane %v4638, 4
      %v4641 = vrot.slane %v3796, 5
      %v4642 = vsel %vm1436, %v4640, %v4641
      %v4643 = vrot.slane %v4495, 5
      %v4644 = vrot.slane %v4643, 4
      %v4645 = vrot.slane %v3798, 5
      %v4646 = vsel %vm1436, %v4644, %v4645
      %v4647 = vrot.slane %v4645, 4
      %v4648 = vrot.slane %v3799, 5
      %v4649 = vsel %vm1436, %v4647, %v4648
      %v4650 = vrot.slane %v4496, 5
      %v4651 = vrot.slane %v4650, 4
      %v4652 = vrot.slane %v3801, 5
      %v4653 = vsel %vm1436, %v4651, %v4652
      %v4654 = vrot.slane %v4652, 4
      %v4655 = vrot.slane %v3802, 5
      %v4656 = vsel %vm1436, %v4654, %v4655
      %s4657 = scalar_lea.vmem %s3, 16
      %v4658 = vld [vmem:[%s4657] sm:$0x3]
      %v4659 = vunpack.c.l.b16 %v4548
      %v4660 = vunpack.c.l.b16 %v4551
      %v4661 = vunpack.c.l.b16 %v4555
      %v4662 = vunpack.c.l.b16 %v4558
      %v4663 = vunpack.c.l.b16 %v4562
      %v4664 = vunpack.c.l.b16 %v4565
      %v4665 = vunpack.c.l.b16 %v4569
      %v4666 = vunpack.c.l.b16 %v4572
      %v4667 = vunpack.c.l.b16 %v4576
      %v4668 = vunpack.c.l.b16 %v4579
      %v4669 = vunpack.c.l.b16 %v4583
      %v4670 = vunpack.c.l.b16 %v4586
      %v4671 = vunpack.c.l.b16 %v4590
      %v4672 = vunpack.c.l.b16 %v4593
      %v4673 = vunpack.c.l.b16 %v4597
      %v4674 = vunpack.c.l.b16 %v4600
      %v4675 = vunpack.c.l.b16 %v4604
      %v4676 = vunpack.c.l.b16 %v4607
      %v4677 = vunpack.c.l.b16 %v4611
      %v4678 = vunpack.c.l.b16 %v4614
      %v4679 = vunpack.c.l.b16 %v4618
      %v4680 = vunpack.c.l.b16 %v4621
      %v4681 = vunpack.c.l.b16 %v4625
      %v4682 = vunpack.c.l.b16 %v4628
      %v4683 = vunpack.c.l.b16 %v4632
      %v4684 = vunpack.c.l.b16 %v4635
      %v4685 = vunpack.c.l.b16 %v4639
      %v4686 = vunpack.c.l.b16 %v4642
      %v4687 = vunpack.c.l.b16 %v4646
      %v4688 = vunpack.c.l.b16 %v4649
      %v4689 = vunpack.c.l.b16 %v4653
      %v4690 = vunpack.c.l.b16 %v4656
      %v4691 = vpack.c.b16 %v4660, %v4659
      %v4692 = vpack.c.b16 %v4662, %v4661
      %v4693 = vpack.c.b16 %v4664, %v4663
      %v4694 = vpack.c.b16 %v4666, %v4665
      %v4695 = vpack.c.b16 %v4668, %v4667
      %v4696 = vpack.c.b16 %v4670, %v4669
      %v4697 = vpack.c.b16 %v4672, %v4671
      %v4698 = vpack.c.b16 %v4674, %v4673
      %v4699 = vpack.c.b16 %v4676, %v4675
      %v4700 = vpack.c.b16 %v4678, %v4677
      %v4701 = vpack.c.b16 %v4680, %v4679
      %v4702 = vpack.c.b16 %v4682, %v4681
      %v4703 = vpack.c.b16 %v4684, %v4683
      %v4704 = vpack.c.b16 %v4686, %v4685
      %v4705 = vpack.c.b16 %v4688, %v4687
      %v4706 = vpack.c.b16 %v4690, %v4689
      %v4708 = vsel %vm880, %v4691, 0
      %v4711 = vsel %vm880, %v4692, 0
      %v4714 = vsel %vm880, %v4693, 0
      %v4717 = vsel %vm880, %v4694, 0
      %v4720 = vsel %vm880, %v4695, 0
      %v4723 = vsel %vm880, %v4696, 0
      %v4726 = vsel %vm880, %v4697, 0
      %v4729 = vsel %vm880, %v4698, 0
      %v4732 = vsel %vm880, %v4699, 0
      %v4735 = vsel %vm880, %v4700, 0
      %v4738 = vsel %vm880, %v4701, 0
      %v4741 = vsel %vm880, %v4702, 0
      %v4744 = vsel %vm880, %v4703, 0
      %v4747 = vsel %vm880, %v4704, 0
      %v4750 = vsel %vm880, %v4705, 0
      %v4753 = vsel %vm880, %v4706, 0
      %v4756 = vsel %vm929, %v4658, 0
      %4758 = vmatprep.subr.bf16.mxu0 0
      %4759 = vmatpush1.bf16.msra.mxu0 %v4756
      %4760 = vmatprep.subr.bf16.mxu0 0
      %4761 = vmatpush1.bf16.msra.mxu0 0
      %4762 = vmatprep.subr.bf16.mxu0 0
      %4763 = vmatpush1.bf16.msra.mxu0 0
      %4764 = vmatprep.subr.bf16.mxu0 0
      %4765 = vmatpush1.bf16.msra.mxu0 0
      %4766 = vmatprep.subr.bf16.mxu0 0
      %4767 = vmatpush1.bf16.msra.mxu0 0
      %4768 = vmatprep.subr.bf16.mxu0 0
      %4769 = vmatpush1.bf16.msra.mxu0 0
      %4770 = vmatprep.subr.bf16.mxu0 0
      %4771 = vmatpush1.bf16.msra.mxu0 0
      %4772 = vmatprep.subr.bf16.mxu0 0
      %4773 = vmatpush1.bf16.msra.mxu0 0
      %4774 = vmatprep.subr.bf16.mxu0 0
      %4775 = vmatpush1.bf16.msra.mxu0 0
      %4776 = vmatprep.subr.bf16.mxu0 0
      %4777 = vmatpush1.bf16.msra.mxu0 0
      %4778 = vmatprep.subr.bf16.mxu0 0
      %4779 = vmatpush1.bf16.msra.mxu0 0
      %4780 = vmatprep.subr.bf16.mxu0 0
      %4781 = vmatpush1.bf16.msra.mxu0 0
      %4782 = vmatprep.subr.bf16.mxu0 0
      %4783 = vmatpush1.bf16.msra.mxu0 0
      %4784 = vmatprep.subr.bf16.mxu0 0
      %4785 = vmatpush1.bf16.msra.mxu0 0
      %4786 = vmatprep.subr.bf16.mxu0 0
      %4787 = vmatpush1.bf16.msra.mxu0 0
      %4788 = vmatprep.subr.bf16.mxu0 0
      %4789 = vmatpush1.bf16.msra.mxu0 0
      %4790 = vmatprep.mubr.bf16.mxu0 0
      %4791 = vmatmul.mubr.bf16.gmra.mrb[0].mxu0 %v4708
      %v4792 = vpop.f32.mrb[0].mxu0
      %v4793 = vadd.f32 0.0, %v4792
      %v4794 = vpop.f32.mrb[0].mxu0
      %v4795 = vpop.f32.mrb[0].mxu0
      %v4796 = vadd.f32 0.0, %v4795
      %v4797 = vpop.f32.mrb[0].mxu0
      %4798 = vmatprep.mubr.bf16.mxu0 0
      %4799 = vmatmul.mubr.bf16.gmra.mrb[0].mxu0 %v4711
      %v4800 = vpop.f32.mrb[0].mxu0
      %v4801 = vadd.f32 0.0, %v4800
      %v4802 = vpop.f32.mrb[0].mxu0
      %v4803 = vpop.f32.mrb[0].mxu0
      %v4804 = vadd.f32 0.0, %v4803
      %v4805 = vpop.f32.mrb[0].mxu0
      %4806 = vmatprep.mubr.bf16.mxu0 0
      %4807 = vmatmul.mubr.bf16.gmra.mrb[0].mxu0 %v4714
      %v4808 = vpop.f32.mrb[0].mxu0
      %v4809 = vadd.f32 0.0, %v4808
      %v4810 = vpop.f32.mrb[0].mxu0
      %v4811 = vpop.f32.mrb[0].mxu0
      %v4812 = vadd.f32 0.0, %v4811
      %v4813 = vpop.f32.mrb[0].mxu0
      %4814 = vmatprep.mubr.bf16.mxu0 0
      %4815 = vmatmul.mubr.bf16.gmra.mrb[0].mxu0 %v4717
      %v4816 = vpop.f32.mrb[0].mxu0
      %v4817 = vadd.f32 0.0, %v4816
      %v4818 = vpop.f32.mrb[0].mxu0
      %v4819 = vpop.f32.mrb[0].mxu0
      %v4820 = vadd.f32 0.0, %v4819
      %v4821 = vpop.f32.mrb[0].mxu0
      %4822 = vmatprep.mubr.bf16.mxu0 0
      %4823 = vmatmul.mubr.bf16.gmra.mrb[0].mxu0 %v4720
      %v4824 = vpop.f32.mrb[0].mxu0
      %v4825 = vadd.f32 0.0, %v4824
      %v4826 = vpop.f32.mrb[0].mxu0
      %v4827 = vpop.f32.mrb[0].mxu0
      %v4828 = vadd.f32 0.0, %v4827
      %v4829 = vpop.f32.mrb[0].mxu0
      %4830 = vmatprep.mubr.bf16.mxu0 0
      %4831 = vmatmul.mubr.bf16.gmra.mrb[0].mxu0 %v4723
      %v4832 = vpop.f32.mrb[0].mxu0
      %v4833 = vadd.f32 0.0, %v4832
      %v4834 = vpop.f32.mrb[0].mxu0
      %v4835 = vpop.f32.mrb[0].mxu0
      %v4836 = vadd.f32 0.0, %v4835
      %v4837 = vpop.f32.mrb[0].mxu0
      %4838 = vmatprep.mubr.bf16.mxu0 0
      %4839 = vmatmul.mubr.bf16.gmra.mrb[0].mxu0 %v4726
      %v4840 = vpop.f32.mrb[0].mxu0
      %v4841 = vadd.f32 0.0, %v4840
      %v4842 = vpop.f32.mrb[0].mxu0
      %v4843 = vpop.f32.mrb[0].mxu0
      %v4844 = vadd.f32 0.0, %v4843
      %v4845 = vpop.f32.mrb[0].mxu0
      %4846 = vmatprep.mubr.bf16.mxu0 0
      %4847 = vmatmul.mubr.bf16.gmra.mrb[0].mxu0 %v4729
      %v4848 = vpop.f32.mrb[0].mxu0
      %v4849 = vadd.f32 0.0, %v4848
      %v4850 = vpop.f32.mrb[0].mxu0
      %v4851 = vpop.f32.mrb[0].mxu0
      %v4852 = vadd.f32 0.0, %v4851
      %v4853 = vpop.f32.mrb[0].mxu0
      %4854 = vmatprep.mubr.bf16.mxu0 0
      %4855 = vmatmul.mubr.bf16.gmra.mrb[0].mxu0 %v4732
      %v4856 = vpop.f32.mrb[0].mxu0
      %v4857 = vadd.f32 0.0, %v4856
      %v4858 = vpop.f32.mrb[0].mxu0
      %v4859 = vpop.f32.mrb[0].mxu0
      %v4860 = vadd.f32 0.0, %v4859
      %v4861 = vpop.f32.mrb[0].mxu0
      %4862 = vmatprep.mubr.bf16.mxu0 0
      %4863 = vmatmul.mubr.bf16.gmra.mrb[0].mxu0 %v4735
      %v4864 = vpop.f32.mrb[0].mxu0
      %v4865 = vadd.f32 0.0, %v4864
      %v4866 = vpop.f32.mrb[0].mxu0
      %v4867 = vpop.f32.mrb[0].mxu0
      %v4868 = vadd.f32 0.0, %v4867
      %v4869 = vpop.f32.mrb[0].mxu0
      %4870 = vmatprep.mubr.bf16.mxu0 0
      %4871 = vmatmul.mubr.bf16.gmra.mrb[0].mxu0 %v4738
      %v4872 = vpop.f32.mrb[0].mxu0
      %v4873 = vadd.f32 0.0, %v4872
      %v4874 = vpop.f32.mrb[0].mxu0
      %v4875 = vpop.f32.mrb[0].mxu0
      %v4876 = vadd.f32 0.0, %v4875
      %v4877 = vpop.f32.mrb[0].mxu0
      %4878 = vmatprep.mubr.bf16.mxu0 0
      %4879 = vmatmul.mubr.bf16.gmra.mrb[0].mxu0 %v4741
      %v4880 = vpop.f32.mrb[0].mxu0
      %v4881 = vadd.f32 0.0, %v4880
      %v4882 = vpop.f32.mrb[0].mxu0
      %v4883 = vpop.f32.mrb[0].mxu0
      %v4884 = vadd.f32 0.0, %v4883
      %v4885 = vpop.f32.mrb[0].mxu0
      %4886 = vmatprep.mubr.bf16.mxu0 0
      %4887 = vmatmul.mubr.bf16.gmra.mrb[0].mxu0 %v4744
      %v4888 = vpop.f32.mrb[0].mxu0
      %v4889 = vadd.f32 0.0, %v4888
      %v4890 = vpop.f32.mrb[0].mxu0
      %v4891 = vpop.f32.mrb[0].mxu0
      %v4892 = vadd.f32 0.0, %v4891
      %v4893 = vpop.f32.mrb[0].mxu0
      %4894 = vmatprep.mubr.bf16.mxu0 0
      %4895 = vmatmul.mubr.bf16.gmra.mrb[0].mxu0 %v4747
      %v4896 = vpop.f32.mrb[0].mxu0
      %v4897 = vadd.f32 0.0, %v4896
      %v4898 = vpop.f32.mrb[0].mxu0
      %v4899 = vpop.f32.mrb[0].mxu0
      %v4900 = vadd.f32 0.0, %v4899
      %v4901 = vpop.f32.mrb[0].mxu0
      %4902 = vmatprep.mubr.bf16.mxu0 0
      %4903 = vmatmul.mubr.bf16.gmra.mrb[0].mxu0 %v4750
      %v4904 = vpop.f32.mrb[0].mxu0
      %v4905 = vadd.f32 0.0, %v4904
      %v4906 = vpop.f32.mrb[0].mxu0
      %v4907 = vpop.f32.mrb[0].mxu0
      %v4908 = vadd.f32 0.0, %v4907
      %v4909 = vpop.f32.mrb[0].mxu0
      %4910 = vmatprep.mubr.bf16.mxu0 0
      %4911 = vmatmul.mubr.bf16.gmra.mrb[0].mxu0 %v4753
      %v4912 = vpop.f32.mrb[0].mxu0
      %v4913 = vadd.f32 0.0, %v4912
      %v4914 = vpop.f32.mrb[0].mxu0
      %v4915 = vpop.f32.mrb[0].mxu0
      %v4916 = vadd.f32 0.0, %v4915
      %v4917 = vpop.f32.mrb[0].mxu0
      %4918 = vdwg.mxu0
      %v4919 = vadd.f32 %v4449, %v4793
      %v4920 = vadd.f32 %v4450, %v4796
      %v4921 = vadd.f32 %v4451, %v4801
      %v4922 = vadd.f32 %v4452, %v4804
      %v4923 = vadd.f32 %v4453, %v4809
      %v4924 = vadd.f32 %v4454, %v4812
      %v4925 = vadd.f32 %v4455, %v4817
      %v4926 = vadd.f32 %v4456, %v4820
      %v4927 = vadd.f32 %v4457, %v4825
      %v4928 = vadd.f32 %v4458, %v4828
      %v4929 = vadd.f32 %v4459, %v4833
      %v4930 = vadd.f32 %v4460, %v4836
      %v4931 = vadd.f32 %v4461, %v4841
      %v4932 = vadd.f32 %v4462, %v4844
      %v4933 = vadd.f32 %v4463, %v4849
      %v4934 = vadd.f32 %v4464, %v4852
      %v4935 = vadd.f32 %v4465, %v4857
      %v4936 = vadd.f32 %v4466, %v4860
      %v4937 = vadd.f32 %v4467, %v4865
      %v4938 = vadd.f32 %v4468, %v4868
      %v4939 = vadd.f32 %v4469, %v4873
      %v4940 = vadd.f32 %v4470, %v4876
      %v4941 = vadd.f32 %v4471, %v4881
      %v4942 = vadd.f32 %v4472, %v4884
      %v4943 = vadd.f32 %v4473, %v4889
      %v4944 = vadd.f32 %v4474, %v4892
      %v4945 = vadd.f32 %v4475, %v4897
      %v4946 = vadd.f32 %v4476, %v4900
      %v4947 = vadd.f32 %v4477, %v4905
      %v4948 = vadd.f32 %v4478, %v4908
      %v4949 = vadd.f32 %v4479, %v4913
      %v4950 = vadd.f32 %v4480, %v4916
      %v4951 = vld [vmem:[%s4] sm:$0x1]
      %v4953 = vlaneseq
      %v4954 = vshrl.u32 %v4953, 7
      %v4955 = vsub.s32 0, %v4954
      %v4956 = vrot.slane %v4951, %v4955
      %v4958 = vadd.f32 %v4919, %v4956
      %v4959 = vadd.f32 %v4920, %v4956
      %v4960 = vadd.f32 %v4921, %v4956
      %v4961 = vadd.f32 %v4922, %v4956
      %v4962 = vadd.f32 %v4923, %v4956
      %v4963 = vadd.f32 %v4924, %v4956
      %v4964 = vadd.f32 %v4925, %v4956
      %v4965 = vadd.f32 %v4926, %v4956
      %v4966 = vadd.f32 %v4927, %v4956
      %v4967 = vadd.f32 %v4928, %v4956
      %v4968 = vadd.f32 %v4929, %v4956
      %v4969 = vadd.f32 %v4930, %v4956
      %v4970 = vadd.f32 %v4931, %v4956
      %v4971 = vadd.f32 %v4932, %v4956
      %v4972 = vadd.f32 %v4933, %v4956
      %v4973 = vadd.f32 %v4934, %v4956
      %v4974 = vadd.f32 %v4935, %v4956
      %v4975 = vadd.f32 %v4936, %v4956
      %v4976 = vadd.f32 %v4937, %v4956
      %v4977 = vadd.f32 %v4938, %v4956
      %v4978 = vadd.f32 %v4939, %v4956
      %v4979 = vadd.f32 %v4940, %v4956
      %v4980 = vadd.f32 %v4941, %v4956
      %v4981 = vadd.f32 %v4942, %v4956
      %v4982 = vadd.f32 %v4943, %v4956
      %v4983 = vadd.f32 %v4944, %v4956
      %v4984 = vadd.f32 %v4945, %v4956
      %v4985 = vadd.f32 %v4946, %v4956
      %v4986 = vadd.f32 %v4947, %v4956
      %v4987 = vadd.f32 %v4948, %v4956
      %v4988 = vadd.f32 %v4949, %v4956
      %v4989 = vadd.f32 %v4950, %v4956
      %4990 = vst.msk [vmem:[%s384] sm:$0xff] %vm880, %v4958
      %4991 = vst.msk [vmem:[%s384 + $0x8] sm:$0xff] %vm880, %v4959
      %4992 = vst.msk [vmem:[%s384 + $0x10] sm:$0xff] %vm880, %v4960
      %4993 = vst.msk [vmem:[%s384 + $0x18] sm:$0xff] %vm880, %v4961
      %4994 = vst.msk [vmem:[%s384 + $0x20] sm:$0xff] %vm880, %v4962
      %4995 = vst.msk [vmem:[%s384 + $0x28] sm:$0xff] %vm880, %v4963
      %4996 = vst.msk [vmem:[%s384 + $0x30] sm:$0xff] %vm880, %v4964
      %4997 = vst.msk [vmem:[%s384 + $0x38] sm:$0xff] %vm880, %v4965
      %4998 = vst.msk [vmem:[%s384 + $0x40] sm:$0xff] %vm880, %v4966
      %4999 = vst.msk [vmem:[%s384 + $0x48] sm:$0xff] %vm880, %v4967
      %5000 = vst.msk [vmem:[%s384 + $0x50] sm:$0xff] %vm880, %v4968
      %5001 = vst.msk [vmem:[%s384 + $0x58] sm:$0xff] %vm880, %v4969
      %5002 = vst.msk [vmem:[%s384 + $0x60] sm:$0xff] %vm880, %v4970
      %5003 = vst.msk [vmem:[%s384 + $0x68] sm:$0xff] %vm880, %v4971
      %5004 = vst.msk [vmem:[%s384 + $0x70] sm:$0xff] %vm880, %v4972
      %5005 = vst.msk [vmem:[%s384 + $0x78] sm:$0xff] %vm880, %v4973
      %5006 = vst.msk [vmem:[%s384 + $0x80] sm:$0xff] %vm880, %v4974
      %5007 = vst.msk [vmem:[%s384 + $0x88] sm:$0xff] %vm880, %v4975
      %5008 = vst.msk [vmem:[%s384 + $0x90] sm:$0xff] %vm880, %v4976
      %5009 = vst.msk [vmem:[%s384 + $0x98] sm:$0xff] %vm880, %v4977
      %5010 = vst.msk [vmem:[%s384 + $0xa0] sm:$0xff] %vm880, %v4978
      %5011 = vst.msk [vmem:[%s384 + $0xa8] sm:$0xff] %vm880, %v4979
      %5012 = vst.msk [vmem:[%s384 + $0xb0] sm:$0xff] %vm880, %v4980
      %5013 = vst.msk [vmem:[%s384 + $0xb8] sm:$0xff] %vm880, %v4981
      %5014 = vst.msk [vmem:[%s384 + $0xc0] sm:$0xff] %vm880, %v4982
      %5015 = vst.msk [vmem:[%s384 + $0xc8] sm:$0xff] %vm880, %v4983
      %5016 = vst.msk [vmem:[%s384 + $0xd0] sm:$0xff] %vm880, %v4984
      %5017 = vst.msk [vmem:[%s384 + $0xd8] sm:$0xff] %vm880, %v4985
      %5018 = vst.msk [vmem:[%s384 + $0xe0] sm:$0xff] %vm880, %v4986
      %5019 = vst.msk [vmem:[%s384 + $0xe8] sm:$0xff] %vm880, %v4987
      %5020 = vst.msk [vmem:[%s384 + $0xf0] sm:$0xff] %vm880, %v4988
      %5021 = vst.msk [vmem:[%s384 + $0xf8] sm:$0xff] %vm880, %v4989
      %v5022 = vsel %vm880, %v4958, 0.0
      %v5023 = vsel %vm880, %v4959, 0.0
      %v5024 = vadd.f32 %v5022, %v5023
      %v5025 = vsel %vm880, %v4960, 0.0
      %v5026 = vadd.f32 %v5024, %v5025
      %v5027 = vsel %vm880, %v4961, 0.0
      %v5028 = vadd.f32 %v5026, %v5027
      %v5029 = vsel %vm880, %v4962, 0.0
      %v5030 = vadd.f32 %v5028, %v5029
      %v5031 = vsel %vm880, %v4963, 0.0
      %v5032 = vadd.f32 %v5030, %v5031
      %v5033 = vsel %vm880, %v4964, 0.0
      %v5034 = vadd.f32 %v5032, %v5033
      %v5035 = vsel %vm880, %v4965, 0.0
      %v5036 = vadd.f32 %v5034, %v5035
      %v5037 = vsel %vm880, %v4966, 0.0
      %v5038 = vadd.f32 %v5036, %v5037
      %v5039 = vsel %vm880, %v4967, 0.0
      %v5040 = vadd.f32 %v5038, %v5039
      %v5041 = vsel %vm880, %v4968, 0.0
      %v5042 = vadd.f32 %v5040, %v5041
      %v5043 = vsel %vm880, %v4969, 0.0
      %v5044 = vadd.f32 %v5042, %v5043
      %v5045 = vsel %vm880, %v4970, 0.0
      %v5046 = vadd.f32 %v5044, %v5045
      %v5047 = vsel %vm880, %v4971, 0.0
      %v5048 = vadd.f32 %v5046, %v5047
      %v5049 = vsel %vm880, %v4972, 0.0
      %v5050 = vadd.f32 %v5048, %v5049
      %v5051 = vsel %vm880, %v4973, 0.0
      %v5052 = vadd.f32 %v5050, %v5051
      %v5053 = vsel %vm880, %v4974, 0.0
      %v5054 = vadd.f32 %v5052, %v5053
      %v5055 = vsel %vm880, %v4975, 0.0
      %v5056 = vadd.f32 %v5054, %v5055
      %v5057 = vsel %vm880, %v4976, 0.0
      %v5058 = vadd.f32 %v5056, %v5057
      %v5059 = vsel %vm880, %v4977, 0.0
      %v5060 = vadd.f32 %v5058, %v5059
      %v5061 = vsel %vm880, %v4978, 0.0
      %v5062 = vadd.f32 %v5060, %v5061
      %v5063 = vsel %vm880, %v4979, 0.0
      %v5064 = vadd.f32 %v5062, %v5063
      %v5065 = vsel %vm880, %v4980, 0.0
      %v5066 = vadd.f32 %v5064, %v5065
      %v5067 = vsel %vm880, %v4981, 0.0
      %v5068 = vadd.f32 %v5066, %v5067
      %v5069 = vsel %vm880, %v4982, 0.0
      %v5070 = vadd.f32 %v5068, %v5069
      %v5071 = vsel %vm880, %v4983, 0.0
      %v5072 = vadd.f32 %v5070, %v5071
      %v5073 = vsel %vm880, %v4984, 0.0
      %v5074 = vadd.f32 %v5072, %v5073
      %v5075 = vsel %vm880, %v4985, 0.0
      %v5076 = vadd.f32 %v5074, %v5075
      %v5077 = vsel %vm880, %v4986, 0.0
      %v5078 = vadd.f32 %v5076, %v5077
      %v5079 = vsel %vm880, %v4987, 0.0
      %v5080 = vadd.f32 %v5078, %v5079
      %v5081 = vsel %vm880, %v4988, 0.0
      %v5082 = vadd.f32 %v5080, %v5081
      %v5083 = vsel %vm880, %v4989, 0.0
      %v5084 = vadd.f32 %v5082, %v5083
      %v5085 = vrot.slane %v5084, 4
      %v5086 = vadd.f32 %v5084, %v5085
      %v5087 = vrot.slane %v5086, 2
      %v5088 = vadd.f32 %v5086, %v5087
      %v5089 = vrot.slane %v5088, 1
      %v5090 = vadd.f32 %v5088, %v5089
      %vm5091 = vcmask 24576
      %5092 = vst.msk [vmem:[%s392] sm:$0x1] %vm5091, %v5090
      %v5093 = vmul.f32 %v4958, %v4958
      %v5094 = vmul.f32 %v4959, %v4959
      %v5095 = vmul.f32 %v4960, %v4960
      %v5096 = vmul.f32 %v4961, %v4961
      %v5097 = vmul.f32 %v4962, %v4962
      %v5098 = vmul.f32 %v4963, %v4963
      %v5099 = vmul.f32 %v4964, %v4964
      %v5100 = vmul.f32 %v4965, %v4965
      %v5101 = vmul.f32 %v4966, %v4966
      %v5102 = vmul.f32 %v4967, %v4967
      %v5103 = vmul.f32 %v4968, %v4968
      %v5104 = vmul.f32 %v4969, %v4969
      %v5105 = vmul.f32 %v4970, %v4970
      %v5106 = vmul.f32 %v4971, %v4971
      %v5107 = vmul.f32 %v4972, %v4972
      %v5108 = vmul.f32 %v4973, %v4973
      %v5109 = vmul.f32 %v4974, %v4974
      %v5110 = vmul.f32 %v4975, %v4975
      %v5111 = vmul.f32 %v4976, %v4976
      %v5112 = vmul.f32 %v4977, %v4977
      %v5113 = vmul.f32 %v4978, %v4978
      %v5114 = vmul.f32 %v4979, %v4979
      %v5115 = vmul.f32 %v4980, %v4980
      %v5116 = vmul.f32 %v4981, %v4981
      %v5117 = vmul.f32 %v4982, %v4982
      %v5118 = vmul.f32 %v4983, %v4983
      %v5119 = vmul.f32 %v4984, %v4984
      %v5120 = vmul.f32 %v4985, %v4985
      %v5121 = vmul.f32 %v4986, %v4986
      %v5122 = vmul.f32 %v4987, %v4987
      %v5123 = vmul.f32 %v4988, %v4988
      %v5124 = vmul.f32 %v4989, %v4989
      %v5125 = vsel %vm880, %v5093, 0.0
      %v5126 = vsel %vm880, %v5094, 0.0
      %v5127 = vadd.f32 %v5125, %v5126
      %v5128 = vsel %vm880, %v5095, 0.0
      %v5129 = vadd.f32 %v5127, %v5128
      %v5130 = vsel %vm880, %v5096, 0.0
      %v5131 = vadd.f32 %v5129, %v5130
      %v5132 = vsel %vm880, %v5097, 0.0
      %v5133 = vadd.f32 %v5131, %v5132
      %v5134 = vsel %vm880, %v5098, 0.0
      %v5135 = vadd.f32 %v5133, %v5134
      %v5136 = vsel %vm880, %v5099, 0.0
      %v5137 = vadd.f32 %v5135, %v5136
      %v5138 = vsel %vm880, %v5100, 0.0
      %v5139 = vadd.f32 %v5137, %v5138
      %v5140 = vsel %vm880, %v5101, 0.0
      %v5141 = vadd.f32 %v5139, %v5140
      %v5142 = vsel %vm880, %v5102, 0.0
      %v5143 = vadd.f32 %v5141, %v5142
      %v5144 = vsel %vm880, %v5103, 0.0
      %v5145 = vadd.f32 %v5143, %v5144
      %v5146 = vsel %vm880, %v5104, 0.0
      %v5147 = vadd.f32 %v5145, %v5146
      %v5148 = vsel %vm880, %v5105, 0.0
      %v5149 = vadd.f32 %v5147, %v5148
      %v5150 = vsel %vm880, %v5106, 0.0
      %v5151 = vadd.f32 %v5149, %v5150
      %v5152 = vsel %vm880, %v5107, 0.0
      %v5153 = vadd.f32 %v5151, %v5152
      %v5154 = vsel %vm880, %v5108, 0.0
      %v5155 = vadd.f32 %v5153, %v5154
      %v5156 = vsel %vm880, %v5109, 0.0
      %v5157 = vadd.f32 %v5155, %v5156
      %v5158 = vsel %vm880, %v5110, 0.0
      %v5159 = vadd.f32 %v5157, %v5158
      %v5160 = vsel %vm880, %v5111, 0.0
      %v5161 = vadd.f32 %v5159, %v5160
      %v5162 = vsel %vm880, %v5112, 0.0
      %v5163 = vadd.f32 %v5161, %v5162
      %v5164 = vsel %vm880, %v5113, 0.0
      %v5165 = vadd.f32 %v5163, %v5164
      %v5166 = vsel %vm880, %v5114, 0.0
      %v5167 = vadd.f32 %v5165, %v5166
      %v5168 = vsel %vm880, %v5115, 0.0
      %v5169 = vadd.f32 %v5167, %v5168
      %v5170 = vsel %vm880, %v5116, 0.0
      %v5171 = vadd.f32 %v5169, %v5170
      %v5172 = vsel %vm880, %v5117, 0.0
      %v5173 = vadd.f32 %v5171, %v5172
      %v5174 = vsel %vm880, %v5118, 0.0
      %v5175 = vadd.f32 %v5173, %v5174
      %v5176 = vsel %vm880, %v5119, 0.0
      %v5177 = vadd.f32 %v5175, %v5176
      %v5178 = vsel %vm880, %v5120, 0.0
      %v5179 = vadd.f32 %v5177, %v5178
      %v5180 = vsel %vm880, %v5121, 0.0
      %v5181 = vadd.f32 %v5179, %v5180
      %v5182 = vsel %vm880, %v5122, 0.0
      %v5183 = vadd.f32 %v5181, %v5182
      %v5184 = vsel %vm880, %v5123, 0.0
      %v5185 = vadd.f32 %v5183, %v5184
      %v5186 = vsel %vm880, %v5124, 0.0
      %v5187 = vadd.f32 %v5185, %v5186
      %v5188 = vrot.slane %v5187, 4
      %v5189 = vadd.f32 %v5187, %v5188
      %v5190 = vrot.slane %v5189, 2
      %v5191 = vadd.f32 %v5189, %v5190
      %v5192 = vrot.slane %v5191, 1
      %v5193 = vadd.f32 %v5191, %v5192
      %5194 = vst.msk [vmem:[%s392 + $0x1] sm:$0x1] %vm5091, %v5193
      %s5195 = smul.u32 16, %s23
      %p5196 = scmp.lt.s32.totalorder %s22, 1
      %s5197 = scalar_select %p5196, %s22, 1
      %p5198 = scmp.lt.s32.totalorder %s5195, 15
      %s5199 = scalar_select %p5198, %s5195, 15
      %s5200 = smul.addr %s5199, 2
      %s5201 = smul.addr %s5197, 32
      %s5202 = sadd.s32 %s5200, %s5201
      %s5203 = smul.addr %s5202, 8
      %s5204 = scalar_lea.vmem %s5, %s5203
      %p5205 = scmp.lt.s32.totalorder %s22, 1
      %s5206 = scalar_select %p5205, %s22, 1
      %p5207 = scmp.lt.s32.totalorder %s23, 0
      %s5208 = scalar_select %p5207, %s23, 0
      %s5209 = sadd.s32 %s5208, %s5206
      %s5210 = smul.addr %s5209, 2
      %s5211 = scalar_lea.vmem %s6, %s5210
      // Predicated region
      $region41: #{_lambda_.4} parent=39 // pred_check
        %p5212 = pneg %p176
      $region42: #{_lambda_.4} parent=39 // pred_check_branch
        %5214 = sbr.rel (%p5212) target = $region44
      $region43: #{_lambda_.4} parent=39 // pred_region
        %s5215 = smul.u32 16, %s23
      $region44: #{_lambda_.4} parent=39 // pred_fallthru
        _
      // Predicated region
      $region45: #{_lambda_.4} parent=39 // pred_check
        %p5216 = pneg %p204
      $region46: #{_lambda_.4} parent=39 // pred_check_branch
        %5218 = sbr.rel (%p5216) target = $region48
      $region47: #{_lambda_.4} parent=39 // pred_region
        _
      $region48: #{_lambda_.4} parent=39 // pred_fallthru
        _
    $region40: #{_lambda_.4} parent=5 // pred_fallthru
      _
    %p5219 = scmp.le.s32.totalorder 2, %s13
    // Predicated region
    $region49: #{_lambda_.4} parent=5 // pred_check
      %p5220 = pneg %p5219
    $region50: #{_lambda_.4} parent=5 // pred_check_branch
      %5222 = sbr.rel (%p5220) target = $region52
    $region51: #{_lambda_.4} parent=5 // pred_region
      %s5223 = ssub.s32 %s13, 2
      // Predicated region
      $region53: #{_lambda_.4} parent=51 // pred_check
        %p5224 = pneg %p182
      $region54: #{_lambda_.4} parent=51 // pred_check_branch
        %5226 = sbr.rel (%p5224) target = $region56
      $region55: #{_lambda_.4} parent=51 // pred_region
        %s5227 = smul.u32 16, %s25
        %p5228 = scmp.lt.s32.totalorder %s24, 1
        %s5229 = scalar_select %p5228, %s24, 1
        %p5230 = scmp.lt.s32.totalorder %s5227, 15
        %s5231 = scalar_select %p5230, %s5227, 15
        %s5232 = smul.addr %s5231, 2
        %s5233 = smul.addr %s5229, 32
        %s5234 = sadd.s32 %s5232, %s5233
        %s5235 = smul.addr %s5234, 8
        %s5236 = scalar_lea.vmem %s5, %s5235
      $region56: #{_lambda_.4} parent=51 // pred_fallthru
        _
      // Predicated region
      $region57: #{_lambda_.4} parent=51 // pred_check
        %p5237 = pneg %p210
      $region58: #{_lambda_.4} parent=51 // pred_check_branch
        %5239 = sbr.rel (%p5237) target = $region60
      $region59: #{_lambda_.4} parent=51 // pred_region
        %p5240 = scmp.lt.s32.totalorder %s24, 1
        %s5241 = scalar_select %p5240, %s24, 1
        %p5242 = scmp.lt.s32.totalorder %s25, 0
        %s5243 = scalar_select %p5242, %s25, 0
        %s5244 = sadd.s32 %s5243, %s5241
        %s5245 = smul.addr %s5244, 2
        %s5246 = scalar_lea.vmem %s6, %s5245
      $region60: #{_lambda_.4} parent=51 // pred_fallthru
        _
    $region52: #{_lambda_.4} parent=5 // pred_fallthru
      _
  $region6: #{_lambda_.4} parent=0 // loop_footer
    %s17 = sadd.s32 1, %s13
  $region7: #{_lambda_.4} parent=0 // loop_footer_branch
    %12 = sbr.rel target = $region3
  $region8: #{_lambda_.4} parent=0 // loop_exit
    _

</llo_original>
